<compile_context>
chip_gen: v6e
topology: v6e:2x2x1
jax: 0.10.0
libtpu: 0.0.40
codegen_flags: <defaults>
</compile_context>

<pallas_src>
import math
import functools

import jax
import jax.numpy as jnp
from jax.experimental import pallas as pl
from jax.experimental.pallas import tpu as pltpu


# ----------------------------------------------------------------------------
# Relative position bias (index glue, computed once in plain JAX)
# ----------------------------------------------------------------------------
def _rel_pos_bucket(rel, num_buckets, max_distance):
    is_neg = (rel < 0).astype(jnp.int32)
    rel = jnp.abs(rel)
    rel = jnp.clip(rel, 0, max_distance - 1)
    max_exact = num_buckets // 2
    # clip to >=1 so the (discarded) log branch never evaluates log(0) -> -inf
    relf = jnp.maximum(rel.astype(jnp.float32), 1.0)
    log_val = (jnp.log(relf / max_exact)
               / math.log(max_distance / max_exact)
               * (num_buckets - max_exact))
    large = max_exact + log_val.astype(jnp.int32)
    bucket = is_neg * num_buckets + jnp.where(rel < max_exact, rel, large)
    return bucket


def build_rel_bias(N, grid_size, num_buckets, max_distance, emb_table):
    # emb_table: (num_buckets, num_heads)
    idx = jnp.arange(N, dtype=jnp.int32)
    row = idx // grid_size
    col = idx % grid_size
    rr = row[:, None] - row[None, :]
    cc = col[:, None] - col[None, :]
    rb = _rel_pos_bucket(rr, num_buckets, max_distance)
    cb = _rel_pos_bucket(cc, num_buckets, max_distance)
    # TODO(synk): the reference bucket fn yields indices >= num_buckets for
    # negative offsets (out-of-range for nn.Embedding in PyTorch); we clamp
    # the gather index, matching JAX's default on-device clip behaviour.
    row_bias = jnp.take(emb_table, rb, axis=0, mode="clip")   # (N, N, H)
    col_bias = jnp.take(emb_table, cb, axis=0, mode="clip")   # (N, N, H)
    bias = (row_bias + col_bias).transpose(2, 0, 1)           # (H, N, N)
    return bias.astype(jnp.float32)


# ----------------------------------------------------------------------------
# Pallas kernel: one query tile of one batch element, full encoder layer
# ----------------------------------------------------------------------------
def encoder_layer_kernel(xq_ref, xkv_ref, wqkv_ref, bqkv_ref, wo_ref, bias_ref,
                         vec_ref, w1_ref, w2_ref, o_ref, k_scr, v_scr,
                         *, eps, matmul_dtype):
    D = xq_ref.shape[2]
    F = w1_ref.shape[1]
    qi = pl.program_id(1)

    # --- K/V for the full sequence: computed once per batch element (qi==0),
    # cached in VMEM scratch and reused by every query tile of that element.
    @pl.when(qi == 0)
    def _():
        xf = xkv_ref[0].astype(matmul_dtype)                       # (N, D)
        k = jnp.einsum("nd,hde->hne", xf, wqkv_ref[1],
                       preferred_element_type=jnp.float32) + bqkv_ref[1]
        v = jnp.einsum("nd,hde->hne", xf, wqkv_ref[2],
                       preferred_element_type=jnp.float32) + bqkv_ref[2]
        k_scr[...] = k.astype(k_scr.dtype)
        v_scr[...] = v.astype(v_scr.dtype)

    # Read the query tile once per needed dtype (f32 residual copy + one
    # matmul-dtype copy) — no per-matmul re-casting of x.
    x32 = xq_ref[0].astype(jnp.float32)                            # (tq, D)
    x_mm = xq_ref[0].astype(matmul_dtype)

    # --- Q projection: heads are a leading batch axis of the weights, so
    # there is no lane-slice / stack head split (scale folded into wq/bq).
    q = jnp.einsum("nd,hde->hne", x_mm, wqkv_ref[0],
                   preferred_element_type=jnp.float32) + bqkv_ref[0]  # (H, tq, hd)

    # --- scores + relative position bias + softmax over the full key axis ----
    s = jnp.einsum("hqd,hkd->hqk", q.astype(matmul_dtype), k_scr[...],
                   preferred_element_type=jnp.float32)
    s = s + bias_ref[...].astype(jnp.float32)                      # (H, tq, N)
    s = s - jnp.max(s, axis=-1, keepdims=True)
    p = jnp.exp(s)
    p = p * pl.reciprocal(jnp.sum(p, axis=-1, keepdims=True), approx=True)

    # --- context; head merge folded into the output projection ---------------
    ctx = jnp.einsum("hqk,hkd->hqd", p.astype(matmul_dtype), v_scr[...],
                     preferred_element_type=jnp.float32)           # (H, tq, hd)
    attn = jnp.einsum("hqd,hde->hqe", ctx.astype(matmul_dtype), wo_ref[...],
                      preferred_element_type=jnp.float32)          # (H, tq, D)
    attn = jnp.sum(attn, axis=0) + vec_ref[:, 0:D]                 # + bo -> (tq, D)

    # --- residual + LayerNorm 1 ----------------------------------------------
    y = x32 + attn
    mu = jnp.mean(y, axis=-1, keepdims=True)
    var = jnp.mean((y - mu) ** 2, axis=-1, keepdims=True)
    y = ((y - mu) * jax.lax.rsqrt(var + eps)
         * vec_ref[:, D:2 * D] + vec_ref[:, 2 * D:3 * D])

    # --- feed-forward block ----------------------------------------------------
    h1 = jnp.dot(y.astype(matmul_dtype), w1_ref[...],
                 preferred_element_type=jnp.float32) + vec_ref[:, 6 * D:6 * D + F]
    h1 = jnp.maximum(h1, 0.0)                                      # ReLU
    ff = jnp.dot(h1.astype(matmul_dtype), w2_ref[...],
                 preferred_element_type=jnp.float32) + vec_ref[:, 5 * D:6 * D]

    # --- residual + LayerNorm 2 ------------------------------------------------
    z = y + ff
    mu2 = jnp.mean(z, axis=-1, keepdims=True)
    var2 = jnp.mean((z - mu2) ** 2, axis=-1, keepdims=True)
    z = ((z - mu2) * jax.lax.rsqrt(var2 + eps)
         * vec_ref[:, 3 * D:4 * D] + vec_ref[:, 4 * D:5 * D])

    # TODO(synk): for D < 128 a lane-dense (..., 128) output layout would avoid
    # masked partial stores; skipped to keep the kernel shape-general.
    o_ref[0] = z.astype(o_ref.dtype)


# ----------------------------------------------------------------------------
# Wrapper
# ----------------------------------------------------------------------------
def _invariant_spec(arr):
    """Full-array block, constant index map, single pipeline buffer."""
    ndim = arr.ndim
    index_map = lambda b, qi: (0,) * ndim
    try:
        return pl.BlockSpec(arr.shape, index_map, pipeline_mode=pl.Buffered(1))
    except TypeError:      # older BlockSpec without pipeline_mode
        return pl.BlockSpec(arr.shape, index_map)


def _pick_tq(N):
    for cand in (256, 128, 64, 32, 16, 8):
        if N % cand == 0:
            return cand
    return N


def _vmem_limit_bytes(N, tq, D, F, H, hd, x_item, w_item, b_item):
    # Rough resident-bytes estimate: single-buffered (Buffered(1)) weights,
    # double-buffered activation / bias tiles, K/V scratch and live f32
    # intermediates, with 3x headroom for layout padding.
    weights = (3 * H * D * hd + H * hd * D + D * F + F * D) * w_item
    vectors = (6 * D + F + 3 * H * hd) * 4
    kv_scratch = 2 * H * N * hd * w_item
    bias_tiles = 2 * H * tq * N * b_item
    io_tiles = 2 * (2 * tq * D + N * D) * x_item
    interm = (3 * H * tq * N + 2 * H * N * hd + 2 * H * tq * hd
              + H * tq * D + tq * F + 6 * tq * D) * 4
    budget = 3 * (weights + vectors + kv_scratch + bias_tiles + io_tiles + interm)
    floor = 32 * 1024 * 1024
    try:
        # ~0.8x physical VMEM: 128 MiB on v5e/v6e, 64 MiB on v7x — no hard
        # 64 MiB clamp on chips that have more.
        cap = int(0.8 * pltpu.get_tpu_info().vmem_capacity_bytes)
    except Exception:
        cap = 64 * 1024 * 1024
    cap = max(cap, floor)
    return int(min(max(budget, floor), cap))


def encoder_layer(x, params, rel_bias, *, num_heads, head_dim, eps=1e-5,
                  matmul_dtype=jnp.float32, tq=None):
    B, N, D = x.shape
    F = params["w1"].shape[1]
    H, hd = num_heads, head_dim
    assert H * hd == D
    if tq is None:
        tq = _pick_tq(N)
    assert N % tq == 0 and (tq % 8 == 0 or tq == N)
    nq = N // tq
    scaling = float(head_dim) ** -0.5

    # --- wrapper-side weight re-layout: heads become a leading batch axis ----
    wqkv = params["wqkv"]                                    # (D, 3D), y = x @ W
    def heads_leading(w):                                    # (D, D) -> (H, D, hd)
        return w.reshape(D, H, hd).transpose(1, 0, 2)
    wq_h = heads_leading(wqkv[:, 0:D] * scaling)             # scale folded into q
    wk_h = heads_leading(wqkv[:, D:2 * D])
    wv_h = heads_leading(wqkv[:, 2 * D:3 * D])
    wqkv_h = jnp.stack([wq_h, wk_h, wv_h], 0).astype(matmul_dtype)   # (3, H, D, hd)

    bqkv = params["bqkv"][0]                                 # (3D,)
    bq = (bqkv[0:D] * scaling).reshape(H, 1, hd)
    bk = bqkv[D:2 * D].reshape(H, 1, hd)
    bv = bqkv[2 * D:3 * D].reshape(H, 1, hd)
    bqkv_h = jnp.stack([bq, bk, bv], 0).astype(jnp.float32)          # (3, H, 1, hd)

    wo_h = params["wo"].reshape(H, hd, D).astype(matmul_dtype)       # head-major rows
    w1 = params["w1"].astype(matmul_dtype)
    w2 = params["w2"].astype(matmul_dtype)

    # Pack the seven tiny (1, X) bias/LN vectors into a single slab:
    # [bo | g1 | be1 | g2 | be2 | b2 | b1]  -> one DMA, one VMEM tile.
    vec_slab = jnp.concatenate(
        [params["bo"], params["g1"], params["be1"], params["g2"],
         params["be2"], params["b2"], params["b1"]], axis=-1).astype(jnp.float32)

    # rel bias in matmul_dtype (bf16 on the bf16 path halves its VMEM/DMA);
    # upcast to f32 only when added to the scores.
    rel_b = rel_bias.astype(matmul_dtype)

    kernel = functools.partial(encoder_layer_kernel, eps=eps,
                               matmul_dtype=matmul_dtype)

    vmem_limit = _vmem_limit_bytes(
        N, tq, D, F, H, hd, x.dtype.itemsize,
        jnp.dtype(matmul_dtype).itemsize, rel_b.dtype.itemsize)

    return pl.pallas_call(
        kernel,
        out_shape=jax.ShapeDtypeStruct((B, N, D), x.dtype),
        grid_spec=pltpu.PrefetchScalarGridSpec(
            num_scalar_prefetch=0,
            grid=(B, nq),
            in_specs=[
                pl.BlockSpec((1, tq, D), lambda b, qi: (b, qi, 0)),   # x query tile
                pl.BlockSpec((1, N, D), lambda b, qi: (b, 0, 0)),     # x full (K/V)
                _invariant_spec(wqkv_h),                              # (3,H,D,hd)
                _invariant_spec(bqkv_h),                              # (3,H,1,hd)
                _invariant_spec(wo_h),                                # (H,hd,D)
                pl.BlockSpec((H, tq, N), lambda b, qi: (0, qi, 0)),   # rel bias tile
                _invariant_spec(vec_slab),                            # packed vectors
                _invariant_spec(w1),
                _invariant_spec(w2),
            ],
            out_specs=pl.BlockSpec((1, tq, D), lambda b, qi: (b, qi, 0)),
            scratch_shapes=[pltpu.VMEM((H, N, hd), matmul_dtype),     # K cache
                            pltpu.VMEM((H, N, hd), matmul_dtype)],    # V cache
        ),
        compiler_params=pltpu.CompilerParams(
            # B is 'parallel' (megacore); the query-tile axis must be
            # 'arbitrary' because K/V are cached in scratch at qi==0.
            # TODO(synk): if B==1 in deployment, drop the K/V caching and mark
            # the tile axis 'parallel' so both v7x TensorCores get work.
            dimension_semantics=("parallel", "arbitrary"),
            vmem_limit_bytes=vmem_limit),
    )(x, x, wqkv_h, bqkv_h, wo_h, rel_b, vec_slab, w1, w2)


# ----------------------------------------------------------------------------
# Pure-JAX reference (same math) for correctness checking
# ----------------------------------------------------------------------------
def reference(x, params, rel_bias, *, num_heads, head_dim, eps=1e-5):
    B, N, D = x.shape
    scaling = float(head_dim) ** -0.5
    qkv = x @ params["wqkv"] + params["bqkv"]
    q, k, v = jnp.split(qkv, 3, axis=-1)
    q = q.reshape(B, N, num_heads, head_dim).transpose(0, 2, 1, 3)
    k = k.reshape(B, N, num_heads, head_dim).transpose(0, 2, 1, 3)
    v = v.reshape(B, N, num_heads, head_dim).transpose(0, 2, 1, 3)
    s = jnp.einsum("bhqd,bhkd->bhqk", q, k) * scaling + rel_bias[None]
    p = jax.nn.softmax(s, axis=-1)
    a = jnp.einsum("bhqk,bhkd->bhqd", p, v).transpose(0, 2, 1, 3).reshape(B, N, D)
    a = a @ params["wo"] + params["bo"]

    def ln(t, g, b):
        mu = t.mean(-1, keepdims=True)
        var = ((t - mu) ** 2).mean(-1, keepdims=True)
        return (t - mu) * jax.lax.rsqrt(var + eps) * g + b

    y = ln(x + a, params["g1"], params["be1"])
    ff = jnp.maximum(y @ params["w1"] + params["b1"], 0.0) @ params["w2"] + params["b2"]
    return ln(y + ff, params["g2"], params["be2"])


# ----------------------------------------------------------------------------
if __name__ == "__main__":
    # Small shapes consistent with the module.
    B, N = 2, 16
    d_model, nhead, dim_ff = 32, 4, 64
    head_dim = d_model // nhead
    grid_size, num_buckets, max_distance = 4, 32, 128

    key = jax.random.PRNGKey(0)
    ks = jax.random.split(key, 12)

    def init(k, shape, scale=0.02):
        return (scale * jax.random.normal(k, shape)).astype(jnp.float32)

    params = {
        # weights stored pre-transposed for right-multiplication: y = x @ W + b
        "wqkv": init(ks[0], (d_model, 3 * d_model)),
        "bqkv": init(ks[1], (1, 3 * d_model)),
        "wo":   init(ks[2], (d_model, d_model)),
        "bo":   init(ks[3], (1, d_model)),
        "w1":   init(ks[4], (d_model, dim_ff)),
        "b1":   init(ks[5], (1, dim_ff)),
        "w2":   init(ks[6], (dim_ff, d_model)),
        "b2":   init(ks[7], (1, d_model)),
        "g1":   jnp.ones((1, d_model), jnp.float32),
        "be1":  jnp.zeros((1, d_model), jnp.float32),
        "g2":   jnp.ones((1, d_model), jnp.float32),
        "be2":  jnp.zeros((1, d_model), jnp.float32),
    }
    rel_emb_table = init(ks[8], (num_buckets, nhead), scale=0.1)

    x = jax.random.normal(ks[9], (B, N, d_model), dtype=jnp.float32)

    rel_bias = build_rel_bias(N, grid_size, num_buckets, max_distance, rel_emb_table)
    ref = reference(x, params, rel_bias, num_heads=nhead, head_dim=head_dim)

    # f32 matmul path, tq=8 so the query-tile axis / K-V caching is exercised.
    out = encoder_layer(x, params, rel_bias, num_heads=nhead, head_dim=head_dim, tq=8)
    out = jax.block_until_ready(out)
    assert out.shape == (B, N, d_model)
    assert jnp.allclose(out, ref, atol=2e-3, rtol=2e-3), "f32 path mismatch vs JAX reference"

    # bf16 matmul-operand path (MXU-native; f32 accumulation) — looser tolerance
    out_bf16 = encoder_layer(x, params, rel_bias, num_heads=nhead,
                             head_dim=head_dim, matmul_dtype=jnp.bfloat16, tq=8)
    out_bf16 = jax.block_until_ready(out_bf16)
    assert jnp.allclose(out_bf16, ref, atol=5e-2, rtol=5e-2), "bf16 path mismatch vs JAX reference"

    print("KERNEL_OK")
</pallas_src>

<mosaic_0001>
module attributes {stable_mosaic.version = 11 : i64} {
  func.func @encoder_layer_kernel(%arg0: i32, %arg1: i32, %arg2: memref<1x8x32xf32, #tpu.memory_space<vmem>>, %arg3: memref<1x16x32xf32, #tpu.memory_space<vmem>>, %arg4: memref<3x4x32x8xf32, #tpu.memory_space<vmem>>, %arg5: memref<3x4x1x8xf32, #tpu.memory_space<vmem>>, %arg6: memref<4x8x32xf32, #tpu.memory_space<vmem>>, %arg7: memref<4x8x16xf32, #tpu.memory_space<vmem>>, %arg8: memref<1x256xf32, #tpu.memory_space<vmem>>, %arg9: memref<32x64xf32, #tpu.memory_space<vmem>>, %arg10: memref<64x32xf32, #tpu.memory_space<vmem>>, %arg11: memref<1x8x32xf32, #tpu.memory_space<vmem>>, %arg12: memref<4x16x8xf32, #tpu.memory_space<vmem>>, %arg13: memref<4x16x8xf32, #tpu.memory_space<vmem>>) attributes {dimension_semantics = [#tpu.dimension_semantics<parallel>, #tpu.dimension_semantics<arbitrary>], iteration_bounds = array<i64: 2, 2>, scalar_prefetch = 0 : i64, scratch_operands = 2 : i64, tpu.core_type = #tpu.core_type<tc>, window_params = [{transform_indices = @transform_0, window_bounds = array<i64: 1, 8, 32>}, {transform_indices = @transform_1, window_bounds = array<i64: 1, 16, 32>}, {pipeline_mode = #tpu.pipeline_mode<synchronous>, transform_indices = @transform_2, window_bounds = array<i64: 3, 4, 32, 8>}, {pipeline_mode = #tpu.pipeline_mode<synchronous>, transform_indices = @transform_3, window_bounds = array<i64: 3, 4, 1, 8>}, {pipeline_mode = #tpu.pipeline_mode<synchronous>, transform_indices = @transform_4, window_bounds = array<i64: 4, 8, 32>}, {transform_indices = @transform_5, window_bounds = array<i64: 4, 8, 16>}, {pipeline_mode = #tpu.pipeline_mode<synchronous>, transform_indices = @transform_6, window_bounds = array<i64: 1, 256>}, {pipeline_mode = #tpu.pipeline_mode<synchronous>, transform_indices = @transform_7, window_bounds = array<i64: 32, 64>}, {pipeline_mode = #tpu.pipeline_mode<synchronous>, transform_indices = @transform_8, window_bounds = array<i64: 64, 32>}, {transform_indices = @transform_9, window_bounds = array<i64: 1, 8, 32>}]} {
    %c0_i32 = arith.constant 0 : i32
    %0 = arith.cmpi eq, %arg1, %c0_i32 : i32
    %1 = arith.extui %0 : i1 to i32
    %c0_i32_0 = arith.constant 0 : i32
    %2 = arith.cmpi ne, %1, %c0_i32_0 : i32
    scf.if %2 {
      %c0_60 = arith.constant 0 : index
      %c0_61 = arith.constant 0 : index
      %c0_62 = arith.constant 0 : index
      %102 = vector.load %arg3[%c0_60, %c0_61, %c0_62] : memref<1x16x32xf32, #tpu.memory_space<vmem>>, vector<1x16x32xf32>
      %103 = vector.shape_cast %102 : vector<1x16x32xf32> to vector<16x32xf32>
      %c1 = arith.constant 1 : index
      %c0_63 = arith.constant 0 : index
      %c0_64 = arith.constant 0 : index
      %c0_65 = arith.constant 0 : index
      %104 = vector.load %arg4[%c1, %c0_63, %c0_64, %c0_65] : memref<3x4x32x8xf32, #tpu.memory_space<vmem>>, vector<1x4x32x8xf32>
      %105 = vector.shape_cast %104 : vector<1x4x32x8xf32> to vector<4x32x8xf32>
      "tpu.trace_start"() <{level = 10 : i32, message = "nd,hde->hne"}> : () -> ()
      %cst_66 = arith.constant dense<0.000000e+00> : vector<4x8x16xf32>
      %106 = tpu.matmul %105, %103, %cst_66 {dimension_numbers = #tpu.dot_dimension_numbers<[1], [1], [0, 2], [0], [0, 0, 0, 2, 1, 0], [], []>} : vector<4x32x8xf32>, vector<16x32xf32>, vector<4x8x16xf32> -> vector<4x8x16xf32>
      %107 = tpu.transpose %106, [0, 2, 1] : vector<4x8x16xf32> -> vector<4x16x8xf32>
      "tpu.trace_stop"() : () -> ()
      %c1_67 = arith.constant 1 : index
      %c0_68 = arith.constant 0 : index
      %c0_69 = arith.constant 0 : index
      %c0_70 = arith.constant 0 : index
      %108 = vector.load %arg5[%c1_67, %c0_68, %c0_69, %c0_70] : memref<3x4x1x8xf32, #tpu.memory_space<vmem>>, vector<1x4x1x8xf32>
      %109 = vector.shape_cast %108 : vector<1x4x1x8xf32> to vector<4x1x8xf32>
      %110 = vector.broadcast %109 : vector<4x1x8xf32> to vector<4x16x8xf32>
      %111 = arith.addf %107, %110 : vector<4x16x8xf32>
      %c2 = arith.constant 2 : index
      %c0_71 = arith.constant 0 : index
      %c0_72 = arith.constant 0 : index
      %c0_73 = arith.constant 0 : index
      %112 = vector.load %arg4[%c2, %c0_71, %c0_72, %c0_73] : memref<3x4x32x8xf32, #tpu.memory_space<vmem>>, vector<1x4x32x8xf32>
      %113 = vector.shape_cast %112 : vector<1x4x32x8xf32> to vector<4x32x8xf32>
      "tpu.trace_start"() <{level = 10 : i32, message = "nd,hde->hne"}> : () -> ()
      %cst_74 = arith.constant dense<0.000000e+00> : vector<4x8x16xf32>
      %114 = tpu.matmul %113, %103, %cst_74 {dimension_numbers = #tpu.dot_dimension_numbers<[1], [1], [0, 2], [0], [0, 0, 0, 2, 1, 0], [], []>} : vector<4x32x8xf32>, vector<16x32xf32>, vector<4x8x16xf32> -> vector<4x8x16xf32>
      %115 = tpu.transpose %114, [0, 2, 1] : vector<4x8x16xf32> -> vector<4x16x8xf32>
      "tpu.trace_stop"() : () -> ()
      %c2_75 = arith.constant 2 : index
      %c0_76 = arith.constant 0 : index
      %c0_77 = arith.constant 0 : index
      %c0_78 = arith.constant 0 : index
      %116 = vector.load %arg5[%c2_75, %c0_76, %c0_77, %c0_78] : memref<3x4x1x8xf32, #tpu.memory_space<vmem>>, vector<1x4x1x8xf32>
      %117 = vector.shape_cast %116 : vector<1x4x1x8xf32> to vector<4x1x8xf32>
      %118 = vector.broadcast %117 : vector<4x1x8xf32> to vector<4x16x8xf32>
      %119 = arith.addf %115, %118 : vector<4x16x8xf32>
      %c0_79 = arith.constant 0 : index
      %c0_80 = arith.constant 0 : index
      %c0_81 = arith.constant 0 : index
      %120 = vector.load %arg12[%c0_79, %c0_80, %c0_81] : memref<4x16x8xf32, #tpu.memory_space<vmem>>, vector<4x16x8xf32>
      tpu.vector_store %arg12[%c0_79, %c0_80, %c0_81], %111 {strides = array<i32>} : memref<4x16x8xf32, #tpu.memory_space<vmem>>, vector<4x16x8xf32>,
      %c0_82 = arith.constant 0 : index
      %c0_83 = arith.constant 0 : index
      %c0_84 = arith.constant 0 : index
      %121 = vector.load %arg13[%c0_82, %c0_83, %c0_84] : memref<4x16x8xf32, #tpu.memory_space<vmem>>, vector<4x16x8xf32>
      tpu.vector_store %arg13[%c0_82, %c0_83, %c0_84], %119 {strides = array<i32>} : memref<4x16x8xf32, #tpu.memory_space<vmem>>, vector<4x16x8xf32>,
    } else {
    }
    %c0 = arith.constant 0 : index
    %c0_1 = arith.constant 0 : index
    %c0_2 = arith.constant 0 : index
    %3 = vector.load %arg2[%c0, %c0_1, %c0_2] : memref<1x8x32xf32, #tpu.memory_space<vmem>>, vector<1x8x32xf32>
    %4 = vector.shape_cast %3 : vector<1x8x32xf32> to vector<8x32xf32>
    %c0_3 = arith.constant 0 : index
    %c0_4 = arith.constant 0 : index
    %c0_5 = arith.constant 0 : index
    %5 = vector.load %arg2[%c0_3, %c0_4, %c0_5] : memref<1x8x32xf32, #tpu.memory_space<vmem>>, vector<1x8x32xf32>
    %6 = vector.shape_cast %5 : vector<1x8x32xf32> to vector<8x32xf32>
    %c0_6 = arith.constant 0 : index
    %c0_7 = arith.constant 0 : index
    %c0_8 = arith.constant 0 : index
    %c0_9 = arith.constant 0 : index
    %7 = vector.load %arg4[%c0_6, %c0_7, %c0_8, %c0_9] : memref<3x4x32x8xf32, #tpu.memory_space<vmem>>, vector<1x4x32x8xf32>
    %8 = vector.shape_cast %7 : vector<1x4x32x8xf32> to vector<4x32x8xf32>
    "tpu.trace_start"() <{level = 10 : i32, message = "nd,hde->hne"}> : () -> ()
    %cst = arith.constant dense<0.000000e+00> : vector<4x8x8xf32>
    %9 = tpu.matmul %8, %6, %cst {dimension_numbers = #tpu.dot_dimension_numbers<[1], [1], [0, 2], [0], [0, 0, 0, 2, 1, 0], [], []>} : vector<4x32x8xf32>, vector<8x32xf32>, vector<4x8x8xf32> -> vector<4x8x8xf32>
    %10 = tpu.transpose %9, [0, 2, 1] : vector<4x8x8xf32> -> vector<4x8x8xf32>
    "tpu.trace_stop"() : () -> ()
    %c0_10 = arith.constant 0 : index
    %c0_11 = arith.constant 0 : index
    %c0_12 = arith.constant 0 : index
    %c0_13 = arith.constant 0 : index
    %11 = vector.load %arg5[%c0_10, %c0_11, %c0_12, %c0_13] : memref<3x4x1x8xf32, #tpu.memory_space<vmem>>, vector<1x4x1x8xf32>
    %12 = vector.shape_cast %11 : vector<1x4x1x8xf32> to vector<4x1x8xf32>
    %13 = vector.broadcast %12 : vector<4x1x8xf32> to vector<4x8x8xf32>
    %14 = arith.addf %10, %13 : vector<4x8x8xf32>
    %c0_14 = arith.constant 0 : index
    %c0_15 = arith.constant 0 : index
    %c0_16 = arith.constant 0 : index
    %15 = vector.load %arg12[%c0_14, %c0_15, %c0_16] : memref<4x16x8xf32, #tpu.memory_space<vmem>>, vector<4x16x8xf32>
    "tpu.trace_start"() <{level = 10 : i32, message = "hqd,hkd->hqk"}> : () -> ()
    %cst_17 = arith.constant dense<0.000000e+00> : vector<4x8x16xf32>
    %16 = tpu.matmul %14, %15, %cst_17 {dimension_numbers = #tpu.dot_dimension_numbers<[2], [2], [1], [1], [0, 0, 0, 1, 1, 1], [0], [0]>} : vector<4x8x8xf32>, vector<4x16x8xf32>, vector<4x8x16xf32> -> vector<4x8x16xf32>
    "tpu.trace_stop"() : () -> ()
    %c0_18 = arith.constant 0 : index
    %c0_19 = arith.constant 0 : index
    %c0_20 = arith.constant 0 : index
    %17 = vector.load %arg7[%c0_18, %c0_19, %c0_20] : memref<4x8x16xf32, #tpu.memory_space<vmem>>, vector<4x8x16xf32>
    %18 = arith.addf %16, %17 : vector<4x8x16xf32>
    %cst_21 = arith.constant dense<0xFF800000> : vector<4x8xf32>
    %19 = vector.multi_reduction <maximumf>, %18, %cst_21 [2] : vector<4x8x16xf32> to vector<4x8xf32>
    %20 = vector.shape_cast %19 : vector<4x8xf32> to vector<4x8x1xf32>
    %21 = vector.broadcast %20 : vector<4x8x1xf32> to vector<4x8x16xf32>
    %22 = arith.subf %18, %21 : vector<4x8x16xf32>
    %23 = math.exp %22 : vector<4x8x16xf32>
    %cst_22 = arith.constant dense<0.000000e+00> : vector<4x8xf32>
    %24 = vector.multi_reduction <add>, %23, %cst_22 [2] : vector<4x8x16xf32> to vector<4x8xf32>
    %25 = vector.shape_cast %24 : vector<4x8xf32> to vector<4x8x1xf32>
    %26 = tpu.reciprocal %25 {approx = true} : vector<4x8x1xf32> -> vector<4x8x1xf32>
    %27 = vector.broadcast %26 : vector<4x8x1xf32> to vector<4x8x16xf32>
    %28 = arith.mulf %23, %27 : vector<4x8x16xf32>
    %c0_23 = arith.constant 0 : index
    %c0_24 = arith.constant 0 : index
    %c0_25 = arith.constant 0 : index
    %29 = vector.load %arg13[%c0_23, %c0_24, %c0_25] : memref<4x16x8xf32, #tpu.memory_space<vmem>>, vector<4x16x8xf32>
    "tpu.trace_start"() <{level = 10 : i32, message = "hqk,hkd->hqd"}> : () -> ()
    %cst_26 = arith.constant dense<0.000000e+00> : vector<4x8x8xf32>
    %30 = tpu.matmul %28, %29, %cst_26 {dimension_numbers = #tpu.dot_dimension_numbers<[2], [1], [1], [2], [0, 0, 0, 1, 1, 2], [0], [0]>} : vector<4x8x16xf32>, vector<4x16x8xf32>, vector<4x8x8xf32> -> vector<4x8x8xf32>
    "tpu.trace_stop"() : () -> ()
    %c0_27 = arith.constant 0 : index
    %c0_28 = arith.constant 0 : index
    %c0_29 = arith.constant 0 : index
    %31 = vector.load %arg6[%c0_27, %c0_28, %c0_29] : memref<4x8x32xf32, #tpu.memory_space<vmem>>, vector<4x8x32xf32>
    "tpu.trace_start"() <{level = 10 : i32, message = "hqd,hde->hqe"}> : () -> ()
    %cst_30 = arith.constant dense<0.000000e+00> : vector<4x8x32xf32>
    %32 = tpu.matmul %30, %31, %cst_30 {dimension_numbers = #tpu.dot_dimension_numbers<[2], [1], [1], [2], [0, 0, 0, 1, 1, 2], [0], [0]>} : vector<4x8x8xf32>, vector<4x8x32xf32>, vector<4x8x32xf32> -> vector<4x8x32xf32>
    "tpu.trace_stop"() : () -> ()
    %cst_31 = arith.constant dense<0.000000e+00> : vector<8x32xf32>
    %33 = vector.multi_reduction <add>, %32, %cst_31 [0] : vector<4x8x32xf32> to vector<8x32xf32>
    %c0_32 = arith.constant 0 : index
    %c0_33 = arith.constant 0 : index
    %34 = vector.load %arg8[%c0_32, %c0_33] : memref<1x256xf32, #tpu.memory_space<vmem>>, vector<1x32xf32>
    %35 = vector.broadcast %34 : vector<1x32xf32> to vector<8x32xf32>
    %36 = arith.addf %33, %35 : vector<8x32xf32>
    %37 = arith.addf %4, %36 : vector<8x32xf32>
    %cst_34 = arith.constant dense<0.000000e+00> : vector<8xf32>
    %38 = vector.multi_reduction <add>, %37, %cst_34 [1] : vector<8x32xf32> to vector<8xf32>
    %39 = vector.shape_cast %38 : vector<8xf32> to vector<8x1xf32>
    %cst_35 = arith.constant 3.200000e+01 : f32
    %40 = vector.broadcast %cst_35 : f32 to vector<8x1xf32>
    %41 = arith.divf %39, %40 : vector<8x1xf32>
    %42 = vector.broadcast %41 : vector<8x1xf32> to vector<8x32xf32>
    %43 = arith.subf %37, %42 : vector<8x32xf32>
    %44 = arith.mulf %43, %43 : vector<8x32xf32>
    %cst_36 = arith.constant dense<0.000000e+00> : vector<8xf32>
    %45 = vector.multi_reduction <add>, %44, %cst_36 [1] : vector<8x32xf32> to vector<8xf32>
    %46 = vector.shape_cast %45 : vector<8xf32> to vector<8x1xf32>
    %cst_37 = arith.constant 3.200000e+01 : f32
    %47 = vector.broadcast %cst_37 : f32 to vector<8x1xf32>
    %48 = arith.divf %46, %47 : vector<8x1xf32>
    %49 = vector.broadcast %41 : vector<8x1xf32> to vector<8x32xf32>
    %50 = arith.subf %37, %49 : vector<8x32xf32>
    %cst_38 = arith.constant 9.99999974E-6 : f32
    %51 = vector.broadcast %cst_38 : f32 to vector<8x1xf32>
    %52 = arith.addf %48, %51 : vector<8x1xf32>
    %53 = math.rsqrt %52 : vector<8x1xf32>
    %54 = vector.broadcast %53 : vector<8x1xf32> to vector<8x32xf32>
    %55 = arith.mulf %50, %54 : vector<8x32xf32>
    %c0_39 = arith.constant 0 : index
    %c32 = arith.constant 32 : index
    %56 = vector.load %arg8[%c0_39, %c32] : memref<1x256xf32, #tpu.memory_space<vmem>>, vector<1x32xf32>
    %57 = vector.broadcast %56 : vector<1x32xf32> to vector<8x32xf32>
    %58 = arith.mulf %55, %57 : vector<8x32xf32>
    %c0_40 = arith.constant 0 : index
    %c64 = arith.constant 64 : index
    %59 = vector.load %arg8[%c0_40, %c64] : memref<1x256xf32, #tpu.memory_space<vmem>>, vector<1x32xf32>
    %60 = vector.broadcast %59 : vector<1x32xf32> to vector<8x32xf32>
    %61 = arith.addf %58, %60 : vector<8x32xf32>
    %c0_41 = arith.constant 0 : index
    %c0_42 = arith.constant 0 : index
    %62 = vector.load %arg9[%c0_41, %c0_42] : memref<32x64xf32, #tpu.memory_space<vmem>>, vector<32x64xf32>
    %cst_43 = arith.constant dense<0.000000e+00> : vector<8x64xf32>
    %63 = tpu.matmul %61, %62, %cst_43 {dimension_numbers = #tpu.dot_dimension_numbers<[1], [0], [0], [1], [0, 0, 1, 1], [], []>} : vector<8x32xf32>, vector<32x64xf32>, vector<8x64xf32> -> vector<8x64xf32>
    %c0_44 = arith.constant 0 : index
    %c192 = arith.constant 192 : index
    %64 = vector.load %arg8[%c0_44, %c192] : memref<1x256xf32, #tpu.memory_space<vmem>>, vector<1x64xf32>
    %65 = vector.broadcast %64 : vector<1x64xf32> to vector<8x64xf32>
    %66 = arith.addf %63, %65 : vector<8x64xf32>
    %cst_45 = arith.constant 0.000000e+00 : f32
    %67 = vector.broadcast %cst_45 : f32 to vector<8x64xf32>
    %68 = arith.maximumf %66, %67 : vector<8x64xf32>
    %c0_46 = arith.constant 0 : index
    %c0_47 = arith.constant 0 : index
    %69 = vector.load %arg10[%c0_46, %c0_47] : memref<64x32xf32, #tpu.memory_space<vmem>>, vector<64x32xf32>
    %cst_48 = arith.constant dense<0.000000e+00> : vector<8x32xf32>
    %70 = tpu.matmul %68, %69, %cst_48 {dimension_numbers = #tpu.dot_dimension_numbers<[1], [0], [0], [1], [0, 0, 1, 1], [], []>} : vector<8x64xf32>, vector<64x32xf32>, vector<8x32xf32> -> vector<8x32xf32>
    %c0_49 = arith.constant 0 : index
    %c160 = arith.constant 160 : index
    %71 = vector.load %arg8[%c0_49, %c160] : memref<1x256xf32, #tpu.memory_space<vmem>>, vector<1x32xf32>
    %72 = vector.broadcast %71 : vector<1x32xf32> to vector<8x32xf32>
    %73 = arith.addf %70, %72 : vector<8x32xf32>
    %74 = arith.addf %61, %73 : vector<8x32xf32>
    %cst_50 = arith.constant dense<0.000000e+00> : vector<8xf32>
    %75 = vector.multi_reduction <add>, %74, %cst_50 [1] : vector<8x32xf32> to vector<8xf32>
    %76 = vector.shape_cast %75 : vector<8xf32> to vector<8x1xf32>
    %cst_51 = arith.constant 3.200000e+01 : f32
    %77 = vector.broadcast %cst_51 : f32 to vector<8x1xf32>
    %78 = arith.divf %76, %77 : vector<8x1xf32>
    %79 = vector.broadcast %78 : vector<8x1xf32> to vector<8x32xf32>
    %80 = arith.subf %74, %79 : vector<8x32xf32>
    %81 = arith.mulf %80, %80 : vector<8x32xf32>
    %cst_52 = arith.constant dense<0.000000e+00> : vector<8xf32>
    %82 = vector.multi_reduction <add>, %81, %cst_52 [1] : vector<8x32xf32> to vector<8xf32>
    %83 = vector.shape_cast %82 : vector<8xf32> to vector<8x1xf32>
    %cst_53 = arith.constant 3.200000e+01 : f32
    %84 = vector.broadcast %cst_53 : f32 to vector<8x1xf32>
    %85 = arith.divf %83, %84 : vector<8x1xf32>
    %86 = vector.broadcast %78 : vector<8x1xf32> to vector<8x32xf32>
    %87 = arith.subf %74, %86 : vector<8x32xf32>
    %cst_54 = arith.constant 9.99999974E-6 : f32
    %88 = vector.broadcast %cst_54 : f32 to vector<8x1xf32>
    %89 = arith.addf %85, %88 : vector<8x1xf32>
    %90 = math.rsqrt %89 : vector<8x1xf32>
    %91 = vector.broadcast %90 : vector<8x1xf32> to vector<8x32xf32>
    %92 = arith.mulf %87, %91 : vector<8x32xf32>
    %c0_55 = arith.constant 0 : index
    %c96 = arith.constant 96 : index
    %93 = vector.load %arg8[%c0_55, %c96] : memref<1x256xf32, #tpu.memory_space<vmem>>, vector<1x32xf32>
    %94 = vector.broadcast %93 : vector<1x32xf32> to vector<8x32xf32>
    %95 = arith.mulf %92, %94 : vector<8x32xf32>
    %c0_56 = arith.constant 0 : index
    %c128 = arith.constant 128 : index
    %96 = vector.load %arg8[%c0_56, %c128] : memref<1x256xf32, #tpu.memory_space<vmem>>, vector<1x32xf32>
    %97 = vector.broadcast %96 : vector<1x32xf32> to vector<8x32xf32>
    %98 = arith.addf %95, %97 : vector<8x32xf32>
    %c0_57 = arith.constant 0 : index
    %c0_58 = arith.constant 0 : index
    %c0_59 = arith.constant 0 : index
    %99 = vector.load %arg11[%c0_57, %c0_58, %c0_59] : memref<1x8x32xf32, #tpu.memory_space<vmem>>, vector<1x8x32xf32>
    %100 = vector.shape_cast %99 : vector<1x8x32xf32> to vector<8x32xf32>
    %101 = vector.shape_cast %98 : vector<8x32xf32> to vector<1x8x32xf32>
    tpu.vector_store %arg11[%c0_57, %c0_58, %c0_59], %101 {strides = array<i32>} : memref<1x8x32xf32, #tpu.memory_space<vmem>>, vector<1x8x32xf32>,
    return
  }
  func.func @transform_0(%arg0: i32, %arg1: i32) -> (i32, i32, i32) {
    %c0_i32 = arith.constant 0 : i32
    %c0_i32_0 = arith.constant 0 : i32
    return %arg0, %arg1, %c0_i32 : i32, i32, i32
  }
  func.func @transform_1(%arg0: i32, %arg1: i32) -> (i32, i32, i32) {
    %c0_i32 = arith.constant 0 : i32
    %c0_i32_0 = arith.constant 0 : i32
    %c0_i32_1 = arith.constant 0 : i32
    return %arg0, %c0_i32, %c0_i32_0 : i32, i32, i32
  }
  func.func @transform_2(%arg0: i32, %arg1: i32) -> (i32, i32, i32, i32) {
    %c0_i32 = arith.constant 0 : i32
    %c0_i32_0 = arith.constant 0 : i32
    %c0_i32_1 = arith.constant 0 : i32
    %c0_i32_2 = arith.constant 0 : i32
    %c0_i32_3 = arith.constant 0 : i32
    return %c0_i32, %c0_i32_0, %c0_i32_1, %c0_i32_2 : i32, i32, i32, i32
  }
  func.func @transform_3(%arg0: i32, %arg1: i32) -> (i32, i32, i32, i32) {
    %c0_i32 = arith.constant 0 : i32
    %c0_i32_0 = arith.constant 0 : i32
    %c0_i32_1 = arith.constant 0 : i32
    %c0_i32_2 = arith.constant 0 : i32
    %c0_i32_3 = arith.constant 0 : i32
    return %c0_i32, %c0_i32_0, %c0_i32_1, %c0_i32_2 : i32, i32, i32, i32
  }
  func.func @transform_4(%arg0: i32, %arg1: i32) -> (i32, i32, i32) {
    %c0_i32 = arith.constant 0 : i32
    %c0_i32_0 = arith.constant 0 : i32
    %c0_i32_1 = arith.constant 0 : i32
    %c0_i32_2 = arith.constant 0 : i32
    return %c0_i32, %c0_i32_0, %c0_i32_1 : i32, i32, i32
  }
  func.func @transform_5(%arg0: i32, %arg1: i32) -> (i32, i32, i32) {
    %c0_i32 = arith.constant 0 : i32
    %c0_i32_0 = arith.constant 0 : i32
    %c0_i32_1 = arith.constant 0 : i32
    return %c0_i32, %arg1, %c0_i32_0 : i32, i32, i32
  }
  func.func @transform_6(%arg0: i32, %arg1: i32) -> (i32, i32) {
    %c0_i32 = arith.constant 0 : i32
    %c0_i32_0 = arith.constant 0 : i32
    %c0_i32_1 = arith.constant 0 : i32
    return %c0_i32, %c0_i32_0 : i32, i32
  }
  func.func @transform_7(%arg0: i32, %arg1: i32) -> (i32, i32) {
    %c0_i32 = arith.constant 0 : i32
    %c0_i32_0 = arith.constant 0 : i32
    %c0_i32_1 = arith.constant 0 : i32
    return %c0_i32, %c0_i32_0 : i32, i32
  }
  func.func @transform_8(%arg0: i32, %arg1: i32) -> (i32, i32) {
    %c0_i32 = arith.constant 0 : i32
    %c0_i32_0 = arith.constant 0 : i32
    %c0_i32_1 = arith.constant 0 : i32
    return %c0_i32, %c0_i32_0 : i32, i32
  }
  func.func @transform_9(%arg0: i32, %arg1: i32) -> (i32, i32, i32) {
    %c0_i32 = arith.constant 0 : i32
    %c0_i32_0 = arith.constant 0 : i32
    return %arg0, %arg1, %c0_i32 : i32, i32, i32
  }
}

</mosaic_0001>

<llo_original>
// kernel: tpu_custom_call.1
$region0: #{tpu_custom_call.1}
  #allocation0 [shape = 'u32[]', space=smem, size = 0x4, offset = 0x4, fixed_abs, tag = 'smem constant byte address 0x4 - core index']
  #allocation1 [shape = 'u32[144,128]{1,0:T(1,128)}', space=vmem, size = 0x12000, scoped, tag = 'internal scratch']
  #allocation2 [shape = 'f32[4,16,8]{2,1,0:T(8,128)}', space=vmem, size = 0x8000, scoped, tag = 'scratch operand']
  #allocation3 [shape = 'f32[4,16,8]{2,1,0:T(8,128)}', space=vmem, size = 0x8000, scoped, tag = 'scratch operand']
  %s0 = inlined_call_operand.vmem [shape: f32[2,16,32], index: 0, kind: input, shape index: {}]
  %s1 = inlined_call_operand.vmem [shape: f32[2,16,32], index: 1, kind: input, shape index: {}]
  %s2 = inlined_call_operand.vmem [shape: f32[3,4,32,8], index: 2, kind: input, shape index: {}]
  %s3 = inlined_call_operand.vmem [shape: f32[3,4,1,8], index: 3, kind: input, shape index: {}]
  %s4 = inlined_call_operand.vmem [shape: f32[4,8,32], index: 4, kind: input, shape index: {}]
  %s5 = inlined_call_operand.vmem [shape: f32[4,16,16], index: 5, kind: input, shape index: {}]
  %s6 = inlined_call_operand.vmem [shape: f32[1,256], index: 6, kind: input, shape index: {}]
  %s7 = inlined_call_operand.vmem [shape: f32[32,64], index: 7, kind: input, shape index: {}]
  %s8 = inlined_call_operand.vmem [shape: f32[64,32], index: 8, kind: input, shape index: {}]
  %s9 = inlined_call_operand.hbm [shape: f32[2,16,32], index: 9, kind: output, shape index: {}]
  %s10 = sld [smem:[#allocation0]]
  $region111: #{tpu_custom_call.1} parent=0
    _
  %s12 = ssub.s32 1, %s10
  %s13 = scalar_select 0, %s12, %s10
  $region1: #{tpu_custom_call.1} parent=0
    #allocation4 [shape = 'u8[32768]{0}', space=vmem, size = 0x8000, scoped, tag = 'input window, operand 5']
    #allocation5 [shape = 'u8[8192]{0}', space=vmem, size = 0x2000, scoped, tag = 'output window, operand 0']
    #allocation6 [shape = 's32[2]{0}', space=sflag, size = 0x8, scoped, tag = 'scoped memory for tpu_custom_call.1']
    %14 = vsyncpa [#allocation6], 0
    %s15 = scalar_lea.sflag [#allocation6], 1
    %16 = vsyncpa %s15, 0
    loop: start=0, step=1, limit=6
    $region2: #{tpu_custom_call.1} parent=1 // loop_pre_header
      _
    $region3: #{tpu_custom_call.1} parent=1 // loop_header
      %s18 = sphi 0, %s22
      %p19 = scmp.ge.s32.totalorder %s18, 6
      %s25 = sphi 0, %s37
      %s26 = sphi 0, %s33
      %s27 = sphi 0, %s25
      %s28 = sphi 0, %s26
      %s29 = sphi 0, %s27
      %s30 = sphi 0, %s28
      %s42 = sphi 0, %s44
      %s45 = sphi 0, %s42
      %s46 = sphi 0, %s45
      %s62 = sphi 0, %s46
      %s68 = sphi 0, %s70
      %s71 = sphi 0, %s68
      %s72 = sphi 0, %s71
      %s88 = sphi 0, %s72
      %s92 = sphi 0, %s92
      %s94 = sphi 0, %s92
      %s95 = sphi 0, %s94
      %s109 = sphi 0, %s95
      %s113 = sphi 0, %s113
      %s115 = sphi 0, %s113
      %s116 = sphi 0, %s115
      %s130 = sphi 0, %s116
      %s134 = sphi 0, %s134
      %s136 = sphi 0, %s134
      %s137 = sphi 0, %s136
      %s151 = sphi 0, %s137
      %s157 = sphi 0, %s159
      %s160 = sphi 0, %s157
      %s161 = sphi 0, %s160
      %s177 = sphi 0, %s161
      %s181 = sphi 0, %s181
      %s183 = sphi 0, %s181
      %s184 = sphi 0, %s183
      %s198 = sphi 0, %s184
      %s202 = sphi 0, %s202
      %s204 = sphi 0, %s202
      %s205 = sphi 0, %s204
      %s219 = sphi 0, %s205
      %s223 = sphi 0, %s223
      %s225 = sphi 0, %s223
      %s226 = sphi 0, %s225
      %s240 = sphi 0, %s226
      %s248 = sphi 0, %s250
      %s251 = sphi 0, %s248
      %s252 = sphi 0, %s251
      %s268 = sphi 0, %s252
    $region4: #{tpu_custom_call.1} parent=1 // loop_header_branch
      %21 = sbr.rel (%p19) target = $region8
    $region5: #{tpu_custom_call.1} parent=1 // loop_body
      %s23 = ssub.s32 %s18, 1
      %s24 = ssub.s32 %s18, 2
      %s31 = sadd.s32 1, %s26
      %p32 = scmp.ge.s32.totalorder %s31, 2
      %s33 = scalar_select %p32, 0, %s31
      %s34 = sadd.s32 1, %s25
      %s35 = scalar_select %p32, %s34, %s25
      %p36 = scmp.ge.s32.totalorder %s35, 2
      %s37 = scalar_select %p36, 0, %s35
      %s38 = ssub.s32 %s25, %s37
      %s39 = ssub.s32 %s26, %s33
      %s40 = sor.u32 %s38, %s39
      %p41 = scmp.eq.s32.totalorder %s40, 0
      %s43 = sadd.s32 %s42, 1
      %s44 = scalar_select %p41, %s42, %s43
      %p47 = pneg %p41
      %p48 = scmp.eq.s32.totalorder %s18, 3
      %p49 = por %p47, %p48
      %p50 = scmp.ne.s32.totalorder %s42, %s45
      %p51 = scmp.eq.s32.totalorder %s18, 0
      %p52 = por %p50, %p51
      %p53 = scmp.ne.s32.totalorder %s42, %s45
      %p54 = scmp.eq.s32.totalorder %s23, 3
      %p55 = por %p53, %p54
      %p56 = scmp.ne.s32.totalorder %s45, %s46
      %p57 = scmp.eq.s32.totalorder %s23, 0
      %p58 = por %p56, %p57
      %p59 = scmp.ne.s32.totalorder %s45, %s46
      %p60 = scmp.eq.s32.totalorder %s24, 3
      %p61 = por %p59, %p60
      %p63 = scmp.ne.s32.totalorder %s46, %s62
      %p64 = scmp.eq.s32.totalorder %s24, 0
      %p65 = por %p63, %p64
      %s66 = ssub.s32 %s25, %s37
      %p67 = scmp.eq.s32.totalorder %s66, 0
      %s69 = sadd.s32 %s68, 1
      %s70 = scalar_select %p67, %s68, %s69
      %p73 = pneg %p67
      %p74 = scmp.eq.s32.totalorder %s18, 3
      %p75 = por %p73, %p74
      %p76 = scmp.ne.s32.totalorder %s68, %s71
      %p77 = scmp.eq.s32.totalorder %s18, 0
      %p78 = por %p76, %p77
      %p79 = scmp.ne.s32.totalorder %s68, %s71
      %p80 = scmp.eq.s32.totalorder %s23, 3
      %p81 = por %p79, %p80
      %p82 = scmp.ne.s32.totalorder %s71, %s72
      %p83 = scmp.eq.s32.totalorder %s23, 0
      %p84 = por %p82, %p83
      %p85 = scmp.ne.s32.totalorder %s71, %s72
      %p86 = scmp.eq.s32.totalorder %s24, 3
      %p87 = por %p85, %p86
      %p89 = scmp.ne.s32.totalorder %s72, %s88
      %p90 = scmp.eq.s32.totalorder %s24, 0
      %p91 = por %p89, %p90
      %s93 = sadd.s32 %s92, 1
      %p96 = scmp.eq.s32.totalorder %s18, 3
      %p97 = scmp.ne.s32.totalorder %s92, %s94
      %p98 = scmp.eq.s32.totalorder %s18, 0
      %p99 = por %p97, %p98
      %p100 = scmp.ne.s32.totalorder %s92, %s94
      %p101 = scmp.eq.s32.totalorder %s23, 3
      %p102 = por %p100, %p101
      %p103 = scmp.ne.s32.totalorder %s94, %s95
      %p104 = scmp.eq.s32.totalorder %s23, 0
      %p105 = por %p103, %p104
      %p106 = scmp.ne.s32.totalorder %s94, %s95
      %p107 = scmp.eq.s32.totalorder %s24, 3
      %p108 = por %p106, %p107
      %p110 = scmp.ne.s32.totalorder %s95, %s109
      %p111 = scmp.eq.s32.totalorder %s24, 0
      %p112 = por %p110, %p111
      %s114 = sadd.s32 %s113, 1
      %p117 = scmp.eq.s32.totalorder %s18, 3
      %p118 = scmp.ne.s32.totalorder %s113, %s115
      %p119 = scmp.eq.s32.totalorder %s18, 0
      %p120 = por %p118, %p119
      %p121 = scmp.ne.s32.totalorder %s113, %s115
      %p122 = scmp.eq.s32.totalorder %s23, 3
      %p123 = por %p121, %p122
      %p124 = scmp.ne.s32.totalorder %s115, %s116
      %p125 = scmp.eq.s32.totalorder %s23, 0
      %p126 = por %p124, %p125
      %p127 = scmp.ne.s32.totalorder %s115, %s116
      %p128 = scmp.eq.s32.totalorder %s24, 3
      %p129 = por %p127, %p128
      %p131 = scmp.ne.s32.totalorder %s116, %s130
      %p132 = scmp.eq.s32.totalorder %s24, 0
      %p133 = por %p131, %p132
      %s135 = sadd.s32 %s134, 1
      %p138 = scmp.eq.s32.totalorder %s18, 3
      %p139 = scmp.ne.s32.totalorder %s134, %s136
      %p140 = scmp.eq.s32.totalorder %s18, 0
      %p141 = por %p139, %p140
      %p142 = scmp.ne.s32.totalorder %s134, %s136
      %p143 = scmp.eq.s32.totalorder %s23, 3
      %p144 = por %p142, %p143
      %p145 = scmp.ne.s32.totalorder %s136, %s137
      %p146 = scmp.eq.s32.totalorder %s23, 0
      %p147 = por %p145, %p146
      %p148 = scmp.ne.s32.totalorder %s136, %s137
      %p149 = scmp.eq.s32.totalorder %s24, 3
      %p150 = por %p148, %p149
      %p152 = scmp.ne.s32.totalorder %s137, %s151
      %p153 = scmp.eq.s32.totalorder %s24, 0
      %p154 = por %p152, %p153
      %s155 = ssub.s32 %s26, %s33
      %p156 = scmp.eq.s32.totalorder %s155, 0
      %s158 = sadd.s32 %s157, 1
      %s159 = scalar_select %p156, %s157, %s158
      %p162 = pneg %p156
      %p163 = scmp.eq.s32.totalorder %s18, 3
      %p164 = por %p162, %p163
      %p165 = scmp.ne.s32.totalorder %s157, %s160
      %p166 = scmp.eq.s32.totalorder %s18, 0
      %p167 = por %p165, %p166
      %p168 = scmp.ne.s32.totalorder %s157, %s160
      %p169 = scmp.eq.s32.totalorder %s23, 3
      %p170 = por %p168, %p169
      %p171 = scmp.ne.s32.totalorder %s160, %s161
      %p172 = scmp.eq.s32.totalorder %s23, 0
      %p173 = por %p171, %p172
      %p174 = scmp.ne.s32.totalorder %s160, %s161
      %p175 = scmp.eq.s32.totalorder %s24, 3
      %p176 = por %p174, %p175
      %p178 = scmp.ne.s32.totalorder %s161, %s177
      %p179 = scmp.eq.s32.totalorder %s24, 0
      %p180 = por %p178, %p179
      %s182 = sadd.s32 %s181, 1
      %p185 = scmp.eq.s32.totalorder %s18, 3
      %p186 = scmp.ne.s32.totalorder %s181, %s183
      %p187 = scmp.eq.s32.totalorder %s18, 0
      %p188 = por %p186, %p187
      %p189 = scmp.ne.s32.totalorder %s181, %s183
      %p190 = scmp.eq.s32.totalorder %s23, 3
      %p191 = por %p189, %p190
      %p192 = scmp.ne.s32.totalorder %s183, %s184
      %p193 = scmp.eq.s32.totalorder %s23, 0
      %p194 = por %p192, %p193
      %p195 = scmp.ne.s32.totalorder %s183, %s184
      %p196 = scmp.eq.s32.totalorder %s24, 3
      %p197 = por %p195, %p196
      %p199 = scmp.ne.s32.totalorder %s184, %s198
      %p200 = scmp.eq.s32.totalorder %s24, 0
      %p201 = por %p199, %p200
      %s203 = sadd.s32 %s202, 1
      %p206 = scmp.eq.s32.totalorder %s18, 3
      %p207 = scmp.ne.s32.totalorder %s202, %s204
      %p208 = scmp.eq.s32.totalorder %s18, 0
      %p209 = por %p207, %p208
      %p210 = scmp.ne.s32.totalorder %s202, %s204
      %p211 = scmp.eq.s32.totalorder %s23, 3
      %p212 = por %p210, %p211
      %p213 = scmp.ne.s32.totalorder %s204, %s205
      %p214 = scmp.eq.s32.totalorder %s23, 0
      %p215 = por %p213, %p214
      %p216 = scmp.ne.s32.totalorder %s204, %s205
      %p217 = scmp.eq.s32.totalorder %s24, 3
      %p218 = por %p216, %p217
      %p220 = scmp.ne.s32.totalorder %s205, %s219
      %p221 = scmp.eq.s32.totalorder %s24, 0
      %p222 = por %p220, %p221
      %s224 = sadd.s32 %s223, 1
      %p227 = scmp.eq.s32.totalorder %s18, 3
      %p228 = scmp.ne.s32.totalorder %s223, %s225
      %p229 = scmp.eq.s32.totalorder %s18, 0
      %p230 = por %p228, %p229
      %p231 = scmp.ne.s32.totalorder %s223, %s225
      %p232 = scmp.eq.s32.totalorder %s23, 3
      %p233 = por %p231, %p232
      %p234 = scmp.ne.s32.totalorder %s225, %s226
      %p235 = scmp.eq.s32.totalorder %s23, 0
      %p236 = por %p234, %p235
      %p237 = scmp.ne.s32.totalorder %s225, %s226
      %p238 = scmp.eq.s32.totalorder %s24, 3
      %p239 = por %p237, %p238
      %p241 = scmp.ne.s32.totalorder %s226, %s240
      %p242 = scmp.eq.s32.totalorder %s24, 0
      %p243 = por %p241, %p242
      %s244 = ssub.s32 %s25, %s37
      %s245 = ssub.s32 %s26, %s33
      %s246 = sor.u32 %s244, %s245
      %p247 = scmp.eq.s32.totalorder %s246, 0
      %s249 = sadd.s32 %s248, 1
      %s250 = scalar_select %p247, %s248, %s249
      %p253 = pneg %p247
      %p254 = scmp.eq.s32.totalorder %s18, 3
      %p255 = por %p253, %p254
      %p256 = scmp.ne.s32.totalorder %s248, %s251
      %p257 = scmp.eq.s32.totalorder %s18, 0
      %p258 = por %p256, %p257
      %p259 = scmp.ne.s32.totalorder %s248, %s251
      %p260 = scmp.eq.s32.totalorder %s23, 3
      %p261 = por %p259, %p260
      %p262 = scmp.ne.s32.totalorder %s251, %s252
      %p263 = scmp.eq.s32.totalorder %s23, 0
      %p264 = por %p262, %p263
      %p265 = scmp.ne.s32.totalorder %s251, %s252
      %p266 = scmp.eq.s32.totalorder %s24, 3
      %p267 = por %p265, %p266
      %p269 = scmp.ne.s32.totalorder %s252, %s268
      %p270 = scmp.eq.s32.totalorder %s24, 0
      %p271 = por %p269, %p270
      %p272 = scmp.le.s32.totalorder 1, %s18
      %p273 = scmp.lt.s32.totalorder %s18, 5
      %p274 = pnand %p272, %p273
      %p275 = pneg %p274
      // Predicated region
      $region9: #{tpu_custom_call.1} parent=5 // pred_check
        _
      $region10: #{tpu_custom_call.1} parent=5 // pred_check_branch
        %277 = sbr.rel (%p274) target = $region12
      $region11: #{tpu_custom_call.1} parent=5 // pred_region
        %s278 = ssub.s32 %s18, 1
        // Predicated region
        $region13: #{tpu_custom_call.1} parent=11 // pred_check
          %p279 = pneg %p105
        $region14: #{tpu_custom_call.1} parent=11 // pred_check_branch
          %281 = sbr.rel (%p279) target = $region16
        $region15: #{tpu_custom_call.1} parent=11 // pred_region
          _
        $region16: #{tpu_custom_call.1} parent=11 // pred_fallthru
          _
        // Predicated region
        $region17: #{tpu_custom_call.1} parent=11 // pred_check
          %p282 = pneg %p126
        $region18: #{tpu_custom_call.1} parent=11 // pred_check_branch
          %284 = sbr.rel (%p282) target = $region20
        $region19: #{tpu_custom_call.1} parent=11 // pred_region
          _
        $region20: #{tpu_custom_call.1} parent=11 // pred_fallthru
          _
        // Predicated region
        $region21: #{tpu_custom_call.1} parent=11 // pred_check
          %p285 = pneg %p147
        $region22: #{tpu_custom_call.1} parent=11 // pred_check_branch
          %287 = sbr.rel (%p285) target = $region24
        $region23: #{tpu_custom_call.1} parent=11 // pred_region
          _
        $region24: #{tpu_custom_call.1} parent=11 // pred_fallthru
          _
        // Predicated region
        $region25: #{tpu_custom_call.1} parent=11 // pred_check
          %p288 = pneg %p194
        $region26: #{tpu_custom_call.1} parent=11 // pred_check_branch
          %290 = sbr.rel (%p288) target = $region28
        $region27: #{tpu_custom_call.1} parent=11 // pred_region
          _
        $region28: #{tpu_custom_call.1} parent=11 // pred_fallthru
          _
        // Predicated region
        $region29: #{tpu_custom_call.1} parent=11 // pred_check
          %p291 = pneg %p215
        $region30: #{tpu_custom_call.1} parent=11 // pred_check_branch
          %293 = sbr.rel (%p291) target = $region32
        $region31: #{tpu_custom_call.1} parent=11 // pred_region
          _
        $region32: #{tpu_custom_call.1} parent=11 // pred_fallthru
          _
        // Predicated region
        $region33: #{tpu_custom_call.1} parent=11 // pred_check
          %p294 = pneg %p236
        $region34: #{tpu_custom_call.1} parent=11 // pred_check_branch
          %296 = sbr.rel (%p294) target = $region36
        $region35: #{tpu_custom_call.1} parent=11 // pred_region
          _
        $region36: #{tpu_custom_call.1} parent=11 // pred_fallthru
          _
      $region12: #{tpu_custom_call.1} parent=5 // pred_fallthru
        _
      %p297 = scmp.lt.s32.totalorder %s18, 4
      // Predicated region
      $region37: #{tpu_custom_call.1} parent=5 // pred_check
        %p298 = pneg %p297
      $region38: #{tpu_custom_call.1} parent=5 // pred_check_branch
        %300 = sbr.rel (%p298) target = $region40
      $region39: #{tpu_custom_call.1} parent=5 // pred_region
        // Predicated region
        $region41: #{tpu_custom_call.1} parent=39 // pred_check
          %p301 = pneg %p52
        $region42: #{tpu_custom_call.1} parent=39 // pred_check_branch
          %303 = sbr.rel (%p301) target = $region44
        $region43: #{tpu_custom_call.1} parent=39 // pred_region
          %p304 = scmp.lt.s32.totalorder %s25, 1
          %s305 = scalar_select %p304, %s25, 1
          %p306 = scmp.lt.s32.totalorder %s26, 1
          %s307 = scalar_select %p306, %s26, 1
          %s308 = smul.addr %s305, 2
          %s309 = sadd.s32 %s307, %s308
          %s310 = smul.addr %s309, 8
          %s311 = scalar_lea.vmem %s0, %s310
        $region44: #{tpu_custom_call.1} parent=39 // pred_fallthru
          _
        // Predicated region
        $region45: #{tpu_custom_call.1} parent=39 // pred_check
          %p312 = pneg %p78
        $region46: #{tpu_custom_call.1} parent=39 // pred_check_branch
          %314 = sbr.rel (%p312) target = $region48
        $region47: #{tpu_custom_call.1} parent=39 // pred_region
          %p315 = scmp.lt.s32.totalorder %s25, 1
          %s316 = scalar_select %p315, %s25, 1
          %s317 = smul.addr %s316, 2
          %s318 = smul.addr %s317, 8
          %s319 = scalar_lea.vmem %s1, %s318
        $region48: #{tpu_custom_call.1} parent=39 // pred_fallthru
          _
        // Predicated region
        $region49: #{tpu_custom_call.1} parent=39 // pred_check
          %p320 = pneg %p167
        $region50: #{tpu_custom_call.1} parent=39 // pred_check_branch
          %322 = sbr.rel (%p320) target = $region52
        $region51: #{tpu_custom_call.1} parent=39 // pred_region
          %s323 = sand.u32 %s157, 1
          %s324 = sand.u32 %s157, 1
          %s325 = smul.addr %s324, 32
          %s326 = scalar_lea.vmem [#allocation4], %s325
          %s327 = smul.addr %s26, 8
          %s328 = scalar_lea.vmem %s5, %s327
          // Predicated region
          $region53: #{tpu_custom_call.1} parent=51 // pred_check
            _
          $region54: #{tpu_custom_call.1} parent=51 // pred_check_branch
            %330 = sbr.rel (0) target = $region56
          $region55: #{tpu_custom_call.1} parent=51 // pred_region
            // Predicated region
            $region57: #{tpu_custom_call.1} parent=55 // pred_check
              _
            $region58: #{tpu_custom_call.1} parent=55 // pred_check_branch
              %332 = sbr.rel (0) target = $region60
            $region59: #{tpu_custom_call.1} parent=55 // pred_region
              // Predicated region
              $region72: #{tpu_custom_call.1} parent=59 // pred_check
                _
              $region73: #{tpu_custom_call.1} parent=59 // pred_check_branch
                %354 = sbr.rel (0) target = $region75
              $region74: #{tpu_custom_call.1} parent=59 // pred_region
                loop: start=0, step=1, limit=1
                $region76: #{tpu_custom_call.1} parent=74 // loop_pre_header
                  _
                $region77: #{tpu_custom_call.1} parent=74 // loop_header
                  %s356 = sphi 0, %s360
                  %p357 = scmp.ge.s32.totalorder %s356, 1
                  %s361 = sphi %s328, %s328
                  %s362 = sphi %s326, %s326
                $region78: #{tpu_custom_call.1} parent=74 // loop_header_branch
                  %359 = sbr.rel (%p357) target = $region82
                $region79: #{tpu_custom_call.1} parent=74 // loop_body
                  %v363 = vld [vmem:[%s361] sm:$0xff]
                  %364 = vst [vmem:[%s362] sm:$0xff] %v363
                  %v365 = vld [vmem:[%s361 + $0x10] sm:$0xff]
                  %366 = vst [vmem:[%s362 + $0x8] sm:$0xff] %v365
                  %v367 = vld [vmem:[%s361 + $0x20] sm:$0xff]
                  %368 = vst [vmem:[%s362 + $0x10] sm:$0xff] %v367
                  %v369 = vld [vmem:[%s361 + $0x30] sm:$0xff]
                  %370 = vst [vmem:[%s362 + $0x18] sm:$0xff] %v369
                $region80: #{tpu_custom_call.1} parent=74 // loop_footer
                  %s360 = sadd.s32 1, %s356
                $region81: #{tpu_custom_call.1} parent=74 // loop_footer_branch
                  %355 = sbr.rel target = $region77
                $region82: #{tpu_custom_call.1} parent=74 // loop_exit
                  _
              $region75: #{tpu_custom_call.1} parent=59 // pred_fallthru
                _
              // Predicated region
              $region83: #{tpu_custom_call.1} parent=59 // pred_check
                _
              $region84: #{tpu_custom_call.1} parent=59 // pred_check_branch
                %372 = sbr.rel target = $region86
              $region85: #{tpu_custom_call.1} parent=59 // pred_region
                _
              $region86: #{tpu_custom_call.1} parent=59 // pred_fallthru
                _
            $region60: #{tpu_custom_call.1} parent=55 // pred_fallthru
              _
            // Predicated region
            $region61: #{tpu_custom_call.1} parent=55 // pred_check
              _
            $region62: #{tpu_custom_call.1} parent=55 // pred_check_branch
              %334 = sbr.rel target = $region64
            $region63: #{tpu_custom_call.1} parent=55 // pred_region
              %s336 = ssub.s32 256, 1
              loop: start=0, step=1, limit=1
              $region65: #{tpu_custom_call.1} parent=63 // loop_pre_header
                _
              $region66: #{tpu_custom_call.1} parent=63 // loop_header
                %s338 = sphi 0, %s342
                %p339 = scmp.ge.s32.totalorder %s338, 1
                %s343 = sphi %s328, %s328
                %s344 = sphi %s326, %s326
              $region67: #{tpu_custom_call.1} parent=63 // loop_header_branch
                %341 = sbr.rel (%p339) target = $region71
              $region68: #{tpu_custom_call.1} parent=63 // loop_body
                %v345 = vld [vmem:[%s343] sm:%s336]
                %346 = vst [vmem:[%s344] sm:%s336] %v345
                %v347 = vld [vmem:[%s343 + $0x10] sm:%s336]
                %348 = vst [vmem:[%s344 + $0x8] sm:%s336] %v347
                %v349 = vld [vmem:[%s343 + $0x20] sm:%s336]
                %350 = vst [vmem:[%s344 + $0x10] sm:%s336] %v349
                %v351 = vld [vmem:[%s343 + $0x30] sm:%s336]
                %352 = vst [vmem:[%s344 + $0x18] sm:%s336] %v351
              $region69: #{tpu_custom_call.1} parent=63 // loop_footer
                %s342 = sadd.s32 1, %s338
              $region70: #{tpu_custom_call.1} parent=63 // loop_footer_branch
                %337 = sbr.rel target = $region66
              $region71: #{tpu_custom_call.1} parent=63 // loop_exit
                _
            $region64: #{tpu_custom_call.1} parent=55 // pred_fallthru
              _
          $region56: #{tpu_custom_call.1} parent=51 // pred_fallthru
            _
          %373 = vnop
        $region52: #{tpu_custom_call.1} parent=39 // pred_fallthru
          _
      $region40: #{tpu_custom_call.1} parent=5 // pred_fallthru
        _
      %p374 = scmp.le.s32.totalorder 1, %s18
      %p375 = scmp.lt.s32.totalorder %s18, 5
      %p376 = pnand %p374, %p375
      %p377 = pneg %p376
      // Predicated region
      $region87: #{tpu_custom_call.1} parent=5 // pred_check
        _
      $region88: #{tpu_custom_call.1} parent=5 // pred_check_branch
        %379 = sbr.rel (%p376) target = $region90
      $region89: #{tpu_custom_call.1} parent=5 // pred_region
        %s380 = ssub.s32 %s18, 1
        %s381 = sand.u32 %s160, 1
        %s382 = sand.u32 %s160, 1
        %s383 = smul.addr %s382, 32
        %s384 = scalar_lea.vmem [#allocation4], %s383
        // Predicated region
        $region91: #{tpu_custom_call.1} parent=89 // pred_check
          %p385 = pneg %p173
        $region92: #{tpu_custom_call.1} parent=89 // pred_check_branch
          %387 = sbr.rel (%p385) target = $region94
        $region93: #{tpu_custom_call.1} parent=89 // pred_region
          _
        $region94: #{tpu_custom_call.1} parent=89 // pred_fallthru
          _
        %p388 = scmp.lt.s32.totalorder %s27, 1
        %s389 = scalar_select %p388, %s27, 1
        %p390 = scmp.lt.s32.totalorder %s28, 1
        %s391 = scalar_select %p390, %s28, 1
        %s392 = smul.addr %s389, 2
        %s393 = sadd.s32 %s391, %s392
        %s394 = smul.addr %s393, 8
        %s395 = scalar_lea.vmem %s0, %s394
        %p396 = pneg %p58
        %p397 = pneg %p55
        %p398 = scmp.lt.s32.totalorder %s27, 1
        %s399 = scalar_select %p398, %s27, 1
        %s400 = smul.addr %s399, 2
        %s401 = smul.addr %s400, 8
        %s402 = scalar_lea.vmem %s1, %s401
        %p403 = pneg %p84
        %p404 = pneg %p81
        %p405 = pneg %p105
        %p406 = pneg %p102
        %p407 = pneg %p126
        %p408 = pneg %p123
        %p409 = pneg %p147
        %p410 = pneg %p144
        %s411 = sand.u32 %s160, 1
        %s412 = sand.u32 %s160, 1
        %s413 = smul.addr %s412, 32
        %s414 = scalar_lea.vmem [#allocation4], %s413
        %p415 = pneg %p173
        %p416 = pneg %p170
        %p417 = pneg %p194
        %p418 = pneg %p191
        %p419 = pneg %p215
        %p420 = pneg %p212
        %p421 = pneg %p236
        %p422 = pneg %p233
        %p423 = pneg %p264
        %p424 = pneg %p261
        %s425 = sand.u32 %s251, 1
        %s426 = scalar_lea.sflag [#allocation6], %s425
        %s427 = sand.u32 %s251, 1
        %s428 = smul.addr %s427, 8
        %s429 = scalar_lea.vmem [#allocation5], %s428
        %p430 = scmp.lt.s32.totalorder %s27, 1
        %s431 = scalar_select %p430, %s27, 1
        %p432 = scmp.lt.s32.totalorder %s28, 1
        %s433 = scalar_select %p432, %s28, 1
        %s434 = smul.addr %s431, 2
        %s435 = sadd.s32 %s433, %s434
        %s436 = smul.addr %s435, 8
        %s437 = scalar_lea.vmem %s0, %s436
        %p438 = scmp.lt.s32.totalorder %s27, 1
        %s439 = scalar_select %p438, %s27, 1
        %s440 = smul.addr %s439, 2
        %s441 = smul.addr %s440, 8
        %s442 = scalar_lea.vmem %s1, %s441
        %p443 = scmp.eq.s32.totalorder %s28, 0
        // Predicated region
        $region95: #{tpu_custom_call.1} parent=89 // pred_check
          %p444 = pneg %p443
        $region96: #{tpu_custom_call.1} parent=89 // pred_check_branch
          %446 = sbr.rel (%p444) target = $region98
        $region97: #{tpu_custom_call.1} parent=89 // pred_region
          %v447 = vld [vmem:[%s442] sm:$0xff]
          %v448 = vld [vmem:[%s442 + $0x8] sm:$0xff]
          %s449 = scalar_lea.vmem %s2, 128
          %v450 = vld [vmem:[%s449] sm:$0xff]
          %v451 = vld [vmem:[%s449 + $0x8] sm:$0xff]
          %v452 = vld [vmem:[%s449 + $0x10] sm:$0xff]
          %v453 = vld [vmem:[%s449 + $0x18] sm:$0xff]
          %v454 = vld [vmem:[%s449 + $0x20] sm:$0xff]
          %v455 = vld [vmem:[%s449 + $0x28] sm:$0xff]
          %v456 = vld [vmem:[%s449 + $0x30] sm:$0xff]
          %v457 = vld [vmem:[%s449 + $0x38] sm:$0xff]
          %v458 = vld [vmem:[%s449 + $0x40] sm:$0xff]
          %v459 = vld [vmem:[%s449 + $0x48] sm:$0xff]
          %v460 = vld [vmem:[%s449 + $0x50] sm:$0xff]
          %v461 = vld [vmem:[%s449 + $0x58] sm:$0xff]
          %v462 = vld [vmem:[%s449 + $0x60] sm:$0xff]
          %v463 = vld [vmem:[%s449 + $0x68] sm:$0xff]
          %v464 = vld [vmem:[%s449 + $0x70] sm:$0xff]
          %v465 = vld [vmem:[%s449 + $0x78] sm:$0xff]
          %466 = vxpose.xlu0.b32.start [1/16] %v450, 128
          %467 = vxpose.xlu0.b32.cont [2/16] %v451, 128
          %468 = vxpose.xlu0.b32.cont [3/16] %v452, 128
          %469 = vxpose.xlu0.b32.cont [4/16] %v453, 128
          %470 = vxpose.xlu0.b32.cont [5/16] 0.0, 128
          %471 = vxpose.xlu0.b32.cont [6/16] 0.0, 128
          %472 = vxpose.xlu0.b32.cont [7/16] 0.0, 128
          %473 = vxpose.xlu0.b32.cont [8/16] 0.0, 128
          %474 = vxpose.xlu0.b32.cont [9/16] 0.0, 128
          %475 = vxpose.xlu0.b32.cont [10/16] 0.0, 128
          %476 = vxpose.xlu0.b32.cont [11/16] 0.0, 128
          %477 = vxpose.xlu0.b32.cont [12/16] 0.0, 128
          %478 = vxpose.xlu0.b32.cont [13/16] 0.0, 128
          %479 = vxpose.xlu0.b32.cont [14/16] 0.0, 128
          %480 = vxpose.xlu0.b32.cont [15/16] 0.0, 128
          %481 = vxpose.xlu0.b32.end [16/16] 0.0, 128
          %v482 = vpop.trf.xlu0
          %v483 = vpop.trf.xlu0
          %v484 = vpop.trf.xlu0
          %v485 = vpop.trf.xlu0
          %v486 = vpop.trf.xlu0
          %v487 = vpop.trf.xlu0
          %v488 = vpop.trf.xlu0
          %v489 = vpop.trf.xlu0
          %v490 = vpop.trf.xlu0
          %v491 = vpop.trf.xlu0
          %v492 = vpop.trf.xlu0
          %v493 = vpop.trf.xlu0
          %v494 = vpop.trf.xlu0
          %v495 = vpop.trf.xlu0
          %v496 = vpop.trf.xlu0
          %v497 = vpop.trf.xlu0
          %498 = vxpose.xlu0.b32.start [1/16] %v454, 128
          %499 = vxpose.xlu0.b32.cont [2/16] %v455, 128
          %500 = vxpose.xlu0.b32.cont [3/16] %v456, 128
          %501 = vxpose.xlu0.b32.cont [4/16] %v457, 128
          %502 = vxpose.xlu0.b32.cont [5/16] 0.0, 128
          %503 = vxpose.xlu0.b32.cont [6/16] 0.0, 128
          %504 = vxpose.xlu0.b32.cont [7/16] 0.0, 128
          %505 = vxpose.xlu0.b32.cont [8/16] 0.0, 128
          %506 = vxpose.xlu0.b32.cont [9/16] 0.0, 128
          %507 = vxpose.xlu0.b32.cont [10/16] 0.0, 128
          %508 = vxpose.xlu0.b32.cont [11/16] 0.0, 128
          %509 = vxpose.xlu0.b32.cont [12/16] 0.0, 128
          %510 = vxpose.xlu0.b32.cont [13/16] 0.0, 128
          %511 = vxpose.xlu0.b32.cont [14/16] 0.0, 128
          %512 = vxpose.xlu0.b32.cont [15/16] 0.0, 128
          %513 = vxpose.xlu0.b32.end [16/16] 0.0, 128
          %v514 = vpop.trf.xlu0
          %v515 = vpop.trf.xlu0
          %v516 = vpop.trf.xlu0
          %v517 = vpop.trf.xlu0
          %v518 = vpop.trf.xlu0
          %v519 = vpop.trf.xlu0
          %v520 = vpop.trf.xlu0
          %v521 = vpop.trf.xlu0
          %v522 = vpop.trf.xlu0
          %v523 = vpop.trf.xlu0
          %v524 = vpop.trf.xlu0
          %v525 = vpop.trf.xlu0
          %v526 = vpop.trf.xlu0
          %v527 = vpop.trf.xlu0
          %v528 = vpop.trf.xlu0
          %v529 = vpop.trf.xlu0
          %530 = vxpose.xlu0.b32.start [1/16] %v458, 128
          %531 = vxpose.xlu0.b32.cont [2/16] %v459, 128
          %532 = vxpose.xlu0.b32.cont [3/16] %v460, 128
          %533 = vxpose.xlu0.b32.cont [4/16] %v461, 128
          %534 = vxpose.xlu0.b32.cont [5/16] 0.0, 128
          %535 = vxpose.xlu0.b32.cont [6/16] 0.0, 128
          %536 = vxpose.xlu0.b32.cont [7/16] 0.0, 128
          %537 = vxpose.xlu0.b32.cont [8/16] 0.0, 128
          %538 = vxpose.xlu0.b32.cont [9/16] 0.0, 128
          %539 = vxpose.xlu0.b32.cont [10/16] 0.0, 128
          %540 = vxpose.xlu0.b32.cont [11/16] 0.0, 128
          %541 = vxpose.xlu0.b32.cont [12/16] 0.0, 128
          %542 = vxpose.xlu0.b32.cont [13/16] 0.0, 128
          %543 = vxpose.xlu0.b32.cont [14/16] 0.0, 128
          %544 = vxpose.xlu0.b32.cont [15/16] 0.0, 128
          %545 = vxpose.xlu0.b32.end [16/16] 0.0, 128
          %v546 = vpop.trf.xlu0
          %v547 = vpop.trf.xlu0
          %v548 = vpop.trf.xlu0
          %v549 = vpop.trf.xlu0
          %v550 = vpop.trf.xlu0
          %v551 = vpop.trf.xlu0
          %v552 = vpop.trf.xlu0
          %v553 = vpop.trf.xlu0
          %v554 = vpop.trf.xlu0
          %v555 = vpop.trf.xlu0
          %v556 = vpop.trf.xlu0
          %v557 = vpop.trf.xlu0
          %v558 = vpop.trf.xlu0
          %v559 = vpop.trf.xlu0
          %v560 = vpop.trf.xlu0
          %v561 = vpop.trf.xlu0
          %562 = vxpose.xlu0.b32.start [1/16] %v462, 128
          %563 = vxpose.xlu0.b32.cont [2/16] %v463, 128
          %564 = vxpose.xlu0.b32.cont [3/16] %v464, 128
          %565 = vxpose.xlu0.b32.cont [4/16] %v465, 128
          %566 = vxpose.xlu0.b32.cont [5/16] 0.0, 128
          %567 = vxpose.xlu0.b32.cont [6/16] 0.0, 128
          %568 = vxpose.xlu0.b32.cont [7/16] 0.0, 128
          %569 = vxpose.xlu0.b32.cont [8/16] 0.0, 128
          %570 = vxpose.xlu0.b32.cont [9/16] 0.0, 128
          %571 = vxpose.xlu0.b32.cont [10/16] 0.0, 128
          %572 = vxpose.xlu0.b32.cont [11/16] 0.0, 128
          %573 = vxpose.xlu0.b32.cont [12/16] 0.0, 128
          %574 = vxpose.xlu0.b32.cont [13/16] 0.0, 128
          %575 = vxpose.xlu0.b32.cont [14/16] 0.0, 128
          %576 = vxpose.xlu0.b32.cont [15/16] 0.0, 128
          %577 = vxpose.xlu0.b32.end [16/16] 0.0, 128
          %v578 = vpop.trf.xlu0
          %v579 = vpop.trf.xlu0
          %v580 = vpop.trf.xlu0
          %v581 = vpop.trf.xlu0
          %v582 = vpop.trf.xlu0
          %v583 = vpop.trf.xlu0
          %v584 = vpop.trf.xlu0
          %v585 = vpop.trf.xlu0
          %v586 = vpop.trf.xlu0
          %v587 = vpop.trf.xlu0
          %v588 = vpop.trf.xlu0
          %v589 = vpop.trf.xlu0
          %v590 = vpop.trf.xlu0
          %v591 = vpop.trf.xlu0
          %v592 = vpop.trf.xlu0
          %v593 = vpop.trf.xlu0
          %vm594 = vcmask 261120
          %v596 = vsel %vm594, %v482, 0
          %v599 = vsel %vm594, %v514, 0
          %v602 = vsel %vm594, %v546, 0
          %v605 = vsel %vm594, %v578, 0
          %v608 = vsel %vm594, %v447, 0
          %v611 = vsel %vm594, %v448, 0
          %613 = vmatprep.subr.mxu0 0.0
          %614 = vmatpush1.xpose.msra.mxu0 0.0
          %615 = vmatprep.subr.mxu0 0.0
          %616 = vmatpush1.xpose.msra.mxu0 0.0
          %617 = vmatprep.subr.mxu0 0.0
          %618 = vmatpush1.xpose.msra.mxu0 0.0
          %619 = vmatprep.subr.mxu0 0.0
          %620 = vmatpush1.xpose.msra.mxu0 0.0
          %621 = vmatprep.subr.mxu0 0.0
          %622 = vmatpush1.xpose.msra.mxu0 0.0
          %623 = vmatprep.subr.mxu0 0.0
          %624 = vmatpush1.xpose.msra.mxu0 0.0
          %625 = vmatprep.subr.mxu0 0.0
          %626 = vmatpush1.xpose.msra.mxu0 0.0
          %627 = vmatprep.subr.mxu0 0.0
          %628 = vmatpush1.xpose.msra.mxu0 0.0
          %629 = vmatprep.subr.mxu0 0.0
          %630 = vmatpush1.xpose.msra.mxu0 0.0
          %631 = vmatprep.subr.mxu0 0.0
          %632 = vmatpush1.xpose.msra.mxu0 0.0
          %633 = vmatprep.subr.mxu0 0.0
          %634 = vmatpush1.xpose.msra.mxu0 0.0
          %635 = vmatprep.subr.mxu0 0.0
          %636 = vmatpush1.xpose.msra.mxu0 0.0
          %637 = vmatprep.subr.mxu0 0.0
          %638 = vmatpush1.xpose.msra.mxu0 0.0
          %639 = vmatprep.subr.mxu0 0.0
          %640 = vmatpush1.xpose.msra.mxu0 0.0
          %641 = vmatprep.subr.mxu0 0.0
          %642 = vmatpush1.xpose.msra.mxu0 %v611
          %643 = vmatprep.subr.mxu0 0.0
          %644 = vmatpush1.xpose.msra.mxu0 %v608
          %645 = vmatprep.subr.mxu0 0.0
          %646 = vmatpush2.xpose.msra.mxu0 0.0
          %647 = vmatprep.subr.mxu0 0.0
          %648 = vmatpush2.xpose.msra.mxu0 0.0
          %649 = vmatprep.subr.mxu0 0.0
          %650 = vmatpush2.xpose.msra.mxu0 0.0
          %651 = vmatprep.subr.mxu0 0.0
          %652 = vmatpush2.xpose.msra.mxu0 0.0
          %653 = vmatprep.subr.mxu0 0.0
          %654 = vmatpush2.xpose.msra.mxu0 0.0
          %655 = vmatprep.subr.mxu0 0.0
          %656 = vmatpush2.xpose.msra.mxu0 0.0
          %657 = vmatprep.subr.mxu0 0.0
          %658 = vmatpush2.xpose.msra.mxu0 0.0
          %659 = vmatprep.subr.mxu0 0.0
          %660 = vmatpush2.xpose.msra.mxu0 0.0
          %661 = vmatprep.subr.mxu0 0.0
          %662 = vmatpush2.xpose.msra.mxu0 0.0
          %663 = vmatprep.subr.mxu0 0.0
          %664 = vmatpush2.xpose.msra.mxu0 0.0
          %665 = vmatprep.subr.mxu0 0.0
          %666 = vmatpush2.xpose.msra.mxu0 0.0
          %667 = vmatprep.subr.mxu0 0.0
          %668 = vmatpush2.xpose.msra.mxu0 0.0
          %669 = vmatprep.subr.mxu0 0.0
          %670 = vmatpush2.xpose.msra.mxu0 0.0
          %671 = vmatprep.subr.mxu0 0.0
          %672 = vmatpush2.xpose.msra.mxu0 0.0
          %673 = vmatprep.subr.mxu0 0.0
          %674 = vmatpush2.xpose.msra.mxu0 0.0
          %675 = vmatprep.subr.mxu0 0.0
          %676 = vmatpush2.xpose.msra.mxu0 0.0
          %677 = vmatprep.mubr.f32.mxu0 0.0
          %678 = vmatmul.mubr.f32.gmra.mxu0 %v596
          %v679 = vpop.f32.mrf.mxu0
          %v680 = vadd.f32 0.0, %v679
          %v681 = vpop.f32.mrf.mxu0
          %682 = vmatprep.mubr.f32.mxu0 0.0
          %683 = vmatmul.mubr.f32.gmra.mxu0 %v599
          %v684 = vpop.f32.mrf.mxu0
          %v685 = vadd.f32 0.0, %v684
          %v686 = vpop.f32.mrf.mxu0
          %687 = vmatprep.mubr.f32.mxu0 0.0
          %688 = vmatmul.mubr.f32.gmra.mxu0 %v602
          %v689 = vpop.f32.mrf.mxu0
          %v690 = vadd.f32 0.0, %v689
          %v691 = vpop.f32.mrf.mxu0
          %692 = vmatprep.mubr.f32.mxu0 0.0
          %693 = vmatmul.mubr.f32.gmra.mxu0 %v605
          %v694 = vpop.f32.mrf.mxu0
          %v695 = vadd.f32 0.0, %v694
          %v696 = vpop.f32.mrf.mxu0
          %697 = vdwg.mxu0
          %698 = vxpose.xlu0.b32.start [1/16] %v680, 128
          %699 = vxpose.xlu0.b32.cont [2/16] 0.0, 128
          %700 = vxpose.xlu0.b32.cont [3/16] 0.0, 128
          %701 = vxpose.xlu0.b32.cont [4/16] 0.0, 128
          %702 = vxpose.xlu0.b32.cont [5/16] 0.0, 128
          %703 = vxpose.xlu0.b32.cont [6/16] 0.0, 128
          %704 = vxpose.xlu0.b32.cont [7/16] 0.0, 128
          %705 = vxpose.xlu0.b32.cont [8/16] 0.0, 128
          %706 = vxpose.xlu0.b32.cont [9/16] 0.0, 128
          %707 = vxpose.xlu0.b32.cont [10/16] 0.0, 128
          %708 = vxpose.xlu0.b32.cont [11/16] 0.0, 128
          %709 = vxpose.xlu0.b32.cont [12/16] 0.0, 128
          %710 = vxpose.xlu0.b32.cont [13/16] 0.0, 128
          %711 = vxpose.xlu0.b32.cont [14/16] 0.0, 128
          %712 = vxpose.xlu0.b32.cont [15/16] 0.0, 128
          %713 = vxpose.xlu0.b32.end [16/16] 0.0, 128
          %v714 = vpop.trf.xlu0
          %v715 = vpop.trf.xlu0
          %v716 = vpop.trf.xlu0
          %v717 = vpop.trf.xlu0
          %v718 = vpop.trf.xlu0
          %v719 = vpop.trf.xlu0
          %v720 = vpop.trf.xlu0
          %v721 = vpop.trf.xlu0
          %v722 = vpop.trf.xlu0
          %v723 = vpop.trf.xlu0
          %v724 = vpop.trf.xlu0
          %v725 = vpop.trf.xlu0
          %v726 = vpop.trf.xlu0
          %v727 = vpop.trf.xlu0
          %v728 = vpop.trf.xlu0
          %v729 = vpop.trf.xlu0
          %730 = vxpose.xlu0.b32.start [1/16] %v685, 128
          %731 = vxpose.xlu0.b32.cont [2/16] 0.0, 128
          %732 = vxpose.xlu0.b32.cont [3/16] 0.0, 128
          %733 = vxpose.xlu0.b32.cont [4/16] 0.0, 128
          %734 = vxpose.xlu0.b32.cont [5/16] 0.0, 128
          %735 = vxpose.xlu0.b32.cont [6/16] 0.0, 128
          %736 = vxpose.xlu0.b32.cont [7/16] 0.0, 128
          %737 = vxpose.xlu0.b32.cont [8/16] 0.0, 128
          %738 = vxpose.xlu0.b32.cont [9/16] 0.0, 128
          %739 = vxpose.xlu0.b32.cont [10/16] 0.0, 128
          %740 = vxpose.xlu0.b32.cont [11/16] 0.0, 128
          %741 = vxpose.xlu0.b32.cont [12/16] 0.0, 128
          %742 = vxpose.xlu0.b32.cont [13/16] 0.0, 128
          %743 = vxpose.xlu0.b32.cont [14/16] 0.0, 128
          %744 = vxpose.xlu0.b32.cont [15/16] 0.0, 128
          %745 = vxpose.xlu0.b32.end [16/16] 0.0, 128
          %v746 = vpop.trf.xlu0
          %v747 = vpop.trf.xlu0
          %v748 = vpop.trf.xlu0
          %v749 = vpop.trf.xlu0
          %v750 = vpop.trf.xlu0
          %v751 = vpop.trf.xlu0
          %v752 = vpop.trf.xlu0
          %v753 = vpop.trf.xlu0
          %v754 = vpop.trf.xlu0
          %v755 = vpop.trf.xlu0
          %v756 = vpop.trf.xlu0
          %v757 = vpop.trf.xlu0
          %v758 = vpop.trf.xlu0
          %v759 = vpop.trf.xlu0
          %v760 = vpop.trf.xlu0
          %v761 = vpop.trf.xlu0
          %762 = vxpose.xlu0.b32.start [1/16] %v690, 128
          %763 = vxpose.xlu0.b32.cont [2/16] 0.0, 128
          %764 = vxpose.xlu0.b32.cont [3/16] 0.0, 128
          %765 = vxpose.xlu0.b32.cont [4/16] 0.0, 128
          %766 = vxpose.xlu0.b32.cont [5/16] 0.0, 128
          %767 = vxpose.xlu0.b32.cont [6/16] 0.0, 128
          %768 = vxpose.xlu0.b32.cont [7/16] 0.0, 128
          %769 = vxpose.xlu0.b32.cont [8/16] 0.0, 128
          %770 = vxpose.xlu0.b32.cont [9/16] 0.0, 128
          %771 = vxpose.xlu0.b32.cont [10/16] 0.0, 128
          %772 = vxpose.xlu0.b32.cont [11/16] 0.0, 128
          %773 = vxpose.xlu0.b32.cont [12/16] 0.0, 128
          %774 = vxpose.xlu0.b32.cont [13/16] 0.0, 128
          %775 = vxpose.xlu0.b32.cont [14/16] 0.0, 128
          %776 = vxpose.xlu0.b32.cont [15/16] 0.0, 128
          %777 = vxpose.xlu0.b32.end [16/16] 0.0, 128
          %v778 = vpop.trf.xlu0
          %v779 = vpop.trf.xlu0
          %v780 = vpop.trf.xlu0
          %v781 = vpop.trf.xlu0
          %v782 = vpop.trf.xlu0
          %v783 = vpop.trf.xlu0
          %v784 = vpop.trf.xlu0
          %v785 = vpop.trf.xlu0
          %v786 = vpop.trf.xlu0
          %v787 = vpop.trf.xlu0
          %v788 = vpop.trf.xlu0
          %v789 = vpop.trf.xlu0
          %v790 = vpop.trf.xlu0
          %v791 = vpop.trf.xlu0
          %v792 = vpop.trf.xlu0
          %v793 = vpop.trf.xlu0
          %794 = vxpose.xlu0.b32.start [1/16] %v695, 128
          %795 = vxpose.xlu0.b32.cont [2/16] 0.0, 128
          %796 = vxpose.xlu0.b32.cont [3/16] 0.0, 128
          %797 = vxpose.xlu0.b32.cont [4/16] 0.0, 128
          %798 = vxpose.xlu0.b32.cont [5/16] 0.0, 128
          %799 = vxpose.xlu0.b32.cont [6/16] 0.0, 128
          %800 = vxpose.xlu0.b32.cont [7/16] 0.0, 128
          %801 = vxpose.xlu0.b32.cont [8/16] 0.0, 128
          %802 = vxpose.xlu0.b32.cont [9/16] 0.0, 128
          %803 = vxpose.xlu0.b32.cont [10/16] 0.0, 128
          %804 = vxpose.xlu0.b32.cont [11/16] 0.0, 128
          %805 = vxpose.xlu0.b32.cont [12/16] 0.0, 128
          %806 = vxpose.xlu0.b32.cont [13/16] 0.0, 128
          %807 = vxpose.xlu0.b32.cont [14/16] 0.0, 128
          %808 = vxpose.xlu0.b32.cont [15/16] 0.0, 128
          %809 = vxpose.xlu0.b32.end [16/16] 0.0, 128
          %v810 = vpop.trf.xlu0
          %v811 = vpop.trf.xlu0
          %v812 = vpop.trf.xlu0
          %v813 = vpop.trf.xlu0
          %v814 = vpop.trf.xlu0
          %v815 = vpop.trf.xlu0
          %v816 = vpop.trf.xlu0
          %v817 = vpop.trf.xlu0
          %v818 = vpop.trf.xlu0
          %v819 = vpop.trf.xlu0
          %v820 = vpop.trf.xlu0
          %v821 = vpop.trf.xlu0
          %v822 = vpop.trf.xlu0
          %v823 = vpop.trf.xlu0
          %v824 = vpop.trf.xlu0
          %v825 = vpop.trf.xlu0
          %s826 = scalar_lea.vmem %s3, 4
          %v827 = vld [vmem:[%s826] sm:$0x1]
          %v828 = vld [vmem:[%s826 + $0x1] sm:$0x1]
          %v829 = vld [vmem:[%s826 + $0x2] sm:$0x1]
          %v830 = vld [vmem:[%s826 + $0x3] sm:$0x1]
          %v835 = vlaneseq
          %v836 = vshrl.u32 %v835, 7
          %v837 = vsub.s32 0, %v836
          %v838 = vrot.slane %v827, %v837
          %v839 = vlaneseq
          %v840 = vshrl.u32 %v839, 7
          %v841 = vsub.s32 0, %v840
          %v842 = vrot.slane %v828, %v841
          %v843 = vlaneseq
          %v844 = vshrl.u32 %v843, 7
          %v845 = vsub.s32 0, %v844
          %v846 = vrot.slane %v829, %v845
          %v847 = vlaneseq
          %v848 = vshrl.u32 %v847, 7
          %v849 = vsub.s32 0, %v848
          %v850 = vrot.slane %v830, %v849
          %v855 = vadd.f32 %v714, %v838
          %v856 = vadd.f32 %v715, %v838
          %v857 = vadd.f32 %v746, %v842
          %v858 = vadd.f32 %v747, %v842
          %v859 = vadd.f32 %v778, %v846
          %v860 = vadd.f32 %v779, %v846
          %v861 = vadd.f32 %v810, %v850
          %v862 = vadd.f32 %v811, %v850
          %s863 = scalar_lea.vmem %s2, 256
          %v864 = vld [vmem:[%s863] sm:$0xff]
          %v865 = vld [vmem:[%s863 + $0x8] sm:$0xff]
          %v866 = vld [vmem:[%s863 + $0x10] sm:$0xff]
          %v867 = vld [vmem:[%s863 + $0x18] sm:$0xff]
          %v868 = vld [vmem:[%s863 + $0x20] sm:$0xff]
          %v869 = vld [vmem:[%s863 + $0x28] sm:$0xff]
          %v870 = vld [vmem:[%s863 + $0x30] sm:$0xff]
          %v871 = vld [vmem:[%s863 + $0x38] sm:$0xff]
          %v872 = vld [vmem:[%s863 + $0x40] sm:$0xff]
          %v873 = vld [vmem:[%s863 + $0x48] sm:$0xff]
          %v874 = vld [vmem:[%s863 + $0x50] sm:$0xff]
          %v875 = vld [vmem:[%s863 + $0x58] sm:$0xff]
          %v876 = vld [vmem:[%s863 + $0x60] sm:$0xff]
          %v877 = vld [vmem:[%s863 + $0x68] sm:$0xff]
          %v878 = vld [vmem:[%s863 + $0x70] sm:$0xff]
          %v879 = vld [vmem:[%s863 + $0x78] sm:$0xff]
          %880 = vxpose.xlu0.b32.start [1/16] %v864, 128
          %881 = vxpose.xlu0.b32.cont [2/16] %v865, 128
          %882 = vxpose.xlu0.b32.cont [3/16] %v866, 128
          %883 = vxpose.xlu0.b32.cont [4/16] %v867, 128
          %884 = vxpose.xlu0.b32.cont [5/16] 0.0, 128
          %885 = vxpose.xlu0.b32.cont [6/16] 0.0, 128
          %886 = vxpose.xlu0.b32.cont [7/16] 0.0, 128
          %887 = vxpose.xlu0.b32.cont [8/16] 0.0, 128
          %888 = vxpose.xlu0.b32.cont [9/16] 0.0, 128
          %889 = vxpose.xlu0.b32.cont [10/16] 0.0, 128
          %890 = vxpose.xlu0.b32.cont [11/16] 0.0, 128
          %891 = vxpose.xlu0.b32.cont [12/16] 0.0, 128
          %892 = vxpose.xlu0.b32.cont [13/16] 0.0, 128
          %893 = vxpose.xlu0.b32.cont [14/16] 0.0, 128
          %894 = vxpose.xlu0.b32.cont [15/16] 0.0, 128
          %895 = vxpose.xlu0.b32.end [16/16] 0.0, 128
          %v896 = vpop.trf.xlu0
          %v897 = vpop.trf.xlu0
          %v898 = vpop.trf.xlu0
          %v899 = vpop.trf.xlu0
          %v900 = vpop.trf.xlu0
          %v901 = vpop.trf.xlu0
          %v902 = vpop.trf.xlu0
          %v903 = vpop.trf.xlu0
          %v904 = vpop.trf.xlu0
          %v905 = vpop.trf.xlu0
          %v906 = vpop.trf.xlu0
          %v907 = vpop.trf.xlu0
          %v908 = vpop.trf.xlu0
          %v909 = vpop.trf.xlu0
          %v910 = vpop.trf.xlu0
          %v911 = vpop.trf.xlu0
          %912 = vxpose.xlu0.b32.start [1/16] %v868, 128
          %913 = vxpose.xlu0.b32.cont [2/16] %v869, 128
          %914 = vxpose.xlu0.b32.cont [3/16] %v870, 128
          %915 = vxpose.xlu0.b32.cont [4/16] %v871, 128
          %916 = vxpose.xlu0.b32.cont [5/16] 0.0, 128
          %917 = vxpose.xlu0.b32.cont [6/16] 0.0, 128
          %918 = vxpose.xlu0.b32.cont [7/16] 0.0, 128
          %919 = vxpose.xlu0.b32.cont [8/16] 0.0, 128
          %920 = vxpose.xlu0.b32.cont [9/16] 0.0, 128
          %921 = vxpose.xlu0.b32.cont [10/16] 0.0, 128
          %922 = vxpose.xlu0.b32.cont [11/16] 0.0, 128
          %923 = vxpose.xlu0.b32.cont [12/16] 0.0, 128
          %924 = vxpose.xlu0.b32.cont [13/16] 0.0, 128
          %925 = vxpose.xlu0.b32.cont [14/16] 0.0, 128
          %926 = vxpose.xlu0.b32.cont [15/16] 0.0, 128
          %927 = vxpose.xlu0.b32.end [16/16] 0.0, 128
          %v928 = vpop.trf.xlu0
          %v929 = vpop.trf.xlu0
          %v930 = vpop.trf.xlu0
          %v931 = vpop.trf.xlu0
          %v932 = vpop.trf.xlu0
          %v933 = vpop.trf.xlu0
          %v934 = vpop.trf.xlu0
          %v935 = vpop.trf.xlu0
          %v936 = vpop.trf.xlu0
          %v937 = vpop.trf.xlu0
          %v938 = vpop.trf.xlu0
          %v939 = vpop.trf.xlu0
          %v940 = vpop.trf.xlu0
          %v941 = vpop.trf.xlu0
          %v942 = vpop.trf.xlu0
          %v943 = vpop.trf.xlu0
          %944 = vxpose.xlu0.b32.start [1/16] %v872, 128
          %945 = vxpose.xlu0.b32.cont [2/16] %v873, 128
          %946 = vxpose.xlu0.b32.cont [3/16] %v874, 128
          %947 = vxpose.xlu0.b32.cont [4/16] %v875, 128
          %948 = vxpose.xlu0.b32.cont [5/16] 0.0, 128
          %949 = vxpose.xlu0.b32.cont [6/16] 0.0, 128
          %950 = vxpose.xlu0.b32.cont [7/16] 0.0, 128
          %951 = vxpose.xlu0.b32.cont [8/16] 0.0, 128
          %952 = vxpose.xlu0.b32.cont [9/16] 0.0, 128
          %953 = vxpose.xlu0.b32.cont [10/16] 0.0, 128
          %954 = vxpose.xlu0.b32.cont [11/16] 0.0, 128
          %955 = vxpose.xlu0.b32.cont [12/16] 0.0, 128
          %956 = vxpose.xlu0.b32.cont [13/16] 0.0, 128
          %957 = vxpose.xlu0.b32.cont [14/16] 0.0, 128
          %958 = vxpose.xlu0.b32.cont [15/16] 0.0, 128
          %959 = vxpose.xlu0.b32.end [16/16] 0.0, 128
          %v960 = vpop.trf.xlu0
          %v961 = vpop.trf.xlu0
          %v962 = vpop.trf.xlu0
          %v963 = vpop.trf.xlu0
          %v964 = vpop.trf.xlu0
          %v965 = vpop.trf.xlu0
          %v966 = vpop.trf.xlu0
          %v967 = vpop.trf.xlu0
          %v968 = vpop.trf.xlu0
          %v969 = vpop.trf.xlu0
          %v970 = vpop.trf.xlu0
          %v971 = vpop.trf.xlu0
          %v972 = vpop.trf.xlu0
          %v973 = vpop.trf.xlu0
          %v974 = vpop.trf.xlu0
          %v975 = vpop.trf.xlu0
          %976 = vxpose.xlu0.b32.start [1/16] %v876, 128
          %977 = vxpose.xlu0.b32.cont [2/16] %v877, 128
          %978 = vxpose.xlu0.b32.cont [3/16] %v878, 128
          %979 = vxpose.xlu0.b32.cont [4/16] %v879, 128
          %980 = vxpose.xlu0.b32.cont [5/16] 0.0, 128
          %981 = vxpose.xlu0.b32.cont [6/16] 0.0, 128
          %982 = vxpose.xlu0.b32.cont [7/16] 0.0, 128
          %983 = vxpose.xlu0.b32.cont [8/16] 0.0, 128
          %984 = vxpose.xlu0.b32.cont [9/16] 0.0, 128
          %985 = vxpose.xlu0.b32.cont [10/16] 0.0, 128
          %986 = vxpose.xlu0.b32.cont [11/16] 0.0, 128
          %987 = vxpose.xlu0.b32.cont [12/16] 0.0, 128
          %988 = vxpose.xlu0.b32.cont [13/16] 0.0, 128
          %989 = vxpose.xlu0.b32.cont [14/16] 0.0, 128
          %990 = vxpose.xlu0.b32.cont [15/16] 0.0, 128
          %991 = vxpose.xlu0.b32.end [16/16] 0.0, 128
          %v992 = vpop.trf.xlu0
          %v993 = vpop.trf.xlu0
          %v994 = vpop.trf.xlu0
          %v995 = vpop.trf.xlu0
          %v996 = vpop.trf.xlu0
          %v997 = vpop.trf.xlu0
          %v998 = vpop.trf.xlu0
          %v999 = vpop.trf.xlu0
          %v1000 = vpop.trf.xlu0
          %v1001 = vpop.trf.xlu0
          %v1002 = vpop.trf.xlu0
          %v1003 = vpop.trf.xlu0
          %v1004 = vpop.trf.xlu0
          %v1005 = vpop.trf.xlu0
          %v1006 = vpop.trf.xlu0
          %v1007 = vpop.trf.xlu0
          %v1009 = vsel %vm594, %v896, 0
          %v1012 = vsel %vm594, %v928, 0
          %v1015 = vsel %vm594, %v960, 0
          %v1018 = vsel %vm594, %v992, 0
          %1020 = vmatprep.subr.mxu0 0.0
          %1021 = vmatpush1.xpose.msra.mxu0 0.0
          %1022 = vmatprep.subr.mxu0 0.0
          %1023 = vmatpush1.xpose.msra.mxu0 0.0
          %1024 = vmatprep.subr.mxu0 0.0
          %1025 = vmatpush1.xpose.msra.mxu0 0.0
          %1026 = vmatprep.subr.mxu0 0.0
          %1027 = vmatpush1.xpose.msra.mxu0 0.0
          %1028 = vmatprep.subr.mxu0 0.0
          %1029 = vmatpush1.xpose.msra.mxu0 0.0
          %1030 = vmatprep.subr.mxu0 0.0
          %1031 = vmatpush1.xpose.msra.mxu0 0.0
          %1032 = vmatprep.subr.mxu0 0.0
          %1033 = vmatpush1.xpose.msra.mxu0 0.0
          %1034 = vmatprep.subr.mxu0 0.0
          %1035 = vmatpush1.xpose.msra.mxu0 0.0
          %1036 = vmatprep.subr.mxu0 0.0
          %1037 = vmatpush1.xpose.msra.mxu0 0.0
          %1038 = vmatprep.subr.mxu0 0.0
          %1039 = vmatpush1.xpose.msra.mxu0 0.0
          %1040 = vmatprep.subr.mxu0 0.0
          %1041 = vmatpush1.xpose.msra.mxu0 0.0
          %1042 = vmatprep.subr.mxu0 0.0
          %1043 = vmatpush1.xpose.msra.mxu0 0.0
          %1044 = vmatprep.subr.mxu0 0.0
          %1045 = vmatpush1.xpose.msra.mxu0 0.0
          %1046 = vmatprep.subr.mxu0 0.0
          %1047 = vmatpush1.xpose.msra.mxu0 0.0
          %1048 = vmatprep.subr.mxu0 0.0
          %1049 = vmatpush1.xpose.msra.mxu0 %v611
          %1050 = vmatprep.subr.mxu0 0.0
          %1051 = vmatpush1.xpose.msra.mxu0 %v608
          %1052 = vmatprep.subr.mxu0 0.0
          %1053 = vmatpush2.xpose.msra.mxu0 0.0
          %1054 = vmatprep.subr.mxu0 0.0
          %1055 = vmatpush2.xpose.msra.mxu0 0.0
          %1056 = vmatprep.subr.mxu0 0.0
          %1057 = vmatpush2.xpose.msra.mxu0 0.0
          %1058 = vmatprep.subr.mxu0 0.0
          %1059 = vmatpush2.xpose.msra.mxu0 0.0
          %1060 = vmatprep.subr.mxu0 0.0
          %1061 = vmatpush2.xpose.msra.mxu0 0.0
          %1062 = vmatprep.subr.mxu0 0.0
          %1063 = vmatpush2.xpose.msra.mxu0 0.0
          %1064 = vmatprep.subr.mxu0 0.0
          %1065 = vmatpush2.xpose.msra.mxu0 0.0
          %1066 = vmatprep.subr.mxu0 0.0
          %1067 = vmatpush2.xpose.msra.mxu0 0.0
          %1068 = vmatprep.subr.mxu0 0.0
          %1069 = vmatpush2.xpose.msra.mxu0 0.0
          %1070 = vmatprep.subr.mxu0 0.0
          %1071 = vmatpush2.xpose.msra.mxu0 0.0
          %1072 = vmatprep.subr.mxu0 0.0
          %1073 = vmatpush2.xpose.msra.mxu0 0.0
          %1074 = vmatprep.subr.mxu0 0.0
          %1075 = vmatpush2.xpose.msra.mxu0 0.0
          %1076 = vmatprep.subr.mxu0 0.0
          %1077 = vmatpush2.xpose.msra.mxu0 0.0
          %1078 = vmatprep.subr.mxu0 0.0
          %1079 = vmatpush2.xpose.msra.mxu0 0.0
          %1080 = vmatprep.subr.mxu0 0.0
          %1081 = vmatpush2.xpose.msra.mxu0 0.0
          %1082 = vmatprep.subr.mxu0 0.0
          %1083 = vmatpush2.xpose.msra.mxu0 0.0
          %1084 = vmatprep.mubr.f32.mxu0 0.0
          %1085 = vmatmul.mubr.f32.gmra.mxu0 %v1009
          %v1086 = vpop.f32.mrf.mxu0
          %v1087 = vadd.f32 0.0, %v1086
          %v1088 = vpop.f32.mrf.mxu0
          %1089 = vmatprep.mubr.f32.mxu0 0.0
          %1090 = vmatmul.mubr.f32.gmra.mxu0 %v1012
          %v1091 = vpop.f32.mrf.mxu0
          %v1092 = vadd.f32 0.0, %v1091
          %v1093 = vpop.f32.mrf.mxu0
          %1094 = vmatprep.mubr.f32.mxu0 0.0
          %1095 = vmatmul.mubr.f32.gmra.mxu0 %v1015
          %v1096 = vpop.f32.mrf.mxu0
          %v1097 = vadd.f32 0.0, %v1096
          %v1098 = vpop.f32.mrf.mxu0
          %1099 = vmatprep.mubr.f32.mxu0 0.0
          %1100 = vmatmul.mubr.f32.gmra.mxu0 %v1018
          %v1101 = vpop.f32.mrf.mxu0
          %v1102 = vadd.f32 0.0, %v1101
          %v1103 = vpop.f32.mrf.mxu0
          %1104 = vdwg.mxu0
          %1105 = vxpose.xlu0.b32.start [1/16] %v1087, 128
          %1106 = vxpose.xlu0.b32.cont [2/16] 0.0, 128
          %1107 = vxpose.xlu0.b32.cont [3/16] 0.0, 128
          %1108 = vxpose.xlu0.b32.cont [4/16] 0.0, 128
          %1109 = vxpose.xlu0.b32.cont [5/16] 0.0, 128
          %1110 = vxpose.xlu0.b32.cont [6/16] 0.0, 128
          %1111 = vxpose.xlu0.b32.cont [7/16] 0.0, 128
          %1112 = vxpose.xlu0.b32.cont [8/16] 0.0, 128
          %1113 = vxpose.xlu0.b32.cont [9/16] 0.0, 128
          %1114 = vxpose.xlu0.b32.cont [10/16] 0.0, 128
          %1115 = vxpose.xlu0.b32.cont [11/16] 0.0, 128
          %1116 = vxpose.xlu0.b32.cont [12/16] 0.0, 128
          %1117 = vxpose.xlu0.b32.cont [13/16] 0.0, 128
          %1118 = vxpose.xlu0.b32.cont [14/16] 0.0, 128
          %1119 = vxpose.xlu0.b32.cont [15/16] 0.0, 128
          %1120 = vxpose.xlu0.b32.end [16/16] 0.0, 128
          %v1121 = vpop.trf.xlu0
          %v1122 = vpop.trf.xlu0
          %v1123 = vpop.trf.xlu0
          %v1124 = vpop.trf.xlu0
          %v1125 = vpop.trf.xlu0
          %v1126 = vpop.trf.xlu0
          %v1127 = vpop.trf.xlu0
          %v1128 = vpop.trf.xlu0
          %v1129 = vpop.trf.xlu0
          %v1130 = vpop.trf.xlu0
          %v1131 = vpop.trf.xlu0
          %v1132 = vpop.trf.xlu0
          %v1133 = vpop.trf.xlu0
          %v1134 = vpop.trf.xlu0
          %v1135 = vpop.trf.xlu0
          %v1136 = vpop.trf.xlu0
          %1137 = vxpose.xlu0.b32.start [1/16] %v1092, 128
          %1138 = vxpose.xlu0.b32.cont [2/16] 0.0, 128
          %1139 = vxpose.xlu0.b32.cont [3/16] 0.0, 128
          %1140 = vxpose.xlu0.b32.cont [4/16] 0.0, 128
          %1141 = vxpose.xlu0.b32.cont [5/16] 0.0, 128
          %1142 = vxpose.xlu0.b32.cont [6/16] 0.0, 128
          %1143 = vxpose.xlu0.b32.cont [7/16] 0.0, 128
          %1144 = vxpose.xlu0.b32.cont [8/16] 0.0, 128
          %1145 = vxpose.xlu0.b32.cont [9/16] 0.0, 128
          %1146 = vxpose.xlu0.b32.cont [10/16] 0.0, 128
          %1147 = vxpose.xlu0.b32.cont [11/16] 0.0, 128
          %1148 = vxpose.xlu0.b32.cont [12/16] 0.0, 128
          %1149 = vxpose.xlu0.b32.cont [13/16] 0.0, 128
          %1150 = vxpose.xlu0.b32.cont [14/16] 0.0, 128
          %1151 = vxpose.xlu0.b32.cont [15/16] 0.0, 128
          %1152 = vxpose.xlu0.b32.end [16/16] 0.0, 128
          %v1153 = vpop.trf.xlu0
          %v1154 = vpop.trf.xlu0
          %v1155 = vpop.trf.xlu0
          %v1156 = vpop.trf.xlu0
          %v1157 = vpop.trf.xlu0
          %v1158 = vpop.trf.xlu0
          %v1159 = vpop.trf.xlu0
          %v1160 = vpop.trf.xlu0
          %v1161 = vpop.trf.xlu0
          %v1162 = vpop.trf.xlu0
          %v1163 = vpop.trf.xlu0
          %v1164 = vpop.trf.xlu0
          %v1165 = vpop.trf.xlu0
          %v1166 = vpop.trf.xlu0
          %v1167 = vpop.trf.xlu0
          %v1168 = vpop.trf.xlu0
          %1169 = vxpose.xlu0.b32.start [1/16] %v1097, 128
          %1170 = vxpose.xlu0.b32.cont [2/16] 0.0, 128
          %1171 = vxpose.xlu0.b32.cont [3/16] 0.0, 128
          %1172 = vxpose.xlu0.b32.cont [4/16] 0.0, 128
          %1173 = vxpose.xlu0.b32.cont [5/16] 0.0, 128
          %1174 = vxpose.xlu0.b32.cont [6/16] 0.0, 128
          %1175 = vxpose.xlu0.b32.cont [7/16] 0.0, 128
          %1176 = vxpose.xlu0.b32.cont [8/16] 0.0, 128
          %1177 = vxpose.xlu0.b32.cont [9/16] 0.0, 128
          %1178 = vxpose.xlu0.b32.cont [10/16] 0.0, 128
          %1179 = vxpose.xlu0.b32.cont [11/16] 0.0, 128
          %1180 = vxpose.xlu0.b32.cont [12/16] 0.0, 128
          %1181 = vxpose.xlu0.b32.cont [13/16] 0.0, 128
          %1182 = vxpose.xlu0.b32.cont [14/16] 0.0, 128
          %1183 = vxpose.xlu0.b32.cont [15/16] 0.0, 128
          %1184 = vxpose.xlu0.b32.end [16/16] 0.0, 128
          %v1185 = vpop.trf.xlu0
          %v1186 = vpop.trf.xlu0
          %v1187 = vpop.trf.xlu0
          %v1188 = vpop.trf.xlu0
          %v1189 = vpop.trf.xlu0
          %v1190 = vpop.trf.xlu0
          %v1191 = vpop.trf.xlu0
          %v1192 = vpop.trf.xlu0
          %v1193 = vpop.trf.xlu0
          %v1194 = vpop.trf.xlu0
          %v1195 = vpop.trf.xlu0
          %v1196 = vpop.trf.xlu0
          %v1197 = vpop.trf.xlu0
          %v1198 = vpop.trf.xlu0
          %v1199 = vpop.trf.xlu0
          %v1200 = vpop.trf.xlu0
          %1201 = vxpose.xlu0.b32.start [1/16] %v1102, 128
          %1202 = vxpose.xlu0.b32.cont [2/16] 0.0, 128
          %1203 = vxpose.xlu0.b32.cont [3/16] 0.0, 128
          %1204 = vxpose.xlu0.b32.cont [4/16] 0.0, 128
          %1205 = vxpose.xlu0.b32.cont [5/16] 0.0, 128
          %1206 = vxpose.xlu0.b32.cont [6/16] 0.0, 128
          %1207 = vxpose.xlu0.b32.cont [7/16] 0.0, 128
          %1208 = vxpose.xlu0.b32.cont [8/16] 0.0, 128
          %1209 = vxpose.xlu0.b32.cont [9/16] 0.0, 128
          %1210 = vxpose.xlu0.b32.cont [10/16] 0.0, 128
          %1211 = vxpose.xlu0.b32.cont [11/16] 0.0, 128
          %1212 = vxpose.xlu0.b32.cont [12/16] 0.0, 128
          %1213 = vxpose.xlu0.b32.cont [13/16] 0.0, 128
          %1214 = vxpose.xlu0.b32.cont [14/16] 0.0, 128
          %1215 = vxpose.xlu0.b32.cont [15/16] 0.0, 128
          %1216 = vxpose.xlu0.b32.end [16/16] 0.0, 128
          %v1217 = vpop.trf.xlu0
          %v1218 = vpop.trf.xlu0
          %v1219 = vpop.trf.xlu0
          %v1220 = vpop.trf.xlu0
          %v1221 = vpop.trf.xlu0
          %v1222 = vpop.trf.xlu0
          %v1223 = vpop.trf.xlu0
          %v1224 = vpop.trf.xlu0
          %v1225 = vpop.trf.xlu0
          %v1226 = vpop.trf.xlu0
          %v1227 = vpop.trf.xlu0
          %v1228 = vpop.trf.xlu0
          %v1229 = vpop.trf.xlu0
          %v1230 = vpop.trf.xlu0
          %v1231 = vpop.trf.xlu0
          %v1232 = vpop.trf.xlu0
          %s1233 = scalar_lea.vmem %s3, 8
          %v1234 = vld [vmem:[%s1233] sm:$0x1]
          %v1235 = vld [vmem:[%s1233 + $0x1] sm:$0x1]
          %v1236 = vld [vmem:[%s1233 + $0x2] sm:$0x1]
          %v1237 = vld [vmem:[%s1233 + $0x3] sm:$0x1]
          %v1242 = vlaneseq
          %v1243 = vshrl.u32 %v1242, 7
          %v1244 = vsub.s32 0, %v1243
          %v1245 = vrot.slane %v1234, %v1244
          %v1246 = vlaneseq
          %v1247 = vshrl.u32 %v1246, 7
          %v1248 = vsub.s32 0, %v1247
          %v1249 = vrot.slane %v1235, %v1248
          %v1250 = vlaneseq
          %v1251 = vshrl.u32 %v1250, 7
          %v1252 = vsub.s32 0, %v1251
          %v1253 = vrot.slane %v1236, %v1252
          %v1254 = vlaneseq
          %v1255 = vshrl.u32 %v1254, 7
          %v1256 = vsub.s32 0, %v1255
          %v1257 = vrot.slane %v1237, %v1256
          %v1262 = vadd.f32 %v1121, %v1245
          %v1263 = vadd.f32 %v1122, %v1245
          %v1264 = vadd.f32 %v1153, %v1249
          %v1265 = vadd.f32 %v1154, %v1249
          %v1266 = vadd.f32 %v1185, %v1253
          %v1267 = vadd.f32 %v1186, %v1253
          %v1268 = vadd.f32 %v1217, %v1257
          %v1269 = vadd.f32 %v1218, %v1257
          %vm1270 = vcmask 64512
          %1271 = vst.msk [vmem:[#allocation2] sm:$0xff] %vm1270, %v855
          %1272 = vst.msk [vmem:[#allocation2 + $0x8] sm:$0xff] %vm1270, %v856
          %1273 = vst.msk [vmem:[#allocation2 + $0x10] sm:$0xff] %vm1270, %v857
          %1274 = vst.msk [vmem:[#allocation2 + $0x18] sm:$0xff] %vm1270, %v858
          %1275 = vst.msk [vmem:[#allocation2 + $0x20] sm:$0xff] %vm1270, %v859
          %1276 = vst.msk [vmem:[#allocation2 + $0x28] sm:$0xff] %vm1270, %v860
          %1277 = vst.msk [vmem:[#allocation2 + $0x30] sm:$0xff] %vm1270, %v861
          %1278 = vst.msk [vmem:[#allocation2 + $0x38] sm:$0xff] %vm1270, %v862
          %1279 = vst.msk [vmem:[#allocation3] sm:$0xff] %vm1270, %v1262
          %1280 = vst.msk [vmem:[#allocation3 + $0x8] sm:$0xff] %vm1270, %v1263
          %1281 = vst.msk [vmem:[#allocation3 + $0x10] sm:$0xff] %vm1270, %v1264
          %1282 = vst.msk [vmem:[#allocation3 + $0x18] sm:$0xff] %vm1270, %v1265
          %1283 = vst.msk [vmem:[#allocation3 + $0x20] sm:$0xff] %vm1270, %v1266
          %1284 = vst.msk [vmem:[#allocation3 + $0x28] sm:$0xff] %vm1270, %v1267
          %1285 = vst.msk [vmem:[#allocation3 + $0x30] sm:$0xff] %vm1270, %v1268
          %1286 = vst.msk [vmem:[#allocation3 + $0x38] sm:$0xff] %vm1270, %v1269
        $region98: #{tpu_custom_call.1} parent=89 // pred_fallthru
          _
        %v1287 = vld [vmem:[%s437] sm:$0xff]
        %v1288 = vld [vmem:[%s2] sm:$0xff]
        %v1289 = vld [vmem:[%s2 + $0x8] sm:$0xff]
        %v1290 = vld [vmem:[%s2 + $0x10] sm:$0xff]
        %v1291 = vld [vmem:[%s2 + $0x18] sm:$0xff]
        %v1292 = vld [vmem:[%s2 + $0x20] sm:$0xff]
        %v1293 = vld [vmem:[%s2 + $0x28] sm:$0xff]
        %v1294 = vld [vmem:[%s2 + $0x30] sm:$0xff]
        %v1295 = vld [vmem:[%s2 + $0x38] sm:$0xff]
        %v1296 = vld [vmem:[%s2 + $0x40] sm:$0xff]
        %v1297 = vld [vmem:[%s2 + $0x48] sm:$0xff]
        %v1298 = vld [vmem:[%s2 + $0x50] sm:$0xff]
        %v1299 = vld [vmem:[%s2 + $0x58] sm:$0xff]
        %v1300 = vld [vmem:[%s2 + $0x60] sm:$0xff]
        %v1301 = vld [vmem:[%s2 + $0x68] sm:$0xff]
        %v1302 = vld [vmem:[%s2 + $0x70] sm:$0xff]
        %v1303 = vld [vmem:[%s2 + $0x78] sm:$0xff]
        %1304 = vxpose.xlu0.b32.start [1/16] %v1288, 128
        %1305 = vxpose.xlu0.b32.cont [2/16] %v1289, 128
        %1306 = vxpose.xlu0.b32.cont [3/16] %v1290, 128
        %1307 = vxpose.xlu0.b32.cont [4/16] %v1291, 128
        %1308 = vxpose.xlu0.b32.cont [5/16] 0.0, 128
        %1309 = vxpose.xlu0.b32.cont [6/16] 0.0, 128
        %1310 = vxpose.xlu0.b32.cont [7/16] 0.0, 128
        %1311 = vxpose.xlu0.b32.cont [8/16] 0.0, 128
        %1312 = vxpose.xlu0.b32.cont [9/16] 0.0, 128
        %1313 = vxpose.xlu0.b32.cont [10/16] 0.0, 128
        %1314 = vxpose.xlu0.b32.cont [11/16] 0.0, 128
        %1315 = vxpose.xlu0.b32.cont [12/16] 0.0, 128
        %1316 = vxpose.xlu0.b32.cont [13/16] 0.0, 128
        %1317 = vxpose.xlu0.b32.cont [14/16] 0.0, 128
        %1318 = vxpose.xlu0.b32.cont [15/16] 0.0, 128
        %1319 = vxpose.xlu0.b32.end [16/16] 0.0, 128
        %v1320 = vpop.trf.xlu0
        %v1321 = vpop.trf.xlu0
        %v1322 = vpop.trf.xlu0
        %v1323 = vpop.trf.xlu0
        %v1324 = vpop.trf.xlu0
        %v1325 = vpop.trf.xlu0
        %v1326 = vpop.trf.xlu0
        %v1327 = vpop.trf.xlu0
        %v1328 = vpop.trf.xlu0
        %v1329 = vpop.trf.xlu0
        %v1330 = vpop.trf.xlu0
        %v1331 = vpop.trf.xlu0
        %v1332 = vpop.trf.xlu0
        %v1333 = vpop.trf.xlu0
        %v1334 = vpop.trf.xlu0
        %v1335 = vpop.trf.xlu0
        %1336 = vxpose.xlu0.b32.start [1/16] %v1292, 128
        %1337 = vxpose.xlu0.b32.cont [2/16] %v1293, 128
        %1338 = vxpose.xlu0.b32.cont [3/16] %v1294, 128
        %1339 = vxpose.xlu0.b32.cont [4/16] %v1295, 128
        %1340 = vxpose.xlu0.b32.cont [5/16] 0.0, 128
        %1341 = vxpose.xlu0.b32.cont [6/16] 0.0, 128
        %1342 = vxpose.xlu0.b32.cont [7/16] 0.0, 128
        %1343 = vxpose.xlu0.b32.cont [8/16] 0.0, 128
        %1344 = vxpose.xlu0.b32.cont [9/16] 0.0, 128
        %1345 = vxpose.xlu0.b32.cont [10/16] 0.0, 128
        %1346 = vxpose.xlu0.b32.cont [11/16] 0.0, 128
        %1347 = vxpose.xlu0.b32.cont [12/16] 0.0, 128
        %1348 = vxpose.xlu0.b32.cont [13/16] 0.0, 128
        %1349 = vxpose.xlu0.b32.cont [14/16] 0.0, 128
        %1350 = vxpose.xlu0.b32.cont [15/16] 0.0, 128
        %1351 = vxpose.xlu0.b32.end [16/16] 0.0, 128
        %v1352 = vpop.trf.xlu0
        %v1353 = vpop.trf.xlu0
        %v1354 = vpop.trf.xlu0
        %v1355 = vpop.trf.xlu0
        %v1356 = vpop.trf.xlu0
        %v1357 = vpop.trf.xlu0
        %v1358 = vpop.trf.xlu0
        %v1359 = vpop.trf.xlu0
        %v1360 = vpop.trf.xlu0
        %v1361 = vpop.trf.xlu0
        %v1362 = vpop.trf.xlu0
        %v1363 = vpop.trf.xlu0
        %v1364 = vpop.trf.xlu0
        %v1365 = vpop.trf.xlu0
        %v1366 = vpop.trf.xlu0
        %v1367 = vpop.trf.xlu0
        %1368 = vxpose.xlu0.b32.start [1/16] %v1296, 128
        %1369 = vxpose.xlu0.b32.cont [2/16] %v1297, 128
        %1370 = vxpose.xlu0.b32.cont [3/16] %v1298, 128
        %1371 = vxpose.xlu0.b32.cont [4/16] %v1299, 128
        %1372 = vxpose.xlu0.b32.cont [5/16] 0.0, 128
        %1373 = vxpose.xlu0.b32.cont [6/16] 0.0, 128
        %1374 = vxpose.xlu0.b32.cont [7/16] 0.0, 128
        %1375 = vxpose.xlu0.b32.cont [8/16] 0.0, 128
        %1376 = vxpose.xlu0.b32.cont [9/16] 0.0, 128
        %1377 = vxpose.xlu0.b32.cont [10/16] 0.0, 128
        %1378 = vxpose.xlu0.b32.cont [11/16] 0.0, 128
        %1379 = vxpose.xlu0.b32.cont [12/16] 0.0, 128
        %1380 = vxpose.xlu0.b32.cont [13/16] 0.0, 128
        %1381 = vxpose.xlu0.b32.cont [14/16] 0.0, 128
        %1382 = vxpose.xlu0.b32.cont [15/16] 0.0, 128
        %1383 = vxpose.xlu0.b32.end [16/16] 0.0, 128
        %v1384 = vpop.trf.xlu0
        %v1385 = vpop.trf.xlu0
        %v1386 = vpop.trf.xlu0
        %v1387 = vpop.trf.xlu0
        %v1388 = vpop.trf.xlu0
        %v1389 = vpop.trf.xlu0
        %v1390 = vpop.trf.xlu0
        %v1391 = vpop.trf.xlu0
        %v1392 = vpop.trf.xlu0
        %v1393 = vpop.trf.xlu0
        %v1394 = vpop.trf.xlu0
        %v1395 = vpop.trf.xlu0
        %v1396 = vpop.trf.xlu0
        %v1397 = vpop.trf.xlu0
        %v1398 = vpop.trf.xlu0
        %v1399 = vpop.trf.xlu0
        %1400 = vxpose.xlu0.b32.start [1/16] %v1300, 128
        %1401 = vxpose.xlu0.b32.cont [2/16] %v1301, 128
        %1402 = vxpose.xlu0.b32.cont [3/16] %v1302, 128
        %1403 = vxpose.xlu0.b32.cont [4/16] %v1303, 128
        %1404 = vxpose.xlu0.b32.cont [5/16] 0.0, 128
        %1405 = vxpose.xlu0.b32.cont [6/16] 0.0, 128
        %1406 = vxpose.xlu0.b32.cont [7/16] 0.0, 128
        %1407 = vxpose.xlu0.b32.cont [8/16] 0.0, 128
        %1408 = vxpose.xlu0.b32.cont [9/16] 0.0, 128
        %1409 = vxpose.xlu0.b32.cont [10/16] 0.0, 128
        %1410 = vxpose.xlu0.b32.cont [11/16] 0.0, 128
        %1411 = vxpose.xlu0.b32.cont [12/16] 0.0, 128
        %1412 = vxpose.xlu0.b32.cont [13/16] 0.0, 128
        %1413 = vxpose.xlu0.b32.cont [14/16] 0.0, 128
        %1414 = vxpose.xlu0.b32.cont [15/16] 0.0, 128
        %1415 = vxpose.xlu0.b32.end [16/16] 0.0, 128
        %v1416 = vpop.trf.xlu0
        %v1417 = vpop.trf.xlu0
        %v1418 = vpop.trf.xlu0
        %v1419 = vpop.trf.xlu0
        %v1420 = vpop.trf.xlu0
        %v1421 = vpop.trf.xlu0
        %v1422 = vpop.trf.xlu0
        %v1423 = vpop.trf.xlu0
        %v1424 = vpop.trf.xlu0
        %v1425 = vpop.trf.xlu0
        %v1426 = vpop.trf.xlu0
        %v1427 = vpop.trf.xlu0
        %v1428 = vpop.trf.xlu0
        %v1429 = vpop.trf.xlu0
        %v1430 = vpop.trf.xlu0
        %v1431 = vpop.trf.xlu0
        %vm1432 = vcmask 261120
        %v1434 = vsel %vm1432, %v1320, 0
        %v1437 = vsel %vm1432, %v1352, 0
        %v1440 = vsel %vm1432, %v1384, 0
        %v1443 = vsel %vm1432, %v1416, 0
        %v1446 = vsel %vm1432, %v1287, 0
        %1448 = vmatprep.subr.mxu0 0.0
        %1449 = vmatpush1.xpose.msra.mxu0 0.0
        %1450 = vmatprep.subr.mxu0 0.0
        %1451 = vmatpush1.xpose.msra.mxu0 0.0
        %1452 = vmatprep.subr.mxu0 0.0
        %1453 = vmatpush1.xpose.msra.mxu0 0.0
        %1454 = vmatprep.subr.mxu0 0.0
        %1455 = vmatpush1.xpose.msra.mxu0 0.0
        %1456 = vmatprep.subr.mxu0 0.0
        %1457 = vmatpush1.xpose.msra.mxu0 0.0
        %1458 = vmatprep.subr.mxu0 0.0
        %1459 = vmatpush1.xpose.msra.mxu0 0.0
        %1460 = vmatprep.subr.mxu0 0.0
        %1461 = vmatpush1.xpose.msra.mxu0 0.0
        %1462 = vmatprep.subr.mxu0 0.0
        %1463 = vmatpush1.xpose.msra.mxu0 0.0
        %1464 = vmatprep.subr.mxu0 0.0
        %1465 = vmatpush1.xpose.msra.mxu0 0.0
        %1466 = vmatprep.subr.mxu0 0.0
        %1467 = vmatpush1.xpose.msra.mxu0 0.0
        %1468 = vmatprep.subr.mxu0 0.0
        %1469 = vmatpush1.xpose.msra.mxu0 0.0
        %1470 = vmatprep.subr.mxu0 0.0
        %1471 = vmatpush1.xpose.msra.mxu0 0.0
        %1472 = vmatprep.subr.mxu0 0.0
        %1473 = vmatpush1.xpose.msra.mxu0 0.0
        %1474 = vmatprep.subr.mxu0 0.0
        %1475 = vmatpush1.xpose.msra.mxu0 0.0
        %1476 = vmatprep.subr.mxu0 0.0
        %1477 = vmatpush1.xpose.msra.mxu0 0.0
        %1478 = vmatprep.subr.mxu0 0.0
        %1479 = vmatpush1.xpose.msra.mxu0 %v1446
        %1480 = vmatprep.subr.mxu0 0.0
        %1481 = vmatpush2.xpose.msra.mxu0 0.0
        %1482 = vmatprep.subr.mxu0 0.0
        %1483 = vmatpush2.xpose.msra.mxu0 0.0
        %1484 = vmatprep.subr.mxu0 0.0
        %1485 = vmatpush2.xpose.msra.mxu0 0.0
        %1486 = vmatprep.subr.mxu0 0.0
        %1487 = vmatpush2.xpose.msra.mxu0 0.0
        %1488 = vmatprep.subr.mxu0 0.0
        %1489 = vmatpush2.xpose.msra.mxu0 0.0
        %1490 = vmatprep.subr.mxu0 0.0
        %1491 = vmatpush2.xpose.msra.mxu0 0.0
        %1492 = vmatprep.subr.mxu0 0.0
        %1493 = vmatpush2.xpose.msra.mxu0 0.0
        %1494 = vmatprep.subr.mxu0 0.0
        %1495 = vmatpush2.xpose.msra.mxu0 0.0
        %1496 = vmatprep.subr.mxu0 0.0
        %1497 = vmatpush2.xpose.msra.mxu0 0.0
        %1498 = vmatprep.subr.mxu0 0.0
        %1499 = vmatpush2.xpose.msra.mxu0 0.0
        %1500 = vmatprep.subr.mxu0 0.0
        %1501 = vmatpush2.xpose.msra.mxu0 0.0
        %1502 = vmatprep.subr.mxu0 0.0
        %1503 = vmatpush2.xpose.msra.mxu0 0.0
        %1504 = vmatprep.subr.mxu0 0.0
        %1505 = vmatpush2.xpose.msra.mxu0 0.0
        %1506 = vmatprep.subr.mxu0 0.0
        %1507 = vmatpush2.xpose.msra.mxu0 0.0
        %1508 = vmatprep.subr.mxu0 0.0
        %1509 = vmatpush2.xpose.msra.mxu0 0.0
        %1510 = vmatprep.subr.mxu0 0.0
        %1511 = vmatpush2.xpose.msra.mxu0 0.0
        %1512 = vmatprep.mubr.f32.mxu0 0.0
        %1513 = vmatmul.mubr.f32.gmra.mxu0 %v1434
        %v1514 = vpop.f32.mrf.mxu0
        %v1515 = vadd.f32 0.0, %v1514
        %v1516 = vpop.f32.mrf.mxu0
        %1517 = vmatprep.mubr.f32.mxu0 0.0
        %1518 = vmatmul.mubr.f32.gmra.mxu0 %v1437
        %v1519 = vpop.f32.mrf.mxu0
        %v1520 = vadd.f32 0.0, %v1519
        %v1521 = vpop.f32.mrf.mxu0
        %1522 = vmatprep.mubr.f32.mxu0 0.0
        %1523 = vmatmul.mubr.f32.gmra.mxu0 %v1440
        %v1524 = vpop.f32.mrf.mxu0
        %v1525 = vadd.f32 0.0, %v1524
        %v1526 = vpop.f32.mrf.mxu0
        %1527 = vmatprep.mubr.f32.mxu0 0.0
        %1528 = vmatmul.mubr.f32.gmra.mxu0 %v1443
        %v1529 = vpop.f32.mrf.mxu0
        %v1530 = vadd.f32 0.0, %v1529
        %v1531 = vpop.f32.mrf.mxu0
        %1532 = vdwg.mxu0
        %1533 = vxpose.xlu0.b32.start [1/16] %v1515, 128
        %1534 = vxpose.xlu0.b32.cont [2/16] 0.0, 128
        %1535 = vxpose.xlu0.b32.cont [3/16] 0.0, 128
        %1536 = vxpose.xlu0.b32.cont [4/16] 0.0, 128
        %1537 = vxpose.xlu0.b32.cont [5/16] 0.0, 128
        %1538 = vxpose.xlu0.b32.cont [6/16] 0.0, 128
        %1539 = vxpose.xlu0.b32.cont [7/16] 0.0, 128
        %1540 = vxpose.xlu0.b32.cont [8/16] 0.0, 128
        %1541 = vxpose.xlu0.b32.cont [9/16] 0.0, 128
        %1542 = vxpose.xlu0.b32.cont [10/16] 0.0, 128
        %1543 = vxpose.xlu0.b32.cont [11/16] 0.0, 128
        %1544 = vxpose.xlu0.b32.cont [12/16] 0.0, 128
        %1545 = vxpose.xlu0.b32.cont [13/16] 0.0, 128
        %1546 = vxpose.xlu0.b32.cont [14/16] 0.0, 128
        %1547 = vxpose.xlu0.b32.cont [15/16] 0.0, 128
        %1548 = vxpose.xlu0.b32.end [16/16] 0.0, 128
        %v1549 = vpop.trf.xlu0
        %v1550 = vpop.trf.xlu0
        %v1551 = vpop.trf.xlu0
        %v1552 = vpop.trf.xlu0
        %v1553 = vpop.trf.xlu0
        %v1554 = vpop.trf.xlu0
        %v1555 = vpop.trf.xlu0
        %v1556 = vpop.trf.xlu0
        %v1557 = vpop.trf.xlu0
        %v1558 = vpop.trf.xlu0
        %v1559 = vpop.trf.xlu0
        %v1560 = vpop.trf.xlu0
        %v1561 = vpop.trf.xlu0
        %v1562 = vpop.trf.xlu0
        %v1563 = vpop.trf.xlu0
        %v1564 = vpop.trf.xlu0
        %1565 = vxpose.xlu0.b32.start [1/16] %v1520, 128
        %1566 = vxpose.xlu0.b32.cont [2/16] 0.0, 128
        %1567 = vxpose.xlu0.b32.cont [3/16] 0.0, 128
        %1568 = vxpose.xlu0.b32.cont [4/16] 0.0, 128
        %1569 = vxpose.xlu0.b32.cont [5/16] 0.0, 128
        %1570 = vxpose.xlu0.b32.cont [6/16] 0.0, 128
        %1571 = vxpose.xlu0.b32.cont [7/16] 0.0, 128
        %1572 = vxpose.xlu0.b32.cont [8/16] 0.0, 128
        %1573 = vxpose.xlu0.b32.cont [9/16] 0.0, 128
        %1574 = vxpose.xlu0.b32.cont [10/16] 0.0, 128
        %1575 = vxpose.xlu0.b32.cont [11/16] 0.0, 128
        %1576 = vxpose.xlu0.b32.cont [12/16] 0.0, 128
        %1577 = vxpose.xlu0.b32.cont [13/16] 0.0, 128
        %1578 = vxpose.xlu0.b32.cont [14/16] 0.0, 128
        %1579 = vxpose.xlu0.b32.cont [15/16] 0.0, 128
        %1580 = vxpose.xlu0.b32.end [16/16] 0.0, 128
        %v1581 = vpop.trf.xlu0
        %v1582 = vpop.trf.xlu0
        %v1583 = vpop.trf.xlu0
        %v1584 = vpop.trf.xlu0
        %v1585 = vpop.trf.xlu0
        %v1586 = vpop.trf.xlu0
        %v1587 = vpop.trf.xlu0
        %v1588 = vpop.trf.xlu0
        %v1589 = vpop.trf.xlu0
        %v1590 = vpop.trf.xlu0
        %v1591 = vpop.trf.xlu0
        %v1592 = vpop.trf.xlu0
        %v1593 = vpop.trf.xlu0
        %v1594 = vpop.trf.xlu0
        %v1595 = vpop.trf.xlu0
        %v1596 = vpop.trf.xlu0
        %1597 = vxpose.xlu0.b32.start [1/16] %v1525, 128
        %1598 = vxpose.xlu0.b32.cont [2/16] 0.0, 128
        %1599 = vxpose.xlu0.b32.cont [3/16] 0.0, 128
        %1600 = vxpose.xlu0.b32.cont [4/16] 0.0, 128
        %1601 = vxpose.xlu0.b32.cont [5/16] 0.0, 128
        %1602 = vxpose.xlu0.b32.cont [6/16] 0.0, 128
        %1603 = vxpose.xlu0.b32.cont [7/16] 0.0, 128
        %1604 = vxpose.xlu0.b32.cont [8/16] 0.0, 128
        %1605 = vxpose.xlu0.b32.cont [9/16] 0.0, 128
        %1606 = vxpose.xlu0.b32.cont [10/16] 0.0, 128
        %1607 = vxpose.xlu0.b32.cont [11/16] 0.0, 128
        %1608 = vxpose.xlu0.b32.cont [12/16] 0.0, 128
        %1609 = vxpose.xlu0.b32.cont [13/16] 0.0, 128
        %1610 = vxpose.xlu0.b32.cont [14/16] 0.0, 128
        %1611 = vxpose.xlu0.b32.cont [15/16] 0.0, 128
        %1612 = vxpose.xlu0.b32.end [16/16] 0.0, 128
        %v1613 = vpop.trf.xlu0
        %v1614 = vpop.trf.xlu0
        %v1615 = vpop.trf.xlu0
        %v1616 = vpop.trf.xlu0
        %v1617 = vpop.trf.xlu0
        %v1618 = vpop.trf.xlu0
        %v1619 = vpop.trf.xlu0
        %v1620 = vpop.trf.xlu0
        %v1621 = vpop.trf.xlu0
        %v1622 = vpop.trf.xlu0
        %v1623 = vpop.trf.xlu0
        %v1624 = vpop.trf.xlu0
        %v1625 = vpop.trf.xlu0
        %v1626 = vpop.trf.xlu0
        %v1627 = vpop.trf.xlu0
        %v1628 = vpop.trf.xlu0
        %1629 = vxpose.xlu0.b32.start [1/16] %v1530, 128
        %1630 = vxpose.xlu0.b32.cont [2/16] 0.0, 128
        %1631 = vxpose.xlu0.b32.cont [3/16] 0.0, 128
        %1632 = vxpose.xlu0.b32.cont [4/16] 0.0, 128
        %1633 = vxpose.xlu0.b32.cont [5/16] 0.0, 128
        %1634 = vxpose.xlu0.b32.cont [6/16] 0.0, 128
        %1635 = vxpose.xlu0.b32.cont [7/16] 0.0, 128
        %1636 = vxpose.xlu0.b32.cont [8/16] 0.0, 128
        %1637 = vxpose.xlu0.b32.cont [9/16] 0.0, 128
        %1638 = vxpose.xlu0.b32.cont [10/16] 0.0, 128
        %1639 = vxpose.xlu0.b32.cont [11/16] 0.0, 128
        %1640 = vxpose.xlu0.b32.cont [12/16] 0.0, 128
        %1641 = vxpose.xlu0.b32.cont [13/16] 0.0, 128
        %1642 = vxpose.xlu0.b32.cont [14/16] 0.0, 128
        %1643 = vxpose.xlu0.b32.cont [15/16] 0.0, 128
        %1644 = vxpose.xlu0.b32.end [16/16] 0.0, 128
        %v1645 = vpop.trf.xlu0
        %v1646 = vpop.trf.xlu0
        %v1647 = vpop.trf.xlu0
        %v1648 = vpop.trf.xlu0
        %v1649 = vpop.trf.xlu0
        %v1650 = vpop.trf.xlu0
        %v1651 = vpop.trf.xlu0
        %v1652 = vpop.trf.xlu0
        %v1653 = vpop.trf.xlu0
        %v1654 = vpop.trf.xlu0
        %v1655 = vpop.trf.xlu0
        %v1656 = vpop.trf.xlu0
        %v1657 = vpop.trf.xlu0
        %v1658 = vpop.trf.xlu0
        %v1659 = vpop.trf.xlu0
        %v1660 = vpop.trf.xlu0
        %v1661 = vld [vmem:[%s3] sm:$0x1]
        %v1662 = vld [vmem:[%s3 + $0x1] sm:$0x1]
        %v1663 = vld [vmem:[%s3 + $0x2] sm:$0x1]
        %v1664 = vld [vmem:[%s3 + $0x3] sm:$0x1]
        %v1669 = vlaneseq
        %v1670 = vshrl.u32 %v1669, 7
        %v1671 = vsub.s32 0, %v1670
        %v1672 = vrot.slane %v1661, %v1671
        %v1673 = vlaneseq
        %v1674 = vshrl.u32 %v1673, 7
        %v1675 = vsub.s32 0, %v1674
        %v1676 = vrot.slane %v1662, %v1675
        %v1677 = vlaneseq
        %v1678 = vshrl.u32 %v1677, 7
        %v1679 = vsub.s32 0, %v1678
        %v1680 = vrot.slane %v1663, %v1679
        %v1681 = vlaneseq
        %v1682 = vshrl.u32 %v1681, 7
        %v1683 = vsub.s32 0, %v1682
        %v1684 = vrot.slane %v1664, %v1683
        %v1689 = vadd.f32 %v1549, %v1672
        %v1690 = vadd.f32 %v1581, %v1676
        %v1691 = vadd.f32 %v1613, %v1680
        %v1692 = vadd.f32 %v1645, %v1684
        %v1693 = vld [vmem:[#allocation2] sm:$0xff]
        %v1694 = vld [vmem:[#allocation2 + $0x8] sm:$0xff]
        %v1695 = vld [vmem:[#allocation2 + $0x10] sm:$0xff]
        %v1696 = vld [vmem:[#allocation2 + $0x18] sm:$0xff]
        %v1697 = vld [vmem:[#allocation2 + $0x20] sm:$0xff]
        %v1698 = vld [vmem:[#allocation2 + $0x28] sm:$0xff]
        %v1699 = vld [vmem:[#allocation2 + $0x30] sm:$0xff]
        %v1700 = vld [vmem:[#allocation2 + $0x38] sm:$0xff]
        %v1701 = vld [vmem:[%s384] sm:$0xff]
        %v1702 = vld [vmem:[%s384 + $0x8] sm:$0xff]
        %v1703 = vld [vmem:[%s384 + $0x10] sm:$0xff]
        %v1704 = vld [vmem:[%s384 + $0x18] sm:$0xff]
        %vm1705 = vcmask 64512
        %v1707 = vsel %vm1705, %v1689, 0
        %v1710 = vsel %vm1705, %v1693, 0
        %v1713 = vsel %vm1705, %v1694, 0
        %1715 = vmatprep.subr.mxu0 0.0
        %1716 = vmatpush1.xpose.msra.mxu0 0.0
        %1717 = vmatprep.subr.mxu0 0.0
        %1718 = vmatpush1.xpose.msra.mxu0 0.0
        %1719 = vmatprep.subr.mxu0 0.0
        %1720 = vmatpush1.xpose.msra.mxu0 0.0
        %1721 = vmatprep.subr.mxu0 0.0
        %1722 = vmatpush1.xpose.msra.mxu0 0.0
        %1723 = vmatprep.subr.mxu0 0.0
        %1724 = vmatpush1.xpose.msra.mxu0 0.0
        %1725 = vmatprep.subr.mxu0 0.0
        %1726 = vmatpush1.xpose.msra.mxu0 0.0
        %1727 = vmatprep.subr.mxu0 0.0
        %1728 = vmatpush1.xpose.msra.mxu0 0.0
        %1729 = vmatprep.subr.mxu0 0.0
        %1730 = vmatpush1.xpose.msra.mxu0 0.0
        %1731 = vmatprep.subr.mxu0 0.0
        %1732 = vmatpush1.xpose.msra.mxu0 0.0
        %1733 = vmatprep.subr.mxu0 0.0
        %1734 = vmatpush1.xpose.msra.mxu0 0.0
        %1735 = vmatprep.subr.mxu0 0.0
        %1736 = vmatpush1.xpose.msra.mxu0 0.0
        %1737 = vmatprep.subr.mxu0 0.0
        %1738 = vmatpush1.xpose.msra.mxu0 0.0
        %1739 = vmatprep.subr.mxu0 0.0
        %1740 = vmatpush1.xpose.msra.mxu0 0.0
        %1741 = vmatprep.subr.mxu0 0.0
        %1742 = vmatpush1.xpose.msra.mxu0 0.0
        %1743 = vmatprep.subr.mxu0 0.0
        %1744 = vmatpush1.xpose.msra.mxu0 %v1713
        %1745 = vmatprep.subr.mxu0 0.0
        %1746 = vmatpush1.xpose.msra.mxu0 %v1710
        %1747 = vmatprep.subr.mxu0 0.0
        %1748 = vmatpush2.xpose.msra.mxu0 0.0
        %1749 = vmatprep.subr.mxu0 0.0
        %1750 = vmatpush2.xpose.msra.mxu0 0.0
        %1751 = vmatprep.subr.mxu0 0.0
        %1752 = vmatpush2.xpose.msra.mxu0 0.0
        %1753 = vmatprep.subr.mxu0 0.0
        %1754 = vmatpush2.xpose.msra.mxu0 0.0
        %1755 = vmatprep.subr.mxu0 0.0
        %1756 = vmatpush2.xpose.msra.mxu0 0.0
        %1757 = vmatprep.subr.mxu0 0.0
        %1758 = vmatpush2.xpose.msra.mxu0 0.0
        %1759 = vmatprep.subr.mxu0 0.0
        %1760 = vmatpush2.xpose.msra.mxu0 0.0
        %1761 = vmatprep.subr.mxu0 0.0
        %1762 = vmatpush2.xpose.msra.mxu0 0.0
        %1763 = vmatprep.subr.mxu0 0.0
        %1764 = vmatpush2.xpose.msra.mxu0 0.0
        %1765 = vmatprep.subr.mxu0 0.0
        %1766 = vmatpush2.xpose.msra.mxu0 0.0
        %1767 = vmatprep.subr.mxu0 0.0
        %1768 = vmatpush2.xpose.msra.mxu0 0.0
        %1769 = vmatprep.subr.mxu0 0.0
        %1770 = vmatpush2.xpose.msra.mxu0 0.0
        %1771 = vmatprep.subr.mxu0 0.0
        %1772 = vmatpush2.xpose.msra.mxu0 0.0
        %1773 = vmatprep.subr.mxu0 0.0
        %1774 = vmatpush2.xpose.msra.mxu0 0.0
        %1775 = vmatprep.subr.mxu0 0.0
        %1776 = vmatpush2.xpose.msra.mxu0 0.0
        %1777 = vmatprep.subr.mxu0 0.0
        %1778 = vmatpush2.xpose.msra.mxu0 0.0
        %1779 = vmatprep.mubr.f32.mxu0 0.0
        %1780 = vmatmul.mubr.f32.gmra.mxu0 %v1707
        %v1781 = vpop.f32.mrf.mxu0
        %v1782 = vadd.f32 %v1701, %v1781
        %v1783 = vpop.f32.mrf.mxu0
        %1784 = vdwg.mxu0
        %v1786 = vsel %vm1705, %v1690, 0
        %v1789 = vsel %vm1705, %v1695, 0
        %v1792 = vsel %vm1705, %v1696, 0
        %1794 = vmatprep.subr.mxu0 0.0
        %1795 = vmatpush1.xpose.msra.mxu0 0.0
        %1796 = vmatprep.subr.mxu0 0.0
        %1797 = vmatpush1.xpose.msra.mxu0 0.0
        %1798 = vmatprep.subr.mxu0 0.0
        %1799 = vmatpush1.xpose.msra.mxu0 0.0
        %1800 = vmatprep.subr.mxu0 0.0
        %1801 = vmatpush1.xpose.msra.mxu0 0.0
        %1802 = vmatprep.subr.mxu0 0.0
        %1803 = vmatpush1.xpose.msra.mxu0 0.0
        %1804 = vmatprep.subr.mxu0 0.0
        %1805 = vmatpush1.xpose.msra.mxu0 0.0
        %1806 = vmatprep.subr.mxu0 0.0
        %1807 = vmatpush1.xpose.msra.mxu0 0.0
        %1808 = vmatprep.subr.mxu0 0.0
        %1809 = vmatpush1.xpose.msra.mxu0 0.0
        %1810 = vmatprep.subr.mxu0 0.0
        %1811 = vmatpush1.xpose.msra.mxu0 0.0
        %1812 = vmatprep.subr.mxu0 0.0
        %1813 = vmatpush1.xpose.msra.mxu0 0.0
        %1814 = vmatprep.subr.mxu0 0.0
        %1815 = vmatpush1.xpose.msra.mxu0 0.0
        %1816 = vmatprep.subr.mxu0 0.0
        %1817 = vmatpush1.xpose.msra.mxu0 0.0
        %1818 = vmatprep.subr.mxu0 0.0
        %1819 = vmatpush1.xpose.msra.mxu0 0.0
        %1820 = vmatprep.subr.mxu0 0.0
        %1821 = vmatpush1.xpose.msra.mxu0 0.0
        %1822 = vmatprep.subr.mxu0 0.0
        %1823 = vmatpush1.xpose.msra.mxu0 %v1792
        %1824 = vmatprep.subr.mxu0 0.0
        %1825 = vmatpush1.xpose.msra.mxu0 %v1789
        %1826 = vmatprep.subr.mxu0 0.0
        %1827 = vmatpush2.xpose.msra.mxu0 0.0
        %1828 = vmatprep.subr.mxu0 0.0
        %1829 = vmatpush2.xpose.msra.mxu0 0.0
        %1830 = vmatprep.subr.mxu0 0.0
        %1831 = vmatpush2.xpose.msra.mxu0 0.0
        %1832 = vmatprep.subr.mxu0 0.0
        %1833 = vmatpush2.xpose.msra.mxu0 0.0
        %1834 = vmatprep.subr.mxu0 0.0
        %1835 = vmatpush2.xpose.msra.mxu0 0.0
        %1836 = vmatprep.subr.mxu0 0.0
        %1837 = vmatpush2.xpose.msra.mxu0 0.0
        %1838 = vmatprep.subr.mxu0 0.0
        %1839 = vmatpush2.xpose.msra.mxu0 0.0
        %1840 = vmatprep.subr.mxu0 0.0
        %1841 = vmatpush2.xpose.msra.mxu0 0.0
        %1842 = vmatprep.subr.mxu0 0.0
        %1843 = vmatpush2.xpose.msra.mxu0 0.0
        %1844 = vmatprep.subr.mxu0 0.0
        %1845 = vmatpush2.xpose.msra.mxu0 0.0
        %1846 = vmatprep.subr.mxu0 0.0
        %1847 = vmatpush2.xpose.msra.mxu0 0.0
        %1848 = vmatprep.subr.mxu0 0.0
        %1849 = vmatpush2.xpose.msra.mxu0 0.0
        %1850 = vmatprep.subr.mxu0 0.0
        %1851 = vmatpush2.xpose.msra.mxu0 0.0
        %1852 = vmatprep.subr.mxu0 0.0
        %1853 = vmatpush2.xpose.msra.mxu0 0.0
        %1854 = vmatprep.subr.mxu0 0.0
        %1855 = vmatpush2.xpose.msra.mxu0 0.0
        %1856 = vmatprep.subr.mxu0 0.0
        %1857 = vmatpush2.xpose.msra.mxu0 0.0
        %1858 = vmatprep.mubr.f32.mxu0 0.0
        %1859 = vmatmul.mubr.f32.gmra.mxu0 %v1786
        %v1860 = vpop.f32.mrf.mxu0
        %v1861 = vadd.f32 %v1702, %v1860
        %v1862 = vpop.f32.mrf.mxu0
        %1863 = vdwg.mxu0
        %v1865 = vsel %vm1705, %v1691, 0
        %v1868 = vsel %vm1705, %v1697, 0
        %v1871 = vsel %vm1705, %v1698, 0
        %1873 = vmatprep.subr.mxu0 0.0
        %1874 = vmatpush1.xpose.msra.mxu0 0.0
        %1875 = vmatprep.subr.mxu0 0.0
        %1876 = vmatpush1.xpose.msra.mxu0 0.0
        %1877 = vmatprep.subr.mxu0 0.0
        %1878 = vmatpush1.xpose.msra.mxu0 0.0
        %1879 = vmatprep.subr.mxu0 0.0
        %1880 = vmatpush1.xpose.msra.mxu0 0.0
        %1881 = vmatprep.subr.mxu0 0.0
        %1882 = vmatpush1.xpose.msra.mxu0 0.0
        %1883 = vmatprep.subr.mxu0 0.0
        %1884 = vmatpush1.xpose.msra.mxu0 0.0
        %1885 = vmatprep.subr.mxu0 0.0
        %1886 = vmatpush1.xpose.msra.mxu0 0.0
        %1887 = vmatprep.subr.mxu0 0.0
        %1888 = vmatpush1.xpose.msra.mxu0 0.0
        %1889 = vmatprep.subr.mxu0 0.0
        %1890 = vmatpush1.xpose.msra.mxu0 0.0
        %1891 = vmatprep.subr.mxu0 0.0
        %1892 = vmatpush1.xpose.msra.mxu0 0.0
        %1893 = vmatprep.subr.mxu0 0.0
        %1894 = vmatpush1.xpose.msra.mxu0 0.0
        %1895 = vmatprep.subr.mxu0 0.0
        %1896 = vmatpush1.xpose.msra.mxu0 0.0
        %1897 = vmatprep.subr.mxu0 0.0
        %1898 = vmatpush1.xpose.msra.mxu0 0.0
        %1899 = vmatprep.subr.mxu0 0.0
        %1900 = vmatpush1.xpose.msra.mxu0 0.0
        %1901 = vmatprep.subr.mxu0 0.0
        %1902 = vmatpush1.xpose.msra.mxu0 %v1871
        %1903 = vmatprep.subr.mxu0 0.0
        %1904 = vmatpush1.xpose.msra.mxu0 %v1868
        %1905 = vmatprep.subr.mxu0 0.0
        %1906 = vmatpush2.xpose.msra.mxu0 0.0
        %1907 = vmatprep.subr.mxu0 0.0
        %1908 = vmatpush2.xpose.msra.mxu0 0.0
        %1909 = vmatprep.subr.mxu0 0.0
        %1910 = vmatpush2.xpose.msra.mxu0 0.0
        %1911 = vmatprep.subr.mxu0 0.0
        %1912 = vmatpush2.xpose.msra.mxu0 0.0
        %1913 = vmatprep.subr.mxu0 0.0
        %1914 = vmatpush2.xpose.msra.mxu0 0.0
        %1915 = vmatprep.subr.mxu0 0.0
        %1916 = vmatpush2.xpose.msra.mxu0 0.0
        %1917 = vmatprep.subr.mxu0 0.0
        %1918 = vmatpush2.xpose.msra.mxu0 0.0
        %1919 = vmatprep.subr.mxu0 0.0
        %1920 = vmatpush2.xpose.msra.mxu0 0.0
        %1921 = vmatprep.subr.mxu0 0.0
        %1922 = vmatpush2.xpose.msra.mxu0 0.0
        %1923 = vmatprep.subr.mxu0 0.0
        %1924 = vmatpush2.xpose.msra.mxu0 0.0
        %1925 = vmatprep.subr.mxu0 0.0
        %1926 = vmatpush2.xpose.msra.mxu0 0.0
        %1927 = vmatprep.subr.mxu0 0.0
        %1928 = vmatpush2.xpose.msra.mxu0 0.0
        %1929 = vmatprep.subr.mxu0 0.0
        %1930 = vmatpush2.xpose.msra.mxu0 0.0
        %1931 = vmatprep.subr.mxu0 0.0
        %1932 = vmatpush2.xpose.msra.mxu0 0.0
        %1933 = vmatprep.subr.mxu0 0.0
        %1934 = vmatpush2.xpose.msra.mxu0 0.0
        %1935 = vmatprep.subr.mxu0 0.0
        %1936 = vmatpush2.xpose.msra.mxu0 0.0
        %1937 = vmatprep.mubr.f32.mxu0 0.0
        %1938 = vmatmul.mubr.f32.gmra.mxu0 %v1865
        %v1939 = vpop.f32.mrf.mxu0
        %v1940 = vadd.f32 %v1703, %v1939
        %v1941 = vpop.f32.mrf.mxu0
        %1942 = vdwg.mxu0
        %v1944 = vsel %vm1705, %v1692, 0
        %v1947 = vsel %vm1705, %v1699, 0
        %v1950 = vsel %vm1705, %v1700, 0
        %1952 = vmatprep.subr.mxu0 0.0
        %1953 = vmatpush1.xpose.msra.mxu0 0.0
        %1954 = vmatprep.subr.mxu0 0.0
        %1955 = vmatpush1.xpose.msra.mxu0 0.0
        %1956 = vmatprep.subr.mxu0 0.0
        %1957 = vmatpush1.xpose.msra.mxu0 0.0
        %1958 = vmatprep.subr.mxu0 0.0
        %1959 = vmatpush1.xpose.msra.mxu0 0.0
        %1960 = vmatprep.subr.mxu0 0.0
        %1961 = vmatpush1.xpose.msra.mxu0 0.0
        %1962 = vmatprep.subr.mxu0 0.0
        %1963 = vmatpush1.xpose.msra.mxu0 0.0
        %1964 = vmatprep.subr.mxu0 0.0
        %1965 = vmatpush1.xpose.msra.mxu0 0.0
        %1966 = vmatprep.subr.mxu0 0.0
        %1967 = vmatpush1.xpose.msra.mxu0 0.0
        %1968 = vmatprep.subr.mxu0 0.0
        %1969 = vmatpush1.xpose.msra.mxu0 0.0
        %1970 = vmatprep.subr.mxu0 0.0
        %1971 = vmatpush1.xpose.msra.mxu0 0.0
        %1972 = vmatprep.subr.mxu0 0.0
        %1973 = vmatpush1.xpose.msra.mxu0 0.0
        %1974 = vmatprep.subr.mxu0 0.0
        %1975 = vmatpush1.xpose.msra.mxu0 0.0
        %1976 = vmatprep.subr.mxu0 0.0
        %1977 = vmatpush1.xpose.msra.mxu0 0.0
        %1978 = vmatprep.subr.mxu0 0.0
        %1979 = vmatpush1.xpose.msra.mxu0 0.0
        %1980 = vmatprep.subr.mxu0 0.0
        %1981 = vmatpush1.xpose.msra.mxu0 %v1950
        %1982 = vmatprep.subr.mxu0 0.0
        %1983 = vmatpush1.xpose.msra.mxu0 %v1947
        %1984 = vmatprep.subr.mxu0 0.0
        %1985 = vmatpush2.xpose.msra.mxu0 0.0
        %1986 = vmatprep.subr.mxu0 0.0
        %1987 = vmatpush2.xpose.msra.mxu0 0.0
        %1988 = vmatprep.subr.mxu0 0.0
        %1989 = vmatpush2.xpose.msra.mxu0 0.0
        %1990 = vmatprep.subr.mxu0 0.0
        %1991 = vmatpush2.xpose.msra.mxu0 0.0
        %1992 = vmatprep.subr.mxu0 0.0
        %1993 = vmatpush2.xpose.msra.mxu0 0.0
        %1994 = vmatprep.subr.mxu0 0.0
        %1995 = vmatpush2.xpose.msra.mxu0 0.0
        %1996 = vmatprep.subr.mxu0 0.0
        %1997 = vmatpush2.xpose.msra.mxu0 0.0
        %1998 = vmatprep.subr.mxu0 0.0
        %1999 = vmatpush2.xpose.msra.mxu0 0.0
        %2000 = vmatprep.subr.mxu0 0.0
        %2001 = vmatpush2.xpose.msra.mxu0 0.0
        %2002 = vmatprep.subr.mxu0 0.0
        %2003 = vmatpush2.xpose.msra.mxu0 0.0
        %2004 = vmatprep.subr.mxu0 0.0
        %2005 = vmatpush2.xpose.msra.mxu0 0.0
        %2006 = vmatprep.subr.mxu0 0.0
        %2007 = vmatpush2.xpose.msra.mxu0 0.0
        %2008 = vmatprep.subr.mxu0 0.0
        %2009 = vmatpush2.xpose.msra.mxu0 0.0
        %2010 = vmatprep.subr.mxu0 0.0
        %2011 = vmatpush2.xpose.msra.mxu0 0.0
        %2012 = vmatprep.subr.mxu0 0.0
        %2013 = vmatpush2.xpose.msra.mxu0 0.0
        %2014 = vmatprep.subr.mxu0 0.0
        %2015 = vmatpush2.xpose.msra.mxu0 0.0
        %2016 = vmatprep.mubr.f32.mxu0 0.0
        %2017 = vmatmul.mubr.f32.gmra.mxu0 %v1944
        %v2018 = vpop.f32.mrf.mxu0
        %v2019 = vadd.f32 %v1704, %v2018
        %v2020 = vpop.f32.mrf.mxu0
        %2021 = vdwg.mxu0
        %vm2022 = vcmask 130048
        %v2023 = vsel %vm2022, %v1782, -inf
        %2024 = vmax.xlane.f32.xlu0 %v2023
        %v2025 = vpop.xlane.xlu0 %2024
        %v2026 = vsel %vm2022, %v1861, -inf
        %2027 = vmax.xlane.f32.xlu0 %v2026
        %v2028 = vpop.xlane.xlu0 %2027
        %v2029 = vsel %vm2022, %v1940, -inf
        %2030 = vmax.xlane.f32.xlu0 %v2029
        %v2031 = vpop.xlane.xlu0 %2030
        %v2032 = vsel %vm2022, %v2019, -inf
        %2033 = vmax.xlane.f32.xlu0 %v2032
        %v2034 = vpop.xlane.xlu0 %2033
        %v2035 = vsub.f32 %v1782, %v2025
        %v2036 = vsub.f32 %v1861, %v2028
        %v2037 = vsub.f32 %v1940, %v2031
        %v2038 = vsub.f32 %v2019, %v2034
        %v2039 = vmul.f32 %v2035, 1.442695
        %v2040 = vpow.pop %v2039
        %v2041 = vmul.f32 %v2036, 1.442695
        %v2042 = vpow.pop %v2041
        %v2043 = vmul.f32 %v2037, 1.442695
        %v2044 = vpow.pop %v2043
        %v2045 = vmul.f32 %v2038, 1.442695
        %v2046 = vpow.pop %v2045
        %v2047 = vsel %vm2022, %v2040, 0.0
        %2048 = vadd.xlane.f32.xlu0 %v2047
        %v2049 = vpop.xlane.xlu0 %2048
        %v2050 = vsel %vm2022, %v2042, 0.0
        %2051 = vadd.xlane.f32.xlu0 %v2050
        %v2052 = vpop.xlane.xlu0 %2051
        %v2053 = vsel %vm2022, %v2044, 0.0
        %2054 = vadd.xlane.f32.xlu0 %v2053
        %v2055 = vpop.xlane.xlu0 %2054
        %v2056 = vsel %vm2022, %v2046, 0.0
        %2057 = vadd.xlane.f32.xlu0 %v2056
        %v2058 = vpop.xlane.xlu0 %2057
        %v2059 = vrcp.pop %v2049
        %v2060 = vrcp.pop %v2052
        %v2061 = vrcp.pop %v2055
        %v2062 = vrcp.pop %v2058
        %v2063 = vmul.f32 %v2040, %v2059
        %v2064 = vmul.f32 %v2042, %v2060
        %v2065 = vmul.f32 %v2044, %v2061
        %v2066 = vmul.f32 %v2046, %v2062
        %v2067 = vld [vmem:[#allocation3] sm:$0xff]
        %v2068 = vld [vmem:[#allocation3 + $0x8] sm:$0xff]
        %v2069 = vld [vmem:[#allocation3 + $0x10] sm:$0xff]
        %v2070 = vld [vmem:[#allocation3 + $0x18] sm:$0xff]
        %v2071 = vld [vmem:[#allocation3 + $0x20] sm:$0xff]
        %v2072 = vld [vmem:[#allocation3 + $0x28] sm:$0xff]
        %v2073 = vld [vmem:[#allocation3 + $0x30] sm:$0xff]
        %v2074 = vld [vmem:[#allocation3 + $0x38] sm:$0xff]
        %v2076 = vsel %vm2022, %v2063, 0
        %2078 = vmatprep.subr.mxu0 0.0
        %2079 = vmatpush1.msra.mxu0 0.0
        %2080 = vmatprep.subr.mxu0 0.0
        %2081 = vmatpush1.msra.mxu0 0.0
        %2082 = vmatprep.subr.mxu0 0.0
        %2083 = vmatpush1.msra.mxu0 0.0
        %2084 = vmatprep.subr.mxu0 0.0
        %2085 = vmatpush1.msra.mxu0 0.0
        %2086 = vmatprep.subr.mxu0 0.0
        %2087 = vmatpush1.msra.mxu0 0.0
        %2088 = vmatprep.subr.mxu0 0.0
        %2089 = vmatpush1.msra.mxu0 0.0
        %2090 = vmatprep.subr.mxu0 0.0
        %2091 = vmatpush1.msra.mxu0 0.0
        %2092 = vmatprep.subr.mxu0 0.0
        %2093 = vmatpush1.msra.mxu0 0.0
        %2094 = vmatprep.subr.mxu0 0.0
        %2095 = vmatpush1.msra.mxu0 0.0
        %2096 = vmatprep.subr.mxu0 0.0
        %2097 = vmatpush1.msra.mxu0 0.0
        %2098 = vmatprep.subr.mxu0 0.0
        %2099 = vmatpush1.msra.mxu0 0.0
        %2100 = vmatprep.subr.mxu0 0.0
        %2101 = vmatpush1.msra.mxu0 0.0
        %2102 = vmatprep.subr.mxu0 0.0
        %2103 = vmatpush1.msra.mxu0 0.0
        %2104 = vmatprep.subr.mxu0 0.0
        %2105 = vmatpush1.msra.mxu0 0.0
        %2106 = vmatprep.subr.mxu0 0.0
        %2107 = vmatpush1.msra.mxu0 %v2068
        %2108 = vmatprep.subr.mxu0 0.0
        %2109 = vmatpush1.msra.mxu0 %v2067
        %2110 = vmatprep.subr.mxu0 0.0
        %2111 = vmatpush2.msra.mxu0 0.0
        %2112 = vmatprep.subr.mxu0 0.0
        %2113 = vmatpush2.msra.mxu0 0.0
        %2114 = vmatprep.subr.mxu0 0.0
        %2115 = vmatpush2.msra.mxu0 0.0
        %2116 = vmatprep.subr.mxu0 0.0
        %2117 = vmatpush2.msra.mxu0 0.0
        %2118 = vmatprep.subr.mxu0 0.0
        %2119 = vmatpush2.msra.mxu0 0.0
        %2120 = vmatprep.subr.mxu0 0.0
        %2121 = vmatpush2.msra.mxu0 0.0
        %2122 = vmatprep.subr.mxu0 0.0
        %2123 = vmatpush2.msra.mxu0 0.0
        %2124 = vmatprep.subr.mxu0 0.0
        %2125 = vmatpush2.msra.mxu0 0.0
        %2126 = vmatprep.subr.mxu0 0.0
        %2127 = vmatpush2.msra.mxu0 0.0
        %2128 = vmatprep.subr.mxu0 0.0
        %2129 = vmatpush2.msra.mxu0 0.0
        %2130 = vmatprep.subr.mxu0 0.0
        %2131 = vmatpush2.msra.mxu0 0.0
        %2132 = vmatprep.subr.mxu0 0.0
        %2133 = vmatpush2.msra.mxu0 0.0
        %2134 = vmatprep.subr.mxu0 0.0
        %2135 = vmatpush2.msra.mxu0 0.0
        %2136 = vmatprep.subr.mxu0 0.0
        %2137 = vmatpush2.msra.mxu0 0.0
        %2138 = vmatprep.subr.mxu0 0.0
        %2139 = vmatpush2.msra.mxu0 0.0
        %2140 = vmatprep.subr.mxu0 0.0
        %2141 = vmatpush2.msra.mxu0 0.0
        %2142 = vmatprep.mubr.f32.mxu0 0.0
        %2143 = vmatmul.mubr.f32.gmra.mxu0 %v2076
        %v2144 = vpop.f32.mrf.mxu0
        %v2145 = vadd.f32 0.0, %v2144
        %v2146 = vpop.f32.mrf.mxu0
        %2147 = vdwg.mxu0
        %v2149 = vsel %vm2022, %v2064, 0
        %2151 = vmatprep.subr.mxu0 0.0
        %2152 = vmatpush1.msra.mxu0 0.0
        %2153 = vmatprep.subr.mxu0 0.0
        %2154 = vmatpush1.msra.mxu0 0.0
        %2155 = vmatprep.subr.mxu0 0.0
        %2156 = vmatpush1.msra.mxu0 0.0
        %2157 = vmatprep.subr.mxu0 0.0
        %2158 = vmatpush1.msra.mxu0 0.0
        %2159 = vmatprep.subr.mxu0 0.0
        %2160 = vmatpush1.msra.mxu0 0.0
        %2161 = vmatprep.subr.mxu0 0.0
        %2162 = vmatpush1.msra.mxu0 0.0
        %2163 = vmatprep.subr.mxu0 0.0
        %2164 = vmatpush1.msra.mxu0 0.0
        %2165 = vmatprep.subr.mxu0 0.0
        %2166 = vmatpush1.msra.mxu0 0.0
        %2167 = vmatprep.subr.mxu0 0.0
        %2168 = vmatpush1.msra.mxu0 0.0
        %2169 = vmatprep.subr.mxu0 0.0
        %2170 = vmatpush1.msra.mxu0 0.0
        %2171 = vmatprep.subr.mxu0 0.0
        %2172 = vmatpush1.msra.mxu0 0.0
        %2173 = vmatprep.subr.mxu0 0.0
        %2174 = vmatpush1.msra.mxu0 0.0
        %2175 = vmatprep.subr.mxu0 0.0
        %2176 = vmatpush1.msra.mxu0 0.0
        %2177 = vmatprep.subr.mxu0 0.0
        %2178 = vmatpush1.msra.mxu0 0.0
        %2179 = vmatprep.subr.mxu0 0.0
        %2180 = vmatpush1.msra.mxu0 %v2070
        %2181 = vmatprep.subr.mxu0 0.0
        %2182 = vmatpush1.msra.mxu0 %v2069
        %2183 = vmatprep.subr.mxu0 0.0
        %2184 = vmatpush2.msra.mxu0 0.0
        %2185 = vmatprep.subr.mxu0 0.0
        %2186 = vmatpush2.msra.mxu0 0.0
        %2187 = vmatprep.subr.mxu0 0.0
        %2188 = vmatpush2.msra.mxu0 0.0
        %2189 = vmatprep.subr.mxu0 0.0
        %2190 = vmatpush2.msra.mxu0 0.0
        %2191 = vmatprep.subr.mxu0 0.0
        %2192 = vmatpush2.msra.mxu0 0.0
        %2193 = vmatprep.subr.mxu0 0.0
        %2194 = vmatpush2.msra.mxu0 0.0
        %2195 = vmatprep.subr.mxu0 0.0
        %2196 = vmatpush2.msra.mxu0 0.0
        %2197 = vmatprep.subr.mxu0 0.0
        %2198 = vmatpush2.msra.mxu0 0.0
        %2199 = vmatprep.subr.mxu0 0.0
        %2200 = vmatpush2.msra.mxu0 0.0
        %2201 = vmatprep.subr.mxu0 0.0
        %2202 = vmatpush2.msra.mxu0 0.0
        %2203 = vmatprep.subr.mxu0 0.0
        %2204 = vmatpush2.msra.mxu0 0.0
        %2205 = vmatprep.subr.mxu0 0.0
        %2206 = vmatpush2.msra.mxu0 0.0
        %2207 = vmatprep.subr.mxu0 0.0
        %2208 = vmatpush2.msra.mxu0 0.0
        %2209 = vmatprep.subr.mxu0 0.0
        %2210 = vmatpush2.msra.mxu0 0.0
        %2211 = vmatprep.subr.mxu0 0.0
        %2212 = vmatpush2.msra.mxu0 0.0
        %2213 = vmatprep.subr.mxu0 0.0
        %2214 = vmatpush2.msra.mxu0 0.0
        %2215 = vmatprep.mubr.f32.mxu0 0.0
        %2216 = vmatmul.mubr.f32.gmra.mxu0 %v2149
        %v2217 = vpop.f32.mrf.mxu0
        %v2218 = vadd.f32 0.0, %v2217
        %v2219 = vpop.f32.mrf.mxu0
        %2220 = vdwg.mxu0
        %v2222 = vsel %vm2022, %v2065, 0
        %2224 = vmatprep.subr.mxu0 0.0
        %2225 = vmatpush1.msra.mxu0 0.0
        %2226 = vmatprep.subr.mxu0 0.0
        %2227 = vmatpush1.msra.mxu0 0.0
        %2228 = vmatprep.subr.mxu0 0.0
        %2229 = vmatpush1.msra.mxu0 0.0
        %2230 = vmatprep.subr.mxu0 0.0
        %2231 = vmatpush1.msra.mxu0 0.0
        %2232 = vmatprep.subr.mxu0 0.0
        %2233 = vmatpush1.msra.mxu0 0.0
        %2234 = vmatprep.subr.mxu0 0.0
        %2235 = vmatpush1.msra.mxu0 0.0
        %2236 = vmatprep.subr.mxu0 0.0
        %2237 = vmatpush1.msra.mxu0 0.0
        %2238 = vmatprep.subr.mxu0 0.0
        %2239 = vmatpush1.msra.mxu0 0.0
        %2240 = vmatprep.subr.mxu0 0.0
        %2241 = vmatpush1.msra.mxu0 0.0
        %2242 = vmatprep.subr.mxu0 0.0
        %2243 = vmatpush1.msra.mxu0 0.0
        %2244 = vmatprep.subr.mxu0 0.0
        %2245 = vmatpush1.msra.mxu0 0.0
        %2246 = vmatprep.subr.mxu0 0.0
        %2247 = vmatpush1.msra.mxu0 0.0
        %2248 = vmatprep.subr.mxu0 0.0
        %2249 = vmatpush1.msra.mxu0 0.0
        %2250 = vmatprep.subr.mxu0 0.0
        %2251 = vmatpush1.msra.mxu0 0.0
        %2252 = vmatprep.subr.mxu0 0.0
        %2253 = vmatpush1.msra.mxu0 %v2072
        %2254 = vmatprep.subr.mxu0 0.0
        %2255 = vmatpush1.msra.mxu0 %v2071
        %2256 = vmatprep.subr.mxu0 0.0
        %2257 = vmatpush2.msra.mxu0 0.0
        %2258 = vmatprep.subr.mxu0 0.0
        %2259 = vmatpush2.msra.mxu0 0.0
        %2260 = vmatprep.subr.mxu0 0.0
        %2261 = vmatpush2.msra.mxu0 0.0
        %2262 = vmatprep.subr.mxu0 0.0
        %2263 = vmatpush2.msra.mxu0 0.0
        %2264 = vmatprep.subr.mxu0 0.0
        %2265 = vmatpush2.msra.mxu0 0.0
        %2266 = vmatprep.subr.mxu0 0.0
        %2267 = vmatpush2.msra.mxu0 0.0
        %2268 = vmatprep.subr.mxu0 0.0
        %2269 = vmatpush2.msra.mxu0 0.0
        %2270 = vmatprep.subr.mxu0 0.0
        %2271 = vmatpush2.msra.mxu0 0.0
        %2272 = vmatprep.subr.mxu0 0.0
        %2273 = vmatpush2.msra.mxu0 0.0
        %2274 = vmatprep.subr.mxu0 0.0
        %2275 = vmatpush2.msra.mxu0 0.0
        %2276 = vmatprep.subr.mxu0 0.0
        %2277 = vmatpush2.msra.mxu0 0.0
        %2278 = vmatprep.subr.mxu0 0.0
        %2279 = vmatpush2.msra.mxu0 0.0
        %2280 = vmatprep.subr.mxu0 0.0
        %2281 = vmatpush2.msra.mxu0 0.0
        %2282 = vmatprep.subr.mxu0 0.0
        %2283 = vmatpush2.msra.mxu0 0.0
        %2284 = vmatprep.subr.mxu0 0.0
        %2285 = vmatpush2.msra.mxu0 0.0
        %2286 = vmatprep.subr.mxu0 0.0
        %2287 = vmatpush2.msra.mxu0 0.0
        %2288 = vmatprep.mubr.f32.mxu0 0.0
        %2289 = vmatmul.mubr.f32.gmra.mxu0 %v2222
        %v2290 = vpop.f32.mrf.mxu0
        %v2291 = vadd.f32 0.0, %v2290
        %v2292 = vpop.f32.mrf.mxu0
        %2293 = vdwg.mxu0
        %v2295 = vsel %vm2022, %v2066, 0
        %2297 = vmatprep.subr.mxu0 0.0
        %2298 = vmatpush1.msra.mxu0 0.0
        %2299 = vmatprep.subr.mxu0 0.0
        %2300 = vmatpush1.msra.mxu0 0.0
        %2301 = vmatprep.subr.mxu0 0.0
        %2302 = vmatpush1.msra.mxu0 0.0
        %2303 = vmatprep.subr.mxu0 0.0
        %2304 = vmatpush1.msra.mxu0 0.0
        %2305 = vmatprep.subr.mxu0 0.0
        %2306 = vmatpush1.msra.mxu0 0.0
        %2307 = vmatprep.subr.mxu0 0.0
        %2308 = vmatpush1.msra.mxu0 0.0
        %2309 = vmatprep.subr.mxu0 0.0
        %2310 = vmatpush1.msra.mxu0 0.0
        %2311 = vmatprep.subr.mxu0 0.0
        %2312 = vmatpush1.msra.mxu0 0.0
        %2313 = vmatprep.subr.mxu0 0.0
        %2314 = vmatpush1.msra.mxu0 0.0
        %2315 = vmatprep.subr.mxu0 0.0
        %2316 = vmatpush1.msra.mxu0 0.0
        %2317 = vmatprep.subr.mxu0 0.0
        %2318 = vmatpush1.msra.mxu0 0.0
        %2319 = vmatprep.subr.mxu0 0.0
        %2320 = vmatpush1.msra.mxu0 0.0
        %2321 = vmatprep.subr.mxu0 0.0
        %2322 = vmatpush1.msra.mxu0 0.0
        %2323 = vmatprep.subr.mxu0 0.0
        %2324 = vmatpush1.msra.mxu0 0.0
        %2325 = vmatprep.subr.mxu0 0.0
        %2326 = vmatpush1.msra.mxu0 %v2074
        %2327 = vmatprep.subr.mxu0 0.0
        %2328 = vmatpush1.msra.mxu0 %v2073
        %2329 = vmatprep.subr.mxu0 0.0
        %2330 = vmatpush2.msra.mxu0 0.0
        %2331 = vmatprep.subr.mxu0 0.0
        %2332 = vmatpush2.msra.mxu0 0.0
        %2333 = vmatprep.subr.mxu0 0.0
        %2334 = vmatpush2.msra.mxu0 0.0
        %2335 = vmatprep.subr.mxu0 0.0
        %2336 = vmatpush2.msra.mxu0 0.0
        %2337 = vmatprep.subr.mxu0 0.0
        %2338 = vmatpush2.msra.mxu0 0.0
        %2339 = vmatprep.subr.mxu0 0.0
        %2340 = vmatpush2.msra.mxu0 0.0
        %2341 = vmatprep.subr.mxu0 0.0
        %2342 = vmatpush2.msra.mxu0 0.0
        %2343 = vmatprep.subr.mxu0 0.0
        %2344 = vmatpush2.msra.mxu0 0.0
        %2345 = vmatprep.subr.mxu0 0.0
        %2346 = vmatpush2.msra.mxu0 0.0
        %2347 = vmatprep.subr.mxu0 0.0
        %2348 = vmatpush2.msra.mxu0 0.0
        %2349 = vmatprep.subr.mxu0 0.0
        %2350 = vmatpush2.msra.mxu0 0.0
        %2351 = vmatprep.subr.mxu0 0.0
        %2352 = vmatpush2.msra.mxu0 0.0
        %2353 = vmatprep.subr.mxu0 0.0
        %2354 = vmatpush2.msra.mxu0 0.0
        %2355 = vmatprep.subr.mxu0 0.0
        %2356 = vmatpush2.msra.mxu0 0.0
        %2357 = vmatprep.subr.mxu0 0.0
        %2358 = vmatpush2.msra.mxu0 0.0
        %2359 = vmatprep.subr.mxu0 0.0
        %2360 = vmatpush2.msra.mxu0 0.0
        %2361 = vmatprep.mubr.f32.mxu0 0.0
        %2362 = vmatmul.mubr.f32.gmra.mxu0 %v2295
        %v2363 = vpop.f32.mrf.mxu0
        %v2364 = vadd.f32 0.0, %v2363
        %v2365 = vpop.f32.mrf.mxu0
        %2366 = vdwg.mxu0
        %v2367 = vld [vmem:[%s4] sm:$0xff]
        %v2368 = vld [vmem:[%s4 + $0x8] sm:$0xff]
        %v2369 = vld [vmem:[%s4 + $0x10] sm:$0xff]
        %v2370 = vld [vmem:[%s4 + $0x18] sm:$0xff]
        %v2372 = vsel %vm1705, %v2145, 0
        %2374 = vmatprep.subr.mxu0 0.0
        %2375 = vmatpush1.msra.mxu0 0.0
        %2376 = vmatprep.subr.mxu0 0.0
        %2377 = vmatpush1.msra.mxu0 0.0
        %2378 = vmatprep.subr.mxu0 0.0
        %2379 = vmatpush1.msra.mxu0 0.0
        %2380 = vmatprep.subr.mxu0 0.0
        %2381 = vmatpush1.msra.mxu0 0.0
        %2382 = vmatprep.subr.mxu0 0.0
        %2383 = vmatpush1.msra.mxu0 0.0
        %2384 = vmatprep.subr.mxu0 0.0
        %2385 = vmatpush1.msra.mxu0 0.0
        %2386 = vmatprep.subr.mxu0 0.0
        %2387 = vmatpush1.msra.mxu0 0.0
        %2388 = vmatprep.subr.mxu0 0.0
        %2389 = vmatpush1.msra.mxu0 0.0
        %2390 = vmatprep.subr.mxu0 0.0
        %2391 = vmatpush1.msra.mxu0 0.0
        %2392 = vmatprep.subr.mxu0 0.0
        %2393 = vmatpush1.msra.mxu0 0.0
        %2394 = vmatprep.subr.mxu0 0.0
        %2395 = vmatpush1.msra.mxu0 0.0
        %2396 = vmatprep.subr.mxu0 0.0
        %2397 = vmatpush1.msra.mxu0 0.0
        %2398 = vmatprep.subr.mxu0 0.0
        %2399 = vmatpush1.msra.mxu0 0.0
        %2400 = vmatprep.subr.mxu0 0.0
        %2401 = vmatpush1.msra.mxu0 0.0
        %2402 = vmatprep.subr.mxu0 0.0
        %2403 = vmatpush1.msra.mxu0 0.0
        %2404 = vmatprep.subr.mxu0 0.0
        %2405 = vmatpush1.msra.mxu0 %v2367
        %2406 = vmatprep.subr.mxu0 0.0
        %2407 = vmatpush2.msra.mxu0 0.0
        %2408 = vmatprep.subr.mxu0 0.0
        %2409 = vmatpush2.msra.mxu0 0.0
        %2410 = vmatprep.subr.mxu0 0.0
        %2411 = vmatpush2.msra.mxu0 0.0
        %2412 = vmatprep.subr.mxu0 0.0
        %2413 = vmatpush2.msra.mxu0 0.0
        %2414 = vmatprep.subr.mxu0 0.0
        %2415 = vmatpush2.msra.mxu0 0.0
        %2416 = vmatprep.subr.mxu0 0.0
        %2417 = vmatpush2.msra.mxu0 0.0
        %2418 = vmatprep.subr.mxu0 0.0
        %2419 = vmatpush2.msra.mxu0 0.0
        %2420 = vmatprep.subr.mxu0 0.0
        %2421 = vmatpush2.msra.mxu0 0.0
        %2422 = vmatprep.subr.mxu0 0.0
        %2423 = vmatpush2.msra.mxu0 0.0
        %2424 = vmatprep.subr.mxu0 0.0
        %2425 = vmatpush2.msra.mxu0 0.0
        %2426 = vmatprep.subr.mxu0 0.0
        %2427 = vmatpush2.msra.mxu0 0.0
        %2428 = vmatprep.subr.mxu0 0.0
        %2429 = vmatpush2.msra.mxu0 0.0
        %2430 = vmatprep.subr.mxu0 0.0
        %2431 = vmatpush2.msra.mxu0 0.0
        %2432 = vmatprep.subr.mxu0 0.0
        %2433 = vmatpush2.msra.mxu0 0.0
        %2434 = vmatprep.subr.mxu0 0.0
        %2435 = vmatpush2.msra.mxu0 0.0
        %2436 = vmatprep.subr.mxu0 0.0
        %2437 = vmatpush2.msra.mxu0 0.0
        %2438 = vmatprep.mubr.f32.mxu0 0.0
        %2439 = vmatmul.mubr.f32.gmra.mxu0 %v2372
        %v2440 = vpop.f32.mrf.mxu0
        %v2441 = vadd.f32 0.0, %v2440
        %v2442 = vpop.f32.mrf.mxu0
        %2443 = vdwg.mxu0
        %v2445 = vsel %vm1705, %v2218, 0
        %2447 = vmatprep.subr.mxu0 0.0
        %2448 = vmatpush1.msra.mxu0 0.0
        %2449 = vmatprep.subr.mxu0 0.0
        %2450 = vmatpush1.msra.mxu0 0.0
        %2451 = vmatprep.subr.mxu0 0.0
        %2452 = vmatpush1.msra.mxu0 0.0
        %2453 = vmatprep.subr.mxu0 0.0
        %2454 = vmatpush1.msra.mxu0 0.0
        %2455 = vmatprep.subr.mxu0 0.0
        %2456 = vmatpush1.msra.mxu0 0.0
        %2457 = vmatprep.subr.mxu0 0.0
        %2458 = vmatpush1.msra.mxu0 0.0
        %2459 = vmatprep.subr.mxu0 0.0
        %2460 = vmatpush1.msra.mxu0 0.0
        %2461 = vmatprep.subr.mxu0 0.0
        %2462 = vmatpush1.msra.mxu0 0.0
        %2463 = vmatprep.subr.mxu0 0.0
        %2464 = vmatpush1.msra.mxu0 0.0
        %2465 = vmatprep.subr.mxu0 0.0
        %2466 = vmatpush1.msra.mxu0 0.0
        %2467 = vmatprep.subr.mxu0 0.0
        %2468 = vmatpush1.msra.mxu0 0.0
        %2469 = vmatprep.subr.mxu0 0.0
        %2470 = vmatpush1.msra.mxu0 0.0
        %2471 = vmatprep.subr.mxu0 0.0
        %2472 = vmatpush1.msra.mxu0 0.0
        %2473 = vmatprep.subr.mxu0 0.0
        %2474 = vmatpush1.msra.mxu0 0.0
        %2475 = vmatprep.subr.mxu0 0.0
        %2476 = vmatpush1.msra.mxu0 0.0
        %2477 = vmatprep.subr.mxu0 0.0
        %2478 = vmatpush1.msra.mxu0 %v2368
        %2479 = vmatprep.subr.mxu0 0.0
        %2480 = vmatpush2.msra.mxu0 0.0
        %2481 = vmatprep.subr.mxu0 0.0
        %2482 = vmatpush2.msra.mxu0 0.0
        %2483 = vmatprep.subr.mxu0 0.0
        %2484 = vmatpush2.msra.mxu0 0.0
        %2485 = vmatprep.subr.mxu0 0.0
        %2486 = vmatpush2.msra.mxu0 0.0
        %2487 = vmatprep.subr.mxu0 0.0
        %2488 = vmatpush2.msra.mxu0 0.0
        %2489 = vmatprep.subr.mxu0 0.0
        %2490 = vmatpush2.msra.mxu0 0.0
        %2491 = vmatprep.subr.mxu0 0.0
        %2492 = vmatpush2.msra.mxu0 0.0
        %2493 = vmatprep.subr.mxu0 0.0
        %2494 = vmatpush2.msra.mxu0 0.0
        %2495 = vmatprep.subr.mxu0 0.0
        %2496 = vmatpush2.msra.mxu0 0.0
        %2497 = vmatprep.subr.mxu0 0.0
        %2498 = vmatpush2.msra.mxu0 0.0
        %2499 = vmatprep.subr.mxu0 0.0
        %2500 = vmatpush2.msra.mxu0 0.0
        %2501 = vmatprep.subr.mxu0 0.0
        %2502 = vmatpush2.msra.mxu0 0.0
        %2503 = vmatprep.subr.mxu0 0.0
        %2504 = vmatpush2.msra.mxu0 0.0
        %2505 = vmatprep.subr.mxu0 0.0
        %2506 = vmatpush2.msra.mxu0 0.0
        %2507 = vmatprep.subr.mxu0 0.0
        %2508 = vmatpush2.msra.mxu0 0.0
        %2509 = vmatprep.subr.mxu0 0.0
        %2510 = vmatpush2.msra.mxu0 0.0
        %2511 = vmatprep.mubr.f32.mxu0 0.0
        %2512 = vmatmul.mubr.f32.gmra.mxu0 %v2445
        %v2513 = vpop.f32.mrf.mxu0
        %v2514 = vadd.f32 0.0, %v2513
        %v2515 = vpop.f32.mrf.mxu0
        %2516 = vdwg.mxu0
        %v2518 = vsel %vm1705, %v2291, 0
        %2520 = vmatprep.subr.mxu0 0.0
        %2521 = vmatpush1.msra.mxu0 0.0
        %2522 = vmatprep.subr.mxu0 0.0
        %2523 = vmatpush1.msra.mxu0 0.0
        %2524 = vmatprep.subr.mxu0 0.0
        %2525 = vmatpush1.msra.mxu0 0.0
        %2526 = vmatprep.subr.mxu0 0.0
        %2527 = vmatpush1.msra.mxu0 0.0
        %2528 = vmatprep.subr.mxu0 0.0
        %2529 = vmatpush1.msra.mxu0 0.0
        %2530 = vmatprep.subr.mxu0 0.0
        %2531 = vmatpush1.msra.mxu0 0.0
        %2532 = vmatprep.subr.mxu0 0.0
        %2533 = vmatpush1.msra.mxu0 0.0
        %2534 = vmatprep.subr.mxu0 0.0
        %2535 = vmatpush1.msra.mxu0 0.0
        %2536 = vmatprep.subr.mxu0 0.0
        %2537 = vmatpush1.msra.mxu0 0.0
        %2538 = vmatprep.subr.mxu0 0.0
        %2539 = vmatpush1.msra.mxu0 0.0
        %2540 = vmatprep.subr.mxu0 0.0
        %2541 = vmatpush1.msra.mxu0 0.0
        %2542 = vmatprep.subr.mxu0 0.0
        %2543 = vmatpush1.msra.mxu0 0.0
        %2544 = vmatprep.subr.mxu0 0.0
        %2545 = vmatpush1.msra.mxu0 0.0
        %2546 = vmatprep.subr.mxu0 0.0
        %2547 = vmatpush1.msra.mxu0 0.0
        %2548 = vmatprep.subr.mxu0 0.0
        %2549 = vmatpush1.msra.mxu0 0.0
        %2550 = vmatprep.subr.mxu0 0.0
        %2551 = vmatpush1.msra.mxu0 %v2369
        %2552 = vmatprep.subr.mxu0 0.0
        %2553 = vmatpush2.msra.mxu0 0.0
        %2554 = vmatprep.subr.mxu0 0.0
        %2555 = vmatpush2.msra.mxu0 0.0
        %2556 = vmatprep.subr.mxu0 0.0
        %2557 = vmatpush2.msra.mxu0 0.0
        %2558 = vmatprep.subr.mxu0 0.0
        %2559 = vmatpush2.msra.mxu0 0.0
        %2560 = vmatprep.subr.mxu0 0.0
        %2561 = vmatpush2.msra.mxu0 0.0
        %2562 = vmatprep.subr.mxu0 0.0
        %2563 = vmatpush2.msra.mxu0 0.0
        %2564 = vmatprep.subr.mxu0 0.0
        %2565 = vmatpush2.msra.mxu0 0.0
        %2566 = vmatprep.subr.mxu0 0.0
        %2567 = vmatpush2.msra.mxu0 0.0
        %2568 = vmatprep.subr.mxu0 0.0
        %2569 = vmatpush2.msra.mxu0 0.0
        %2570 = vmatprep.subr.mxu0 0.0
        %2571 = vmatpush2.msra.mxu0 0.0
        %2572 = vmatprep.subr.mxu0 0.0
        %2573 = vmatpush2.msra.mxu0 0.0
        %2574 = vmatprep.subr.mxu0 0.0
        %2575 = vmatpush2.msra.mxu0 0.0
        %2576 = vmatprep.subr.mxu0 0.0
        %2577 = vmatpush2.msra.mxu0 0.0
        %2578 = vmatprep.subr.mxu0 0.0
        %2579 = vmatpush2.msra.mxu0 0.0
        %2580 = vmatprep.subr.mxu0 0.0
        %2581 = vmatpush2.msra.mxu0 0.0
        %2582 = vmatprep.subr.mxu0 0.0
        %2583 = vmatpush2.msra.mxu0 0.0
        %2584 = vmatprep.mubr.f32.mxu0 0.0
        %2585 = vmatmul.mubr.f32.gmra.mxu0 %v2518
        %v2586 = vpop.f32.mrf.mxu0
        %v2587 = vadd.f32 0.0, %v2586
        %v2588 = vpop.f32.mrf.mxu0
        %2589 = vdwg.mxu0
        %v2591 = vsel %vm1705, %v2364, 0
        %2593 = vmatprep.subr.mxu0 0.0
        %2594 = vmatpush1.msra.mxu0 0.0
        %2595 = vmatprep.subr.mxu0 0.0
        %2596 = vmatpush1.msra.mxu0 0.0
        %2597 = vmatprep.subr.mxu0 0.0
        %2598 = vmatpush1.msra.mxu0 0.0
        %2599 = vmatprep.subr.mxu0 0.0
        %2600 = vmatpush1.msra.mxu0 0.0
        %2601 = vmatprep.subr.mxu0 0.0
        %2602 = vmatpush1.msra.mxu0 0.0
        %2603 = vmatprep.subr.mxu0 0.0
        %2604 = vmatpush1.msra.mxu0 0.0
        %2605 = vmatprep.subr.mxu0 0.0
        %2606 = vmatpush1.msra.mxu0 0.0
        %2607 = vmatprep.subr.mxu0 0.0
        %2608 = vmatpush1.msra.mxu0 0.0
        %2609 = vmatprep.subr.mxu0 0.0
        %2610 = vmatpush1.msra.mxu0 0.0
        %2611 = vmatprep.subr.mxu0 0.0
        %2612 = vmatpush1.msra.mxu0 0.0
        %2613 = vmatprep.subr.mxu0 0.0
        %2614 = vmatpush1.msra.mxu0 0.0
        %2615 = vmatprep.subr.mxu0 0.0
        %2616 = vmatpush1.msra.mxu0 0.0
        %2617 = vmatprep.subr.mxu0 0.0
        %2618 = vmatpush1.msra.mxu0 0.0
        %2619 = vmatprep.subr.mxu0 0.0
        %2620 = vmatpush1.msra.mxu0 0.0
        %2621 = vmatprep.subr.mxu0 0.0
        %2622 = vmatpush1.msra.mxu0 0.0
        %2623 = vmatprep.subr.mxu0 0.0
        %2624 = vmatpush1.msra.mxu0 %v2370
        %2625 = vmatprep.subr.mxu0 0.0
        %2626 = vmatpush2.msra.mxu0 0.0
        %2627 = vmatprep.subr.mxu0 0.0
        %2628 = vmatpush2.msra.mxu0 0.0
        %2629 = vmatprep.subr.mxu0 0.0
        %2630 = vmatpush2.msra.mxu0 0.0
        %2631 = vmatprep.subr.mxu0 0.0
        %2632 = vmatpush2.msra.mxu0 0.0
        %2633 = vmatprep.subr.mxu0 0.0
        %2634 = vmatpush2.msra.mxu0 0.0
        %2635 = vmatprep.subr.mxu0 0.0
        %2636 = vmatpush2.msra.mxu0 0.0
        %2637 = vmatprep.subr.mxu0 0.0
        %2638 = vmatpush2.msra.mxu0 0.0
        %2639 = vmatprep.subr.mxu0 0.0
        %2640 = vmatpush2.msra.mxu0 0.0
        %2641 = vmatprep.subr.mxu0 0.0
        %2642 = vmatpush2.msra.mxu0 0.0
        %2643 = vmatprep.subr.mxu0 0.0
        %2644 = vmatpush2.msra.mxu0 0.0
        %2645 = vmatprep.subr.mxu0 0.0
        %2646 = vmatpush2.msra.mxu0 0.0
        %2647 = vmatprep.subr.mxu0 0.0
        %2648 = vmatpush2.msra.mxu0 0.0
        %2649 = vmatprep.subr.mxu0 0.0
        %2650 = vmatpush2.msra.mxu0 0.0
        %2651 = vmatprep.subr.mxu0 0.0
        %2652 = vmatpush2.msra.mxu0 0.0
        %2653 = vmatprep.subr.mxu0 0.0
        %2654 = vmatpush2.msra.mxu0 0.0
        %2655 = vmatprep.subr.mxu0 0.0
        %2656 = vmatpush2.msra.mxu0 0.0
        %2657 = vmatprep.mubr.f32.mxu0 0.0
        %2658 = vmatmul.mubr.f32.gmra.mxu0 %v2591
        %v2659 = vpop.f32.mrf.mxu0
        %v2660 = vadd.f32 0.0, %v2659
        %v2661 = vpop.f32.mrf.mxu0
        %2662 = vdwg.mxu0
        %v2663 = vsel %vm1432, %v2441, 0.0
        %v2664 = vsel %vm1432, %v2514, 0.0
        %v2665 = vadd.f32 %v2663, %v2664
        %v2666 = vsel %vm1432, %v2587, 0.0
        %v2667 = vadd.f32 %v2665, %v2666
        %v2668 = vsel %vm1432, %v2660, 0.0
        %v2669 = vadd.f32 %v2667, %v2668
        %v2670 = vld [vmem:[%s6] sm:$0x1]
        %v2672 = vlaneseq
        %v2673 = vshrl.u32 %v2672, 7
        %v2674 = vsub.s32 0, %v2673
        %v2675 = vrot.slane %v2670, %v2674
        %v2677 = vadd.f32 %v2669, %v2675
        %v2678 = vadd.f32 %v1287, %v2677
        %v2679 = vsel %vm1432, %v2678, 0.0
        %2680 = vadd.xlane.f32.xlu0 %v2679
        %v2681 = vpop.xlane.xlu0 %2680
        %v2682 = vrcp.pop 32.0
        %v2683 = vmul.f32 %v2681, %v2682
        %v2684 = vsub.f32 %v2678, %v2683
        %v2685 = vmul.f32 %v2684, %v2684
        %v2686 = vsel %vm1432, %v2685, 0.0
        %2687 = vadd.xlane.f32.xlu0 %v2686
        %v2688 = vpop.xlane.xlu0 %2687
        %v2689 = vmul.f32 %v2688, %v2682
        %v2690 = vadd.f32 %v2689, 1e-05
        %v2691 = vrsqrt.pop %v2690
        %v2692 = vmul.f32 %v2684, %v2691
        %2693 = vrot.lane.b32.xlu0 %v2675, 96
        %v2694 = vpop.permute.xlu0 %2693
        %v2696 = vmul.f32 %v2692, %v2694
        %2697 = vrot.lane.b32.xlu0 %v2675, 64
        %v2698 = vpop.permute.xlu0 %2697
        %v2700 = vadd.f32 %v2696, %v2698
        %v2701 = vld [vmem:[%s7] sm:$0xff]
        %v2702 = vld [vmem:[%s7 + $0x8] sm:$0xff]
        %v2703 = vld [vmem:[%s7 + $0x10] sm:$0xff]
        %v2704 = vld [vmem:[%s7 + $0x18] sm:$0xff]
        %v2705 = vld [vmem:[%s6 + $0x1] sm:$0x1]
        %v2707 = vlaneseq
        %v2708 = vshrl.u32 %v2707, 7
        %v2709 = vsub.s32 0, %v2708
        %v2710 = vrot.slane %v2705, %v2709
        %2711 = vrot.lane.b32.xlu0 %v2710, 64
        %v2712 = vpop.permute.xlu0 %2711
        %v2715 = vsel %vm1432, %v2700, 0
        %2717 = vmatprep.subr.mxu0 0.0
        %2718 = vmatpush1.msra.mxu0 0.0
        %2719 = vmatprep.subr.mxu0 0.0
        %2720 = vmatpush1.msra.mxu0 0.0
        %2721 = vmatprep.subr.mxu0 0.0
        %2722 = vmatpush1.msra.mxu0 0.0
        %2723 = vmatprep.subr.mxu0 0.0
        %2724 = vmatpush1.msra.mxu0 0.0
        %2725 = vmatprep.subr.mxu0 0.0
        %2726 = vmatpush1.msra.mxu0 0.0
        %2727 = vmatprep.subr.mxu0 0.0
        %2728 = vmatpush1.msra.mxu0 0.0
        %2729 = vmatprep.subr.mxu0 0.0
        %2730 = vmatpush1.msra.mxu0 0.0
        %2731 = vmatprep.subr.mxu0 0.0
        %2732 = vmatpush1.msra.mxu0 0.0
        %2733 = vmatprep.subr.mxu0 0.0
        %2734 = vmatpush1.msra.mxu0 0.0
        %2735 = vmatprep.subr.mxu0 0.0
        %2736 = vmatpush1.msra.mxu0 0.0
        %2737 = vmatprep.subr.mxu0 0.0
        %2738 = vmatpush1.msra.mxu0 0.0
        %2739 = vmatprep.subr.mxu0 0.0
        %2740 = vmatpush1.msra.mxu0 0.0
        %2741 = vmatprep.subr.mxu0 0.0
        %2742 = vmatpush1.msra.mxu0 %v2704
        %2743 = vmatprep.subr.mxu0 0.0
        %2744 = vmatpush1.msra.mxu0 %v2703
        %2745 = vmatprep.subr.mxu0 0.0
        %2746 = vmatpush1.msra.mxu0 %v2702
        %2747 = vmatprep.subr.mxu0 0.0
        %2748 = vmatpush1.msra.mxu0 %v2701
        %2749 = vmatprep.subr.mxu0 0.0
        %2750 = vmatpush2.msra.mxu0 0.0
        %2751 = vmatprep.subr.mxu0 0.0
        %2752 = vmatpush2.msra.mxu0 0.0
        %2753 = vmatprep.subr.mxu0 0.0
        %2754 = vmatpush2.msra.mxu0 0.0
        %2755 = vmatprep.subr.mxu0 0.0
        %2756 = vmatpush2.msra.mxu0 0.0
        %2757 = vmatprep.subr.mxu0 0.0
        %2758 = vmatpush2.msra.mxu0 0.0
        %2759 = vmatprep.subr.mxu0 0.0
        %2760 = vmatpush2.msra.mxu0 0.0
        %2761 = vmatprep.subr.mxu0 0.0
        %2762 = vmatpush2.msra.mxu0 0.0
        %2763 = vmatprep.subr.mxu0 0.0
        %2764 = vmatpush2.msra.mxu0 0.0
        %2765 = vmatprep.subr.mxu0 0.0
        %2766 = vmatpush2.msra.mxu0 0.0
        %2767 = vmatprep.subr.mxu0 0.0
        %2768 = vmatpush2.msra.mxu0 0.0
        %2769 = vmatprep.subr.mxu0 0.0
        %2770 = vmatpush2.msra.mxu0 0.0
        %2771 = vmatprep.subr.mxu0 0.0
        %2772 = vmatpush2.msra.mxu0 0.0
        %2773 = vmatprep.subr.mxu0 0.0
        %2774 = vmatpush2.msra.mxu0 0.0
        %2775 = vmatprep.subr.mxu0 0.0
        %2776 = vmatpush2.msra.mxu0 0.0
        %2777 = vmatprep.subr.mxu0 0.0
        %2778 = vmatpush2.msra.mxu0 0.0
        %2779 = vmatprep.subr.mxu0 0.0
        %2780 = vmatpush2.msra.mxu0 0.0
        %2781 = vmatprep.mubr.f32.mxu0 0.0
        %2782 = vmatmul.mubr.f32.gmra.mxu0 %v2715
        %v2783 = vpop.f32.mrf.mxu0
        %v2784 = vadd.f32 %v2712, %v2783
        %v2785 = vpop.f32.mrf.mxu0
        %2786 = vdwg.mxu0
        %v2787 = vmax.f32 %v2784, 0.0
        %v2788 = vld [vmem:[%s8] sm:$0xff]
        %v2789 = vld [vmem:[%s8 + $0x8] sm:$0xff]
        %v2790 = vld [vmem:[%s8 + $0x10] sm:$0xff]
        %v2791 = vld [vmem:[%s8 + $0x18] sm:$0xff]
        %v2792 = vld [vmem:[%s8 + $0x20] sm:$0xff]
        %v2793 = vld [vmem:[%s8 + $0x28] sm:$0xff]
        %v2794 = vld [vmem:[%s8 + $0x30] sm:$0xff]
        %v2795 = vld [vmem:[%s8 + $0x38] sm:$0xff]
        %2796 = vrot.lane.b32.xlu0 %v2710, 96
        %v2797 = vpop.permute.xlu0 %2796
        %vm2799 = vcmask 523264
        %v2801 = vsel %vm2799, %v2787, 0
        %2803 = vmatprep.subr.mxu0 0.0
        %2804 = vmatpush1.msra.mxu0 0.0
        %2805 = vmatprep.subr.mxu0 0.0
        %2806 = vmatpush1.msra.mxu0 0.0
        %2807 = vmatprep.subr.mxu0 0.0
        %2808 = vmatpush1.msra.mxu0 0.0
        %2809 = vmatprep.subr.mxu0 0.0
        %2810 = vmatpush1.msra.mxu0 0.0
        %2811 = vmatprep.subr.mxu0 0.0
        %2812 = vmatpush1.msra.mxu0 0.0
        %2813 = vmatprep.subr.mxu0 0.0
        %2814 = vmatpush1.msra.mxu0 0.0
        %2815 = vmatprep.subr.mxu0 0.0
        %2816 = vmatpush1.msra.mxu0 0.0
        %2817 = vmatprep.subr.mxu0 0.0
        %2818 = vmatpush1.msra.mxu0 0.0
        %2819 = vmatprep.subr.mxu0 0.0
        %2820 = vmatpush1.msra.mxu0 %v2795
        %2821 = vmatprep.subr.mxu0 0.0
        %2822 = vmatpush1.msra.mxu0 %v2794
        %2823 = vmatprep.subr.mxu0 0.0
        %2824 = vmatpush1.msra.mxu0 %v2793
        %2825 = vmatprep.subr.mxu0 0.0
        %2826 = vmatpush1.msra.mxu0 %v2792
        %2827 = vmatprep.subr.mxu0 0.0
        %2828 = vmatpush1.msra.mxu0 %v2791
        %2829 = vmatprep.subr.mxu0 0.0
        %2830 = vmatpush1.msra.mxu0 %v2790
        %2831 = vmatprep.subr.mxu0 0.0
        %2832 = vmatpush1.msra.mxu0 %v2789
        %2833 = vmatprep.subr.mxu0 0.0
        %2834 = vmatpush1.msra.mxu0 %v2788
        %2835 = vmatprep.subr.mxu0 0.0
        %2836 = vmatpush2.msra.mxu0 0.0
        %2837 = vmatprep.subr.mxu0 0.0
        %2838 = vmatpush2.msra.mxu0 0.0
        %2839 = vmatprep.subr.mxu0 0.0
        %2840 = vmatpush2.msra.mxu0 0.0
        %2841 = vmatprep.subr.mxu0 0.0
        %2842 = vmatpush2.msra.mxu0 0.0
        %2843 = vmatprep.subr.mxu0 0.0
        %2844 = vmatpush2.msra.mxu0 0.0
        %2845 = vmatprep.subr.mxu0 0.0
        %2846 = vmatpush2.msra.mxu0 0.0
        %2847 = vmatprep.subr.mxu0 0.0
        %2848 = vmatpush2.msra.mxu0 0.0
        %2849 = vmatprep.subr.mxu0 0.0
        %2850 = vmatpush2.msra.mxu0 0.0
        %2851 = vmatprep.subr.mxu0 0.0
        %2852 = vmatpush2.msra.mxu0 0.0
        %2853 = vmatprep.subr.mxu0 0.0
        %2854 = vmatpush2.msra.mxu0 0.0
        %2855 = vmatprep.subr.mxu0 0.0
        %2856 = vmatpush2.msra.mxu0 0.0
        %2857 = vmatprep.subr.mxu0 0.0
        %2858 = vmatpush2.msra.mxu0 0.0
        %2859 = vmatprep.subr.mxu0 0.0
        %2860 = vmatpush2.msra.mxu0 0.0
        %2861 = vmatprep.subr.mxu0 0.0
        %2862 = vmatpush2.msra.mxu0 0.0
        %2863 = vmatprep.subr.mxu0 0.0
        %2864 = vmatpush2.msra.mxu0 0.0
        %2865 = vmatprep.subr.mxu0 0.0
        %2866 = vmatpush2.msra.mxu0 0.0
        %2867 = vmatprep.mubr.f32.mxu0 0.0
        %2868 = vmatmul.mubr.f32.gmra.mxu0 %v2801
        %v2869 = vpop.f32.mrf.mxu0
        %v2870 = vadd.f32 %v2797, %v2869
        %v2871 = vpop.f32.mrf.mxu0
        %2872 = vdwg.mxu0
        %v2873 = vadd.f32 %v2700, %v2870
        %v2874 = vsel %vm1432, %v2873, 0.0
        %2875 = vadd.xlane.f32.xlu0 %v2874
        %v2876 = vpop.xlane.xlu0 %2875
        %v2877 = vmul.f32 %v2876, %v2682
        %v2878 = vsub.f32 %v2873, %v2877
        %v2879 = vmul.f32 %v2878, %v2878
        %v2880 = vsel %vm1432, %v2879, 0.0
        %2881 = vadd.xlane.f32.xlu0 %v2880
        %v2882 = vpop.xlane.xlu0 %2881
        %v2883 = vmul.f32 %v2882, %v2682
        %v2884 = vadd.f32 %v2883, 1e-05
        %v2885 = vrsqrt.pop %v2884
        %v2886 = vmul.f32 %v2878, %v2885
        %2887 = vrot.lane.b32.xlu0 %v2675, 32
        %v2888 = vpop.permute.xlu0 %2887
        %v2890 = vmul.f32 %v2886, %v2888
        %v2892 = vadd.f32 %v2890, %v2710
        %2893 = vst.msk [vmem:[%s429] sm:$0xff] %vm1432, %v2892
        %s2894 = sand.u32 %s251, 1
        %s2895 = scalar_lea.sflag [#allocation6], %s2894
        %s2896 = sand.u32 %s251, 1
        %s2897 = smul.addr %s2896, 8
        %s2898 = scalar_lea.vmem [#allocation5], %s2897
        // Predicated region
        $region99: #{tpu_custom_call.1} parent=89 // pred_check
          %p2899 = pneg %p261
        $region100: #{tpu_custom_call.1} parent=89 // pred_check_branch
          %2901 = sbr.rel (%p2899) target = $region102
        $region101: #{tpu_custom_call.1} parent=89 // pred_region
          %s2903 = ssub.s32 128, 128
          %2904 = vsyncadd %s2895, %s2903
          %s2905 = smul.addr %s27, 2
          %s2906 = sadd.s32 %s28, %s2905
          %s2907 = smul.addr %s2906, 128
          %s2908 = scalar_lea.hbm %s9, %s2907
          %s2910 = sshll.u32 %s2898, 4
          %s2911 = int_to_ptr.vmem [resolvable:$true] %s2910
          %2913 = dma.vmem_to_hbm [thread:$0]  %s2911, 128, %s2908, %s2895
        $region102: #{tpu_custom_call.1} parent=89 // pred_fallthru
          _
      $region90: #{tpu_custom_call.1} parent=5 // pred_fallthru
        _
      %p2914 = scmp.le.s32.totalorder 2, %s18
      // Predicated region
      $region103: #{tpu_custom_call.1} parent=5 // pred_check
        %p2915 = pneg %p2914
      $region104: #{tpu_custom_call.1} parent=5 // pred_check_branch
        %2917 = sbr.rel (%p2915) target = $region106
      $region105: #{tpu_custom_call.1} parent=5 // pred_region
        %s2918 = ssub.s32 %s18, 2
        // Predicated region
        $region107: #{tpu_custom_call.1} parent=105 // pred_check
          %p2919 = pneg %p267
        $region108: #{tpu_custom_call.1} parent=105 // pred_check_branch
          %2921 = sbr.rel (%p2919) target = $region110
        $region109: #{tpu_custom_call.1} parent=105 // pred_region
          %s2922 = sand.u32 %s252, 1
          %s2923 = scalar_lea.sflag [#allocation6], %s2922
          %s2924 = sand.u32 %s252, 1
          %s2925 = smul.addr %s2924, 8
          %s2926 = scalar_lea.vmem [#allocation5], %s2925
          %2927 = dma.done %s2923, 128
        $region110: #{tpu_custom_call.1} parent=105 // pred_fallthru
          _
      $region106: #{tpu_custom_call.1} parent=5 // pred_fallthru
        _
    $region6: #{tpu_custom_call.1} parent=1 // loop_footer
      %s22 = sadd.s32 1, %s18
    $region7: #{tpu_custom_call.1} parent=1 // loop_footer_branch
      %17 = sbr.rel target = $region3
    $region8: #{tpu_custom_call.1} parent=1 // loop_exit
      _
    %2928 = vsyncpa [#allocation6], 1
    %s2929 = scalar_lea.sflag [#allocation6], 1
    %2930 = vsyncpa %s2929, 1

</llo_original>
